<compile_context>
chip_gen: v6e
topology: v6e:2x2x1
jax: 0.10.0
libtpu: 0.0.40
codegen_flags: <defaults>
</compile_context>

<pallas_src>
import functools

import jax
import jax.numpy as jnp
import numpy as np
from jax.experimental import pallas as pl
from jax.experimental.pallas import tpu as pltpu

EPS = 1e-5
EXPANSION = 4

_CPARAMS = pltpu.CompilerParams(
    dimension_semantics=("parallel",),
    vmem_limit_bytes=48 * 1024 * 1024,
)

# dot_general contracting dim 0 of both operands (z^T @ z) -- MXU native,
# same pattern as the Pallas flash-attention backward kernels.
_TN_DIMS = (((0,), (0,)), ((), ()))


# ----------------------------- small helpers ---------------------------------

def _rep(shape):
    # full-array block replicated across the (rank-1) grid: weights / bn params
    return pl.BlockSpec(tuple(shape), lambda i: (0,) * len(shape))


def _row_tile(m, target=1024):
    """Largest multiple of 8 that divides m and is <= target (fallback: m)."""
    best = None
    for t in range(8, min(m, target) + 1, 8):
        if m % t == 0:
            best = t
    return best if best is not None else m


def _bn_affine(s, ss, count, gamma, beta):
    # training-mode BN (biased variance) folded into y*scale + bias
    mean = s / count
    var = ss / count - mean * mean
    scale = gamma * jax.lax.rsqrt(var + EPS)
    return scale, beta - mean * scale


# ------------------------------- kernels -------------------------------------

def _conv1_stats_kernel(x_ref, w1_ref, st_ref):
    # per-image partial sum / sum-of-squares of conv1 output (pre-bn1)
    xb = x_ref[0]                                   # (H, W, Cin)
    h, w, cin = xb.shape
    y1 = jnp.dot(xb.reshape(h * w, cin), w1_ref[...],
                 preferred_element_type=jnp.float32)
    st_ref[0] = jnp.concatenate(
        [jnp.sum(y1, axis=0, keepdims=True),
         jnp.sum(y1 * y1, axis=0, keepdims=True)], axis=0)      # (2, planes)


def _fused_conv12_kernel(x_ref, w1_ref, b1_ref, w2_ref, *rest, stride, has_sc):
    # conv1(1x1, bn1 folded)+relu -> in-VMEM pad -> 3x3 conv as ONE wide-K
    # matmul; optionally the 1x1 shortcut conv.  Emits pre-bn2 / pre-bn_sc
    # tensors plus per-image partial BN statistics.
    if has_sc:
        ws_ref, y2_ref, s2_ref, ysc_ref, ssc_ref = rest
    else:
        y2_ref, s2_ref = rest

    xb = x_ref[0]                                   # (H, W, Cin)
    h, w, cin = xb.shape
    p = w1_ref.shape[1]

    h1 = jnp.dot(xb.reshape(h * w, cin), w1_ref[...],
                 preferred_element_type=jnp.float32) + b1_ref[...]
    h1 = jnp.maximum(h1, 0.0).reshape(h, w, p)

    # zero-pad spatially by 1 (never round-trips through HBM)
    zc = jnp.zeros((h, 1, p), jnp.float32)
    h1 = jnp.concatenate([zc, h1, zc], axis=1)      # (H, W+2, p)
    zr = jnp.zeros((1, w + 2, p), jnp.float32)
    h1 = jnp.concatenate([zr, h1, zr], axis=0)      # (H+2, W+2, p)

    ho = (h - 1) // stride + 1
    wo = (w - 1) // stride + 1
    taps = []
    for ky in range(3):
        for kx in range(3):
            t = h1[ky: ky + stride * (ho - 1) + 1: stride,
                   kx: kx + stride * (wo - 1) + 1: stride, :]
            taps.append(t.reshape(ho * wo, p))
    tmat = jnp.concatenate(taps, axis=1)            # (Ho*Wo, 9p)
    y2 = jnp.dot(tmat, w2_ref[...], preferred_element_type=jnp.float32)

    y2_ref[0] = y2
    s = jnp.sum(y2, axis=0, keepdims=True)
    ss = jnp.sum(y2 * y2, axis=0, keepdims=True)
    s2_ref[0] = jnp.concatenate([s, ss], axis=0)    # (2, p)

    if has_sc:
        xs = xb[::stride, ::stride, :].reshape(ho * wo, cin)
        ysc = jnp.dot(xs, ws_ref[...], preferred_element_type=jnp.float32)
        ysc_ref[0] = ysc
        s = jnp.sum(ysc, axis=0, keepdims=True)
        ss = jnp.sum(ysc * ysc, axis=0, keepdims=True)
        ssc_ref[0] = jnp.concatenate([s, ss], axis=0)


def _bn2_gram_kernel(y2_ref, a2_ref, c2_ref, s_ref, g_ref):
    # per-tile column-sum and Gram matrix of z = relu(bn2(y2)).
    # bn3 stats of y3 = z @ W3 are derived from these in JAX glue:
    #   sum(y3) = colsum(z) @ W3 ; sumsq(y3) = diag(W3^T (z^T z) W3)
    z = jnp.maximum(y2_ref[...] * a2_ref[...] + c2_ref[...], 0.0)
    s_ref[0] = jnp.sum(z, axis=0, keepdims=True)                   # (1, p)
    g_ref[0] = jax.lax.dot_general(z, z, _TN_DIMS,
                                   preferred_element_type=jnp.float32)


def _final_kernel(y2_ref, a2_ref, c2_ref, w3f_ref, c3_ref,
                  sc_ref, *rest, has_sc):
    # bn2+relu -> conv3 (bn3 scale pre-folded into w3f) + bias,
    # + (bn'd conv-shortcut | identity), add, relu
    if has_sc:
        asc_ref, csc_ref, o_ref = rest
    else:
        (o_ref,) = rest
    z = jnp.maximum(y2_ref[...] * a2_ref[...] + c2_ref[...], 0.0)
    main = jnp.dot(z, w3f_ref[...],
                   preferred_element_type=jnp.float32) + c3_ref[...]
    if has_sc:
        sc = sc_ref[...] * asc_ref[...] + csc_ref[...]
    else:
        sc = sc_ref[...]
    o_ref[...] = jnp.maximum(main + sc, 0.0).astype(o_ref.dtype)


# ----------------------------- parameters ------------------------------------

def init_params(key, in_planes, planes, stride):
    cout = EXPANSION * planes
    ks = jax.random.split(key, 4)

    def bn_params(c, shift):
        g = (1.0 + 0.05 * (jnp.arange(c, dtype=jnp.float32) + shift)).reshape(1, c)
        b = (0.02 * (jnp.arange(c, dtype=jnp.float32) - shift)).reshape(1, c)
        return g, b

    p = {}
    # conv1: torch (planes, in_planes, 1, 1) -> (in_planes, planes)
    p["w1"] = 0.2 * jax.random.normal(ks[0], (in_planes, planes), jnp.float32)
    p["g1"], p["b1"] = bn_params(planes, 0.0)
    # conv2: torch (planes, planes, 3, 3) -> (9, ci, co) with tap = ky*3+kx
    p["w2"] = 0.2 * jax.random.normal(ks[1], (9, planes, planes), jnp.float32)
    p["g2"], p["b2"] = bn_params(planes, 1.0)
    # conv3: torch (cout, planes, 1, 1) -> (planes, cout)
    p["w3"] = 0.2 * jax.random.normal(ks[2], (planes, cout), jnp.float32)
    p["g3"], p["b3"] = bn_params(cout, 2.0)
    if stride != 1 or in_planes != cout:
        p["ws"] = 0.2 * jax.random.normal(ks[3], (in_planes, cout), jnp.float32)
        p["gs"], p["bs"] = bn_params(cout, 3.0)
    return p


# ------------------------------ forward pass ----------------------------------

@functools.partial(jax.jit, static_argnames=("stride",))
def bottleneck_forward(x_nchw, params, *, stride=1):
    n, cin, h, w = x_nchw.shape
    planes = params["w1"].shape[1]
    cout = EXPANSION * planes
    has_sc = (stride != 1) or (cin != cout)

    ho = (h - 1) // stride + 1
    wo = (w - 1) // stride + 1
    m1 = n * h * w
    m2 = n * ho * wo

    x = jnp.transpose(x_nchw, (0, 2, 3, 1)).astype(jnp.float32)      # NHWC

    # ---- pass 1: global bn1 statistics of conv1 output ----------------------
    st1p = pl.pallas_call(
        _conv1_stats_kernel,
        grid=(n,),
        in_specs=[pl.BlockSpec((1, h, w, cin), lambda i: (i, 0, 0, 0)),
                  _rep(params["w1"].shape)],
        out_specs=pl.BlockSpec((1, 2, planes), lambda i: (i, 0, 0)),
        out_shape=jax.ShapeDtypeStruct((n, 2, planes), jnp.float32),
        compiler_params=_CPARAMS,
    )(x, params["w1"])
    st1 = jnp.sum(st1p, axis=0)                              # (2, planes)
    a1, c1 = _bn_affine(st1[0:1], st1[1:2], m1, params["g1"], params["b1"])
    w1f = params["w1"] * a1                  # fold bn1 scale into conv1 weights
    w2cat = params["w2"].reshape(9 * planes, planes)   # wide-K 3x3 weights

    # ---- pass 2: fused conv1+bn1+relu -> 3x3 conv (+ shortcut conv) ---------
    kernel2 = functools.partial(_fused_conv12_kernel, stride=stride,
                                has_sc=has_sc)
    in_specs = [pl.BlockSpec((1, h, w, cin), lambda i: (i, 0, 0, 0)),
                _rep(w1f.shape), _rep(c1.shape), _rep(w2cat.shape)]
    operands = [x, w1f, c1, w2cat]
    out_specs = [pl.BlockSpec((1, ho * wo, planes), lambda i: (i, 0, 0)),
                 pl.BlockSpec((1, 2, planes), lambda i: (i, 0, 0))]
    out_shape = [jax.ShapeDtypeStruct((n, ho * wo, planes), jnp.float32),
                 jax.ShapeDtypeStruct((n, 2, planes), jnp.float32)]
    if has_sc:
        in_specs.append(_rep(params["ws"].shape))
        operands.append(params["ws"])
        out_specs += [pl.BlockSpec((1, ho * wo, cout), lambda i: (i, 0, 0)),
                      pl.BlockSpec((1, 2, cout), lambda i: (i, 0, 0))]
        out_shape += [jax.ShapeDtypeStruct((n, ho * wo, cout), jnp.float32),
                      jax.ShapeDtypeStruct((n, 2, cout), jnp.float32)]
    outs = pl.pallas_call(
        kernel2, grid=(n,), in_specs=in_specs, out_specs=out_specs,
        out_shape=out_shape, compiler_params=_CPARAMS)(*operands)
    if has_sc:
        y2, st2, ysc, stsc = outs
    else:
        y2, st2 = outs

    st2 = jnp.sum(st2, axis=0)                           # (2, planes)
    a2, c2 = _bn_affine(st2[0:1], st2[1:2], m2, params["g2"], params["b2"])
    y2f = y2.reshape(m2, planes)

    # ---- pass 3: Gram statistics of z = relu(bn2(y2)) -> global bn3 affine --
    tm = _row_tile(m2)
    t3 = m2 // tm
    s3p, g3p = pl.pallas_call(
        _bn2_gram_kernel,
        grid=(t3,),
        in_specs=[pl.BlockSpec((tm, planes), lambda i: (i, 0)),
                  _rep(a2.shape), _rep(c2.shape)],
        out_specs=[pl.BlockSpec((1, 1, planes), lambda i: (i, 0, 0)),
                   pl.BlockSpec((1, planes, planes), lambda i: (i, 0, 0))],
        out_shape=[jax.ShapeDtypeStruct((t3, 1, planes), jnp.float32),
                   jax.ShapeDtypeStruct((t3, planes, planes), jnp.float32)],
        compiler_params=_CPARAMS,
    )(y2f, a2, c2)
    w3 = params["w3"]
    s3 = jnp.sum(s3p, axis=0)                                # (1, planes)
    g3 = jnp.sum(g3p, axis=0)                                # (planes, planes)
    mean3 = (s3 @ w3) / m2                                   # (1, cout)
    ey3sq = jnp.sum(w3 * (g3 @ w3), axis=0, keepdims=True) / m2
    var3 = ey3sq - mean3 * mean3
    a3 = params["g3"] * jax.lax.rsqrt(var3 + EPS)
    c3 = params["b3"] - mean3 * a3
    w3f = w3 * a3                            # fold bn3 scale into conv3 weights

    # ---- pass 4: bn2+relu -> conv3(+bn3) + shortcut + add + relu ------------
    kernel4 = functools.partial(_final_kernel, has_sc=has_sc)
    in_specs = [pl.BlockSpec((tm, planes), lambda i: (i, 0)),
                _rep(a2.shape), _rep(c2.shape), _rep(w3f.shape), _rep(c3.shape)]
    operands = [y2f, a2, c2, w3f, c3]
    if has_sc:
        stsc = jnp.sum(stsc, axis=0)
        asc, csc = _bn_affine(stsc[0:1], stsc[1:2], m2,
                              params["gs"], params["bs"])
        in_specs += [pl.BlockSpec((tm, cout), lambda i: (i, 0)),
                     _rep(asc.shape), _rep(csc.shape)]
        operands += [ysc.reshape(m2, cout), asc, csc]
    else:
        # identity shortcut (stride==1, cin==cout): rows align with y2 rows
        in_specs.append(pl.BlockSpec((tm, cout), lambda i: (i, 0)))
        operands.append(x.reshape(m1, cin))
    out = pl.pallas_call(
        kernel4, grid=(m2 // tm,), in_specs=in_specs,
        out_specs=pl.BlockSpec((tm, cout), lambda i: (i, 0)),
        out_shape=jax.ShapeDtypeStruct((m2, cout), jnp.float32),
        compiler_params=_CPARAMS)(*operands)

    out = out.reshape(n, ho, wo, cout)
    return jnp.transpose(out, (0, 3, 1, 2))              # back to NCHW

# TODO(synk): channel dims are kept at native width (<=128-lane sparse for the
# tiny test shapes); padding/stacking channels to 128-dense slabs and bf16
# matmul operands are left out to stay within the f32 reference tolerance.


# ------------------------------ pure-JAX reference ----------------------------

def bottleneck_ref(x_nchw, params, *, stride=1):
    planes = params["w1"].shape[1]
    cout = EXPANSION * planes
    cin = x_nchw.shape[1]

    def conv(x, w_oihw, s=1, p=0):
        return jax.lax.conv_general_dilated(
            x, w_oihw, (s, s), [(p, p), (p, p)],
            dimension_numbers=("NCHW", "OIHW", "NCHW"))

    def bn(x, g, b):
        g = g.reshape(1, -1, 1, 1)
        b = b.reshape(1, -1, 1, 1)
        mean = jnp.mean(x, axis=(0, 2, 3), keepdims=True)
        var = jnp.mean(jnp.square(x - mean), axis=(0, 2, 3), keepdims=True)
        return (x - mean) * jax.lax.rsqrt(var + EPS) * g + b

    w1 = jnp.transpose(params["w1"], (1, 0)).reshape(planes, cin, 1, 1)
    w2 = jnp.transpose(params["w2"].reshape(3, 3, planes, planes), (3, 2, 0, 1))
    w3 = jnp.transpose(params["w3"], (1, 0)).reshape(cout, planes, 1, 1)

    out = jax.nn.relu(bn(conv(x_nchw, w1), params["g1"], params["b1"]))
    out = jax.nn.relu(bn(conv(out, w2, s=stride, p=1), params["g2"], params["b2"]))
    out = bn(conv(out, w3), params["g3"], params["b3"])
    if stride != 1 or cin != cout:
        ws = jnp.transpose(params["ws"], (1, 0)).reshape(cout, cin, 1, 1)
        sc = bn(conv(x_nchw, ws, s=stride), params["gs"], params["bs"])
    else:
        sc = x_nchw
    return jax.nn.relu(out + sc)


# ---------------------------------- main --------------------------------------

if __name__ == "__main__":
    key = jax.random.PRNGKey(0)
    configs = [
        # (batch, in_planes, planes, H, W, stride)
        (2, 4, 4, 16, 16, 1),    # projection (conv) shortcut
        (2, 16, 4, 16, 16, 1),   # identity shortcut
    ]
    for (batch, in_planes, planes, H, W, stride) in configs:
        kx, kp, key = jax.random.split(key, 3)
        x = jax.random.normal(kx, (batch, in_planes, H, W), jnp.float32)
        params = init_params(kp, in_planes, planes, stride)

        out = jax.block_until_ready(bottleneck_forward(x, params, stride=stride))
        ref = jax.block_until_ready(bottleneck_ref(x, params, stride=stride))
        np.testing.assert_allclose(np.asarray(out), np.asarray(ref),
                                   rtol=2e-4, atol=2e-4)
        assert out.shape == (batch, EXPANSION * planes,
                             (H - 1) // stride + 1, (W - 1) // stride + 1)

    print("KERNEL_OK")
</pallas_src>

<mosaic_0001>
module attributes {stable_mosaic.version = 11 : i64} {
  func.func @_conv1_stats_kernel(%arg0: i32, %arg1: memref<1x16x16x4xf32, #tpu.memory_space<vmem>>, %arg2: memref<4x4xf32, #tpu.memory_space<vmem>>, %arg3: memref<1x2x4xf32, #tpu.memory_space<vmem>>) attributes {dimension_semantics = [#tpu.dimension_semantics<parallel>], iteration_bounds = array<i64: 2>, scalar_prefetch = 0 : i64, scratch_operands = 0 : i64, tpu.core_type = #tpu.core_type<tc>, window_params = [{transform_indices = @transform_0, window_bounds = array<i64: 1, 16, 16, 4>}, {pipeline_mode = #tpu.pipeline_mode<synchronous>, transform_indices = @transform_1, window_bounds = array<i64: 4, 4>}, {transform_indices = @transform_2, window_bounds = array<i64: 1, 2, 4>}]} {
    %c0 = arith.constant 0 : index
    %c0_0 = arith.constant 0 : index
    %c0_1 = arith.constant 0 : index
    %c0_2 = arith.constant 0 : index
    %0 = vector.load %arg1[%c0, %c0_0, %c0_1, %c0_2] : memref<1x16x16x4xf32, #tpu.memory_space<vmem>>, vector<1x16x16x4xf32>
    %1 = vector.shape_cast %0 : vector<1x16x16x4xf32> to vector<16x16x4xf32>
    %2 = vector.shape_cast %1 : vector<16x16x4xf32> to vector<256x4xf32>
    %c0_3 = arith.constant 0 : index
    %c0_4 = arith.constant 0 : index
    %3 = vector.load %arg2[%c0_3, %c0_4] : memref<4x4xf32, #tpu.memory_space<vmem>>, vector<4x4xf32>
    %cst = arith.constant dense<0.000000e+00> : vector<256x4xf32>
    %4 = tpu.matmul %2, %3, %cst {dimension_numbers = #tpu.dot_dimension_numbers<[1], [0], [0], [1], [0, 0, 1, 1], [], []>} : vector<256x4xf32>, vector<4x4xf32>, vector<256x4xf32> -> vector<256x4xf32>
    %cst_5 = arith.constant dense<0.000000e+00> : vector<4xf32>
    %5 = vector.multi_reduction <add>, %4, %cst_5 [0] : vector<256x4xf32> to vector<4xf32>
    %6 = vector.shape_cast %5 : vector<4xf32> to vector<1x4xf32>
    %7 = arith.mulf %4, %4 : vector<256x4xf32>
    %cst_6 = arith.constant dense<0.000000e+00> : vector<4xf32>
    %8 = vector.multi_reduction <add>, %7, %cst_6 [0] : vector<256x4xf32> to vector<4xf32>
    %9 = vector.shape_cast %8 : vector<4xf32> to vector<1x4xf32>
    %10 = tpu.concatenate %6, %9 in 0 : vector<1x4xf32>, vector<1x4xf32> -> vector<2x4xf32>
    %c0_7 = arith.constant 0 : index
    %c0_8 = arith.constant 0 : index
    %c0_9 = arith.constant 0 : index
    %11 = vector.load %arg3[%c0_7, %c0_8, %c0_9] : memref<1x2x4xf32, #tpu.memory_space<vmem>>, vector<1x2x4xf32>
    %12 = vector.shape_cast %11 : vector<1x2x4xf32> to vector<2x4xf32>
    %13 = vector.shape_cast %10 : vector<2x4xf32> to vector<1x2x4xf32>
    tpu.vector_store %arg3[%c0_7, %c0_8, %c0_9], %13 {strides = array<i32>} : memref<1x2x4xf32, #tpu.memory_space<vmem>>, vector<1x2x4xf32>,
    return
  }
  func.func @transform_0(%arg0: i32) -> (i32, i32, i32, i32) {
    %c0_i32 = arith.constant 0 : i32
    %c0_i32_0 = arith.constant 0 : i32
    %c0_i32_1 = arith.constant 0 : i32
    %c0_i32_2 = arith.constant 0 : i32
    return %arg0, %c0_i32, %c0_i32_0, %c0_i32_1 : i32, i32, i32, i32
  }
  func.func @transform_1(%arg0: i32) -> (i32, i32) {
    %c0_i32 = arith.constant 0 : i32
    %c0_i32_0 = arith.constant 0 : i32
    %c0_i32_1 = arith.constant 0 : i32
    return %c0_i32, %c0_i32_0 : i32, i32
  }
  func.func @transform_2(%arg0: i32) -> (i32, i32, i32) {
    %c0_i32 = arith.constant 0 : i32
    %c0_i32_0 = arith.constant 0 : i32
    %c0_i32_1 = arith.constant 0 : i32
    return %arg0, %c0_i32, %c0_i32_0 : i32, i32, i32
  }
}

module attributes {stable_mosaic.version = 11 : i64} {
  func.func @_fused_conv12_kernel(%arg0: i32, %arg1: memref<1x16x16x4xf32, #tpu.memory_space<vmem>>, %arg2: memref<4x4xf32, #tpu.memory_space<vmem>>, %arg3: memref<1x4xf32, #tpu.memory_space<vmem>>, %arg4: memref<36x4xf32, #tpu.memory_space<vmem>>, %arg5: memref<4x16xf32, #tpu.memory_space<vmem>>, %arg6: memref<1x256x4xf32, #tpu.memory_space<vmem>>, %arg7: memref<1x2x4xf32, #tpu.memory_space<vmem>>, %arg8: memref<1x256x16xf32, #tpu.memory_space<vmem>>, %arg9: memref<1x2x16xf32, #tpu.memory_space<vmem>>) attributes {dimension_semantics = [#tpu.dimension_semantics<parallel>], iteration_bounds = array<i64: 2>, scalar_prefetch = 0 : i64, scratch_operands = 0 : i64, tpu.core_type = #tpu.core_type<tc>, window_params = [{transform_indices = @transform_0, window_bounds = array<i64: 1, 16, 16, 4>}, {pipeline_mode = #tpu.pipeline_mode<synchronous>, transform_indices = @transform_1, window_bounds = array<i64: 4, 4>}, {pipeline_mode = #tpu.pipeline_mode<synchronous>, transform_indices = @transform_2, window_bounds = array<i64: 1, 4>}, {pipeline_mode = #tpu.pipeline_mode<synchronous>, transform_indices = @transform_3, window_bounds = array<i64: 36, 4>}, {pipeline_mode = #tpu.pipeline_mode<synchronous>, transform_indices = @transform_4, window_bounds = array<i64: 4, 16>}, {transform_indices = @transform_5, window_bounds = array<i64: 1, 256, 4>}, {transform_indices = @transform_6, window_bounds = array<i64: 1, 2, 4>}, {transform_indices = @transform_7, window_bounds = array<i64: 1, 256, 16>}, {transform_indices = @transform_8, window_bounds = array<i64: 1, 2, 16>}]} {
    %c0 = arith.constant 0 : index
    %c0_0 = arith.constant 0 : index
    %c0_1 = arith.constant 0 : index
    %c0_2 = arith.constant 0 : index
    %0 = vector.load %arg1[%c0, %c0_0, %c0_1, %c0_2] : memref<1x16x16x4xf32, #tpu.memory_space<vmem>>, vector<1x16x16x4xf32>
    %1 = vector.shape_cast %0 : vector<1x16x16x4xf32> to vector<16x16x4xf32>
    %2 = vector.shape_cast %1 : vector<16x16x4xf32> to vector<256x4xf32>
    %c0_3 = arith.constant 0 : index
    %c0_4 = arith.constant 0 : index
    %3 = vector.load %arg2[%c0_3, %c0_4] : memref<4x4xf32, #tpu.memory_space<vmem>>, vector<4x4xf32>
    %cst = arith.constant dense<0.000000e+00> : vector<256x4xf32>
    %4 = tpu.matmul %2, %3, %cst {dimension_numbers = #tpu.dot_dimension_numbers<[1], [0], [0], [1], [0, 0, 1, 1], [], []>} : vector<256x4xf32>, vector<4x4xf32>, vector<256x4xf32> -> vector<256x4xf32>
    %c0_5 = arith.constant 0 : index
    %c0_6 = arith.constant 0 : index
    %5 = vector.load %arg3[%c0_5, %c0_6] : memref<1x4xf32, #tpu.memory_space<vmem>>, vector<1x4xf32>
    %6 = vector.broadcast %5 : vector<1x4xf32> to vector<256x4xf32>
    %7 = arith.addf %4, %6 : vector<256x4xf32>
    %cst_7 = arith.constant 0.000000e+00 : f32
    %8 = vector.broadcast %cst_7 : f32 to vector<256x4xf32>
    %9 = arith.maximumf %7, %8 : vector<256x4xf32>
    %10 = vector.shape_cast %9 : vector<256x4xf32> to vector<16x16x4xf32>
    %cst_8 = arith.constant 0.000000e+00 : f32
    %11 = vector.broadcast %cst_8 : f32 to vector<16x1x4xf32>
    %12 = tpu.concatenate %11, %10, %11 in 1 : vector<16x1x4xf32>, vector<16x16x4xf32>, vector<16x1x4xf32> -> vector<16x18x4xf32>
    %cst_9 = arith.constant 0.000000e+00 : f32
    %13 = vector.broadcast %cst_9 : f32 to vector<1x18x4xf32>
    %14 = tpu.concatenate %13, %12, %13 in 0 : vector<1x18x4xf32>, vector<16x18x4xf32>, vector<1x18x4xf32> -> vector<18x18x4xf32>
    %15 = vector.extract_strided_slice %14 {offsets = [0, 0, 0], sizes = [16, 16, 4], strides = [1, 1, 1]} : vector<18x18x4xf32> to vector<16x16x4xf32>
    %16 = vector.shape_cast %15 : vector<16x16x4xf32> to vector<256x4xf32>
    %17 = vector.extract_strided_slice %14 {offsets = [0, 1, 0], sizes = [16, 16, 4], strides = [1, 1, 1]} : vector<18x18x4xf32> to vector<16x16x4xf32>
    %18 = vector.shape_cast %17 : vector<16x16x4xf32> to vector<256x4xf32>
    %19 = vector.extract_strided_slice %14 {offsets = [0, 2, 0], sizes = [16, 16, 4], strides = [1, 1, 1]} : vector<18x18x4xf32> to vector<16x16x4xf32>
    %20 = vector.shape_cast %19 : vector<16x16x4xf32> to vector<256x4xf32>
    %21 = vector.extract_strided_slice %14 {offsets = [1, 0, 0], sizes = [16, 16, 4], strides = [1, 1, 1]} : vector<18x18x4xf32> to vector<16x16x4xf32>
    %22 = vector.shape_cast %21 : vector<16x16x4xf32> to vector<256x4xf32>
    %23 = vector.extract_strided_slice %14 {offsets = [1, 1, 0], sizes = [16, 16, 4], strides = [1, 1, 1]} : vector<18x18x4xf32> to vector<16x16x4xf32>
    %24 = vector.shape_cast %23 : vector<16x16x4xf32> to vector<256x4xf32>
    %25 = vector.extract_strided_slice %14 {offsets = [1, 2, 0], sizes = [16, 16, 4], strides = [1, 1, 1]} : vector<18x18x4xf32> to vector<16x16x4xf32>
    %26 = vector.shape_cast %25 : vector<16x16x4xf32> to vector<256x4xf32>
    %27 = vector.extract_strided_slice %14 {offsets = [2, 0, 0], sizes = [16, 16, 4], strides = [1, 1, 1]} : vector<18x18x4xf32> to vector<16x16x4xf32>
    %28 = vector.shape_cast %27 : vector<16x16x4xf32> to vector<256x4xf32>
    %29 = vector.extract_strided_slice %14 {offsets = [2, 1, 0], sizes = [16, 16, 4], strides = [1, 1, 1]} : vector<18x18x4xf32> to vector<16x16x4xf32>
    %30 = vector.shape_cast %29 : vector<16x16x4xf32> to vector<256x4xf32>
    %31 = vector.extract_strided_slice %14 {offsets = [2, 2, 0], sizes = [16, 16, 4], strides = [1, 1, 1]} : vector<18x18x4xf32> to vector<16x16x4xf32>
    %32 = vector.shape_cast %31 : vector<16x16x4xf32> to vector<256x4xf32>
    %33 = tpu.concatenate %16, %18, %20, %22, %24, %26, %28, %30, %32 in 1 : vector<256x4xf32>, vector<256x4xf32>, vector<256x4xf32>, vector<256x4xf32>, vector<256x4xf32>, vector<256x4xf32>, vector<256x4xf32>, vector<256x4xf32>, vector<256x4xf32> -> vector<256x36xf32>
    %c0_10 = arith.constant 0 : index
    %c0_11 = arith.constant 0 : index
    %34 = vector.load %arg4[%c0_10, %c0_11] : memref<36x4xf32, #tpu.memory_space<vmem>>, vector<36x4xf32>
    %cst_12 = arith.constant dense<0.000000e+00> : vector<256x4xf32>
    %35 = tpu.matmul %33, %34, %cst_12 {dimension_numbers = #tpu.dot_dimension_numbers<[1], [0], [0], [1], [0, 0, 1, 1], [], []>} : vector<256x36xf32>, vector<36x4xf32>, vector<256x4xf32> -> vector<256x4xf32>
    %c0_13 = arith.constant 0 : index
    %c0_14 = arith.constant 0 : index
    %c0_15 = arith.constant 0 : index
    %36 = vector.load %arg6[%c0_13, %c0_14, %c0_15] : memref<1x256x4xf32, #tpu.memory_space<vmem>>, vector<1x256x4xf32>
    %37 = vector.shape_cast %36 : vector<1x256x4xf32> to vector<256x4xf32>
    %38 = vector.shape_cast %35 : vector<256x4xf32> to vector<1x256x4xf32>
    tpu.vector_store %arg6[%c0_13, %c0_14, %c0_15], %38 {strides = array<i32>} : memref<1x256x4xf32, #tpu.memory_space<vmem>>, vector<1x256x4xf32>,
    %cst_16 = arith.constant dense<0.000000e+00> : vector<4xf32>
    %39 = vector.multi_reduction <add>, %35, %cst_16 [0] : vector<256x4xf32> to vector<4xf32>
    %40 = vector.shape_cast %39 : vector<4xf32> to vector<1x4xf32>
    %41 = arith.mulf %35, %35 : vector<256x4xf32>
    %cst_17 = arith.constant dense<0.000000e+00> : vector<4xf32>
    %42 = vector.multi_reduction <add>, %41, %cst_17 [0] : vector<256x4xf32> to vector<4xf32>
    %43 = vector.shape_cast %42 : vector<4xf32> to vector<1x4xf32>
    %44 = tpu.concatenate %40, %43 in 0 : vector<1x4xf32>, vector<1x4xf32> -> vector<2x4xf32>
    %c0_18 = arith.constant 0 : index
    %c0_19 = arith.constant 0 : index
    %c0_20 = arith.constant 0 : index
    %45 = vector.load %arg7[%c0_18, %c0_19, %c0_20] : memref<1x2x4xf32, #tpu.memory_space<vmem>>, vector<1x2x4xf32>
    %46 = vector.shape_cast %45 : vector<1x2x4xf32> to vector<2x4xf32>
    %47 = vector.shape_cast %44 : vector<2x4xf32> to vector<1x2x4xf32>
    tpu.vector_store %arg7[%c0_18, %c0_19, %c0_20], %47 {strides = array<i32>} : memref<1x2x4xf32, #tpu.memory_space<vmem>>, vector<1x2x4xf32>,
    %48 = vector.shape_cast %1 : vector<16x16x4xf32> to vector<256x4xf32>
    %c0_21 = arith.constant 0 : index
    %c0_22 = arith.constant 0 : index
    %49 = vector.load %arg5[%c0_21, %c0_22] : memref<4x16xf32, #tpu.memory_space<vmem>>, vector<4x16xf32>
    %cst_23 = arith.constant dense<0.000000e+00> : vector<256x16xf32>
    %50 = tpu.matmul %48, %49, %cst_23 {dimension_numbers = #tpu.dot_dimension_numbers<[1], [0], [0], [1], [0, 0, 1, 1], [], []>} : vector<256x4xf32>, vector<4x16xf32>, vector<256x16xf32> -> vector<256x16xf32>
    %c0_24 = arith.constant 0 : index
    %c0_25 = arith.constant 0 : index
    %c0_26 = arith.constant 0 : index
    %51 = vector.load %arg8[%c0_24, %c0_25, %c0_26] : memref<1x256x16xf32, #tpu.memory_space<vmem>>, vector<1x256x16xf32>
    %52 = vector.shape_cast %51 : vector<1x256x16xf32> to vector<256x16xf32>
    %53 = vector.shape_cast %50 : vector<256x16xf32> to vector<1x256x16xf32>
    tpu.vector_store %arg8[%c0_24, %c0_25, %c0_26], %53 {strides = array<i32>} : memref<1x256x16xf32, #tpu.memory_space<vmem>>, vector<1x256x16xf32>,
    %cst_27 = arith.constant dense<0.000000e+00> : vector<16xf32>
    %54 = vector.multi_reduction <add>, %50, %cst_27 [0] : vector<256x16xf32> to vector<16xf32>
    %55 = vector.shape_cast %54 : vector<16xf32> to vector<1x16xf32>
    %56 = arith.mulf %50, %50 : vector<256x16xf32>
    %cst_28 = arith.constant dense<0.000000e+00> : vector<16xf32>
    %57 = vector.multi_reduction <add>, %56, %cst_28 [0] : vector<256x16xf32> to vector<16xf32>
    %58 = vector.shape_cast %57 : vector<16xf32> to vector<1x16xf32>
    %59 = tpu.concatenate %55, %58 in 0 : vector<1x16xf32>, vector<1x16xf32> -> vector<2x16xf32>
    %c0_29 = arith.constant 0 : index
    %c0_30 = arith.constant 0 : index
    %c0_31 = arith.constant 0 : index
    %60 = vector.load %arg9[%c0_29, %c0_30, %c0_31] : memref<1x2x16xf32, #tpu.memory_space<vmem>>, vector<1x2x16xf32>
    %61 = vector.shape_cast %60 : vector<1x2x16xf32> to vector<2x16xf32>
    %62 = vector.shape_cast %59 : vector<2x16xf32> to vector<1x2x16xf32>
    tpu.vector_store %arg9[%c0_29, %c0_30, %c0_31], %62 {strides = array<i32>} : memref<1x2x16xf32, #tpu.memory_space<vmem>>, vector<1x2x16xf32>,
    return
  }
  func.func @transform_0(%arg0: i32) -> (i32, i32, i32, i32) {
    %c0_i32 = arith.constant 0 : i32
    %c0_i32_0 = arith.constant 0 : i32
    %c0_i32_1 = arith.constant 0 : i32
    %c0_i32_2 = arith.constant 0 : i32
    return %arg0, %c0_i32, %c0_i32_0, %c0_i32_1 : i32, i32, i32, i32
  }
  func.func @transform_1(%arg0: i32) -> (i32, i32) {
    %c0_i32 = arith.constant 0 : i32
    %c0_i32_0 = arith.constant 0 : i32
    %c0_i32_1 = arith.constant 0 : i32
    return %c0_i32, %c0_i32_0 : i32, i32
  }
  func.func @transform_2(%arg0: i32) -> (i32, i32) {
    %c0_i32 = arith.constant 0 : i32
    %c0_i32_0 = arith.constant 0 : i32
    %c0_i32_1 = arith.constant 0 : i32
    return %c0_i32, %c0_i32_0 : i32, i32
  }
  func.func @transform_3(%arg0: i32) -> (i32, i32) {
    %c0_i32 = arith.constant 0 : i32
    %c0_i32_0 = arith.constant 0 : i32
    %c0_i32_1 = arith.constant 0 : i32
    return %c0_i32, %c0_i32_0 : i32, i32
  }
  func.func @transform_4(%arg0: i32) -> (i32, i32) {
    %c0_i32 = arith.constant 0 : i32
    %c0_i32_0 = arith.constant 0 : i32
    %c0_i32_1 = arith.constant 0 : i32
    return %c0_i32, %c0_i32_0 : i32, i32
  }
  func.func @transform_5(%arg0: i32) -> (i32, i32, i32) {
    %c0_i32 = arith.constant 0 : i32
    %c0_i32_0 = arith.constant 0 : i32
    %c0_i32_1 = arith.constant 0 : i32
    return %arg0, %c0_i32, %c0_i32_0 : i32, i32, i32
  }
  func.func @transform_6(%arg0: i32) -> (i32, i32, i32) {
    %c0_i32 = arith.constant 0 : i32
    %c0_i32_0 = arith.constant 0 : i32
    %c0_i32_1 = arith.constant 0 : i32
    return %arg0, %c0_i32, %c0_i32_0 : i32, i32, i32
  }
  func.func @transform_7(%arg0: i32) -> (i32, i32, i32) {
    %c0_i32 = arith.constant 0 : i32
    %c0_i32_0 = arith.constant 0 : i32
    %c0_i32_1 = arith.constant 0 : i32
    return %arg0, %c0_i32, %c0_i32_0 : i32, i32, i32
  }
  func.func @transform_8(%arg0: i32) -> (i32, i32, i32) {
    %c0_i32 = arith.constant 0 : i32
    %c0_i32_0 = arith.constant 0 : i32
    %c0_i32_1 = arith.constant 0 : i32
    return %arg0, %c0_i32, %c0_i32_0 : i32, i32, i32
  }
}

module attributes {stable_mosaic.version = 11 : i64} {
  func.func @_bn2_gram_kernel(%arg0: i32, %arg1: memref<512x4xf32, #tpu.memory_space<vmem>>, %arg2: memref<1x4xf32, #tpu.memory_space<vmem>>, %arg3: memref<1x4xf32, #tpu.memory_space<vmem>>, %arg4: memref<1x1x4xf32, #tpu.memory_space<vmem>>, %arg5: memref<1x4x4xf32, #tpu.memory_space<vmem>>) attributes {dimension_semantics = [#tpu.dimension_semantics<parallel>], iteration_bounds = array<i64: 1>, scalar_prefetch = 0 : i64, scratch_operands = 0 : i64, tpu.core_type = #tpu.core_type<tc>, window_params = [{transform_indices = @transform_0, window_bounds = array<i64: 512, 4>}, {pipeline_mode = #tpu.pipeline_mode<synchronous>, transform_indices = @transform_1, window_bounds = array<i64: 1, 4>}, {pipeline_mode = #tpu.pipeline_mode<synchronous>, transform_indices = @transform_2, window_bounds = array<i64: 1, 4>}, {transform_indices = @transform_3, window_bounds = array<i64: 1, 1, 4>}, {transform_indices = @transform_4, window_bounds = array<i64: 1, 4, 4>}]} {
    %c0 = arith.constant 0 : index
    %c0_0 = arith.constant 0 : index
    %0 = vector.load %arg1[%c0, %c0_0] : memref<512x4xf32, #tpu.memory_space<vmem>>, vector<512x4xf32>
    %c0_1 = arith.constant 0 : index
    %c0_2 = arith.constant 0 : index
    %1 = vector.load %arg2[%c0_1, %c0_2] : memref<1x4xf32, #tpu.memory_space<vmem>>, vector<1x4xf32>
    %2 = vector.broadcast %1 : vector<1x4xf32> to vector<512x4xf32>
    %3 = arith.mulf %0, %2 : vector<512x4xf32>
    %c0_3 = arith.constant 0 : index
    %c0_4 = arith.constant 0 : index
    %4 = vector.load %arg3[%c0_3, %c0_4] : memref<1x4xf32, #tpu.memory_space<vmem>>, vector<1x4xf32>
    %5 = vector.broadcast %4 : vector<1x4xf32> to vector<512x4xf32>
    %6 = arith.addf %3, %5 : vector<512x4xf32>
    %cst = arith.constant 0.000000e+00 : f32
    %7 = vector.broadcast %cst : f32 to vector<512x4xf32>
    %8 = arith.maximumf %6, %7 : vector<512x4xf32>
    %cst_5 = arith.constant dense<0.000000e+00> : vector<4xf32>
    %9 = vector.multi_reduction <add>, %8, %cst_5 [0] : vector<512x4xf32> to vector<4xf32>
    %10 = vector.shape_cast %9 : vector<4xf32> to vector<1x4xf32>
    %c0_6 = arith.constant 0 : index
    %c0_7 = arith.constant 0 : index
    %c0_8 = arith.constant 0 : index
    %11 = vector.load %arg4[%c0_6, %c0_7, %c0_8] : memref<1x1x4xf32, #tpu.memory_space<vmem>>, vector<1x1x4xf32>
    %12 = vector.shape_cast %11 : vector<1x1x4xf32> to vector<1x4xf32>
    %13 = vector.shape_cast %10 : vector<1x4xf32> to vector<1x1x4xf32>
    tpu.vector_store %arg4[%c0_6, %c0_7, %c0_8], %13 {strides = array<i32>} : memref<1x1x4xf32, #tpu.memory_space<vmem>>, vector<1x1x4xf32>,
    %cst_9 = arith.constant dense<0.000000e+00> : vector<4x4xf32>
    %14 = tpu.matmul %8, %8, %cst_9 {dimension_numbers = #tpu.dot_dimension_numbers<[0], [0], [1], [1], [0, 1, 1, 1], [], []>} : vector<512x4xf32>, vector<512x4xf32>, vector<4x4xf32> -> vector<4x4xf32>
    %c0_10 = arith.constant 0 : index
    %c0_11 = arith.constant 0 : index
    %c0_12 = arith.constant 0 : index
    %15 = vector.load %arg5[%c0_10, %c0_11, %c0_12] : memref<1x4x4xf32, #tpu.memory_space<vmem>>, vector<1x4x4xf32>
    %16 = vector.shape_cast %15 : vector<1x4x4xf32> to vector<4x4xf32>
    %17 = vector.shape_cast %14 : vector<4x4xf32> to vector<1x4x4xf32>
    tpu.vector_store %arg5[%c0_10, %c0_11, %c0_12], %17 {strides = array<i32>} : memref<1x4x4xf32, #tpu.memory_space<vmem>>, vector<1x4x4xf32>,
    return
  }
  func.func @transform_0(%arg0: i32) -> (i32, i32) {
    %c0_i32 = arith.constant 0 : i32
    %c0_i32_0 = arith.constant 0 : i32
    return %arg0, %c0_i32 : i32, i32
  }
  func.func @transform_1(%arg0: i32) -> (i32, i32) {
    %c0_i32 = arith.constant 0 : i32
    %c0_i32_0 = arith.constant 0 : i32
    %c0_i32_1 = arith.constant 0 : i32
    return %c0_i32, %c0_i32_0 : i32, i32
  }
  func.func @transform_2(%arg0: i32) -> (i32, i32) {
    %c0_i32 = arith.constant 0 : i32
    %c0_i32_0 = arith.constant 0 : i32
    %c0_i32_1 = arith.constant 0 : i32
    return %c0_i32, %c0_i32_0 : i32, i32
  }
  func.func @transform_3(%arg0: i32) -> (i32, i32, i32) {
    %c0_i32 = arith.constant 0 : i32
    %c0_i32_0 = arith.constant 0 : i32
    %c0_i32_1 = arith.constant 0 : i32
    return %arg0, %c0_i32, %c0_i32_0 : i32, i32, i32
  }
  func.func @transform_4(%arg0: i32) -> (i32, i32, i32) {
    %c0_i32 = arith.constant 0 : i32
    %c0_i32_0 = arith.constant 0 : i32
    %c0_i32_1 = arith.constant 0 : i32
    return %arg0, %c0_i32, %c0_i32_0 : i32, i32, i32
  }
}

module attributes {stable_mosaic.version = 11 : i64} {
  func.func @_final_kernel(%arg0: i32, %arg1: memref<512x4xf32, #tpu.memory_space<vmem>>, %arg2: memref<1x4xf32, #tpu.memory_space<vmem>>, %arg3: memref<1x4xf32, #tpu.memory_space<vmem>>, %arg4: memref<4x16xf32, #tpu.memory_space<vmem>>, %arg5: memref<1x16xf32, #tpu.memory_space<vmem>>, %arg6: memref<512x16xf32, #tpu.memory_space<vmem>>, %arg7: memref<1x16xf32, #tpu.memory_space<vmem>>, %arg8: memref<1x16xf32, #tpu.memory_space<vmem>>, %arg9: memref<512x16xf32, #tpu.memory_space<vmem>>) attributes {dimension_semantics = [#tpu.dimension_semantics<parallel>], iteration_bounds = array<i64: 1>, scalar_prefetch = 0 : i64, scratch_operands = 0 : i64, tpu.core_type = #tpu.core_type<tc>, window_params = [{transform_indices = @transform_0, window_bounds = array<i64: 512, 4>}, {pipeline_mode = #tpu.pipeline_mode<synchronous>, transform_indices = @transform_1, window_bounds = array<i64: 1, 4>}, {pipeline_mode = #tpu.pipeline_mode<synchronous>, transform_indices = @transform_2, window_bounds = array<i64: 1, 4>}, {pipeline_mode = #tpu.pipeline_mode<synchronous>, transform_indices = @transform_3, window_bounds = array<i64: 4, 16>}, {pipeline_mode = #tpu.pipeline_mode<synchronous>, transform_indices = @transform_4, window_bounds = array<i64: 1, 16>}, {transform_indices = @transform_5, window_bounds = array<i64: 512, 16>}, {pipeline_mode = #tpu.pipeline_mode<synchronous>, transform_indices = @transform_6, window_bounds = array<i64: 1, 16>}, {pipeline_mode = #tpu.pipeline_mode<synchronous>, transform_indices = @transform_7, window_bounds = array<i64: 1, 16>}, {transform_indices = @transform_8, window_bounds = array<i64: 512, 16>}]} {
    %c0 = arith.constant 0 : index
    %c0_0 = arith.constant 0 : index
    %0 = vector.load %arg1[%c0, %c0_0] : memref<512x4xf32, #tpu.memory_space<vmem>>, vector<512x4xf32>
    %c0_1 = arith.constant 0 : index
    %c0_2 = arith.constant 0 : index
    %1 = vector.load %arg2[%c0_1, %c0_2] : memref<1x4xf32, #tpu.memory_space<vmem>>, vector<1x4xf32>
    %2 = vector.broadcast %1 : vector<1x4xf32> to vector<512x4xf32>
    %3 = arith.mulf %0, %2 : vector<512x4xf32>
    %c0_3 = arith.constant 0 : index
    %c0_4 = arith.constant 0 : index
    %4 = vector.load %arg3[%c0_3, %c0_4] : memref<1x4xf32, #tpu.memory_space<vmem>>, vector<1x4xf32>
    %5 = vector.broadcast %4 : vector<1x4xf32> to vector<512x4xf32>
    %6 = arith.addf %3, %5 : vector<512x4xf32>
    %cst = arith.constant 0.000000e+00 : f32
    %7 = vector.broadcast %cst : f32 to vector<512x4xf32>
    %8 = arith.maximumf %6, %7 : vector<512x4xf32>
    %c0_5 = arith.constant 0 : index
    %c0_6 = arith.constant 0 : index
    %9 = vector.load %arg4[%c0_5, %c0_6] : memref<4x16xf32, #tpu.memory_space<vmem>>, vector<4x16xf32>
    %cst_7 = arith.constant dense<0.000000e+00> : vector<512x16xf32>
    %10 = tpu.matmul %8, %9, %cst_7 {dimension_numbers = #tpu.dot_dimension_numbers<[1], [0], [0], [1], [0, 0, 1, 1], [], []>} : vector<512x4xf32>, vector<4x16xf32>, vector<512x16xf32> -> vector<512x16xf32>
    %c0_8 = arith.constant 0 : index
    %c0_9 = arith.constant 0 : index
    %11 = vector.load %arg5[%c0_8, %c0_9] : memref<1x16xf32, #tpu.memory_space<vmem>>, vector<1x16xf32>
    %12 = vector.broadcast %11 : vector<1x16xf32> to vector<512x16xf32>
    %13 = arith.addf %10, %12 : vector<512x16xf32>
    %c0_10 = arith.constant 0 : index
    %c0_11 = arith.constant 0 : index
    %14 = vector.load %arg6[%c0_10, %c0_11] : memref<512x16xf32, #tpu.memory_space<vmem>>, vector<512x16xf32>
    %c0_12 = arith.constant 0 : index
    %c0_13 = arith.constant 0 : index
    %15 = vector.load %arg7[%c0_12, %c0_13] : memref<1x16xf32, #tpu.memory_space<vmem>>, vector<1x16xf32>
    %16 = vector.broadcast %15 : vector<1x16xf32> to vector<512x16xf32>
    %17 = arith.mulf %14, %16 : vector<512x16xf32>
    %c0_14 = arith.constant 0 : index
    %c0_15 = arith.constant 0 : index
    %18 = vector.load %arg8[%c0_14, %c0_15] : memref<1x16xf32, #tpu.memory_space<vmem>>, vector<1x16xf32>
    %19 = vector.broadcast %18 : vector<1x16xf32> to vector<512x16xf32>
    %20 = arith.addf %17, %19 : vector<512x16xf32>
    %21 = arith.addf %13, %20 : vector<512x16xf32>
    %cst_16 = arith.constant 0.000000e+00 : f32
    %22 = vector.broadcast %cst_16 : f32 to vector<512x16xf32>
    %23 = arith.maximumf %21, %22 : vector<512x16xf32>
    %c0_17 = arith.constant 0 : index
    %c0_18 = arith.constant 0 : index
    %24 = vector.load %arg9[%c0_17, %c0_18] : memref<512x16xf32, #tpu.memory_space<vmem>>, vector<512x16xf32>
    tpu.vector_store %arg9[%c0_17, %c0_18], %23 {strides = array<i32>} : memref<512x16xf32, #tpu.memory_space<vmem>>, vector<512x16xf32>,
    return
  }
  func.func @transform_0(%arg0: i32) -> (i32, i32) {
    %c0_i32 = arith.constant 0 : i32
    %c0_i32_0 = arith.constant 0 : i32
    return %arg0, %c0_i32 : i32, i32
  }
  func.func @transform_1(%arg0: i32) -> (i32, i32) {
    %c0_i32 = arith.constant 0 : i32
    %c0_i32_0 = arith.constant 0 : i32
    %c0_i32_1 = arith.constant 0 : i32
    return %c0_i32, %c0_i32_0 : i32, i32
  }
  func.func @transform_2(%arg0: i32) -> (i32, i32) {
    %c0_i32 = arith.constant 0 : i32
    %c0_i32_0 = arith.constant 0 : i32
    %c0_i32_1 = arith.constant 0 : i32
    return %c0_i32, %c0_i32_0 : i32, i32
  }
  func.func @transform_3(%arg0: i32) -> (i32, i32) {
    %c0_i32 = arith.constant 0 : i32
    %c0_i32_0 = arith.constant 0 : i32
    %c0_i32_1 = arith.constant 0 : i32
    return %c0_i32, %c0_i32_0 : i32, i32
  }
  func.func @transform_4(%arg0: i32) -> (i32, i32) {
    %c0_i32 = arith.constant 0 : i32
    %c0_i32_0 = arith.constant 0 : i32
    %c0_i32_1 = arith.constant 0 : i32
    return %c0_i32, %c0_i32_0 : i32, i32
  }
  func.func @transform_5(%arg0: i32) -> (i32, i32) {
    %c0_i32 = arith.constant 0 : i32
    %c0_i32_0 = arith.constant 0 : i32
    return %arg0, %c0_i32 : i32, i32
  }
  func.func @transform_6(%arg0: i32) -> (i32, i32) {
    %c0_i32 = arith.constant 0 : i32
    %c0_i32_0 = arith.constant 0 : i32
    %c0_i32_1 = arith.constant 0 : i32
    return %c0_i32, %c0_i32_0 : i32, i32
  }
  func.func @transform_7(%arg0: i32) -> (i32, i32) {
    %c0_i32 = arith.constant 0 : i32
    %c0_i32_0 = arith.constant 0 : i32
    %c0_i32_1 = arith.constant 0 : i32
    return %c0_i32, %c0_i32_0 : i32, i32
  }
  func.func @transform_8(%arg0: i32) -> (i32, i32) {
    %c0_i32 = arith.constant 0 : i32
    %c0_i32_0 = arith.constant 0 : i32
    return %arg0, %c0_i32 : i32, i32
  }
}

</mosaic_0001>

<llo_original>
// kernel: bottleneck_forward.4
$region0: #{bottleneck_forward.4}
  #allocation0 [shape = 'u32[]', space=smem, size = 0x4, offset = 0x4, fixed_abs, tag = 'smem constant byte address 0x4 - core index']
  #allocation1 [shape = 'u32[144,128]{1,0:T(1,128)}', space=vmem, size = 0x12000, scoped, tag = 'internal scratch']
  %s0 = inlined_call_operand.vmem [shape: f32[2,16,16,4], index: 0, kind: input, shape index: {}]
  %s1 = inlined_call_operand.vmem [shape: f32[4,4], index: 1, kind: input, shape index: {}]
  %s2 = inlined_call_operand.vmem [shape: f32[2,2,4], index: 2, kind: output, shape index: {}]
  %s3 = sld [smem:[#allocation0]]
  $region41: #{bottleneck_forward.4} parent=0
    _
  %s5 = ssub.s32 1, %s3
  %s6 = scalar_select 0, %s5, %s3
  loop: start=0, step=1, limit=4
  $region2: #{bottleneck_forward.4} parent=0 // loop_pre_header
    _
  $region3: #{bottleneck_forward.4} parent=0 // loop_header
    %s8 = sphi 0, %s12
    %p9 = scmp.ge.s32.totalorder %s8, 4
    %s18 = sphi 0, %s20
    %s21 = sphi 0, %s18
    %s22 = sphi 0, %s21
    %s38 = sphi 0, %s22
    %s42 = sphi 0, %s42
    %s44 = sphi 0, %s42
    %s45 = sphi 0, %s44
    %s59 = sphi 0, %s45
    %s65 = sphi 0, %s67
    %s68 = sphi 0, %s65
    %s69 = sphi 0, %s68
    %s85 = sphi 0, %s69
  $region4: #{bottleneck_forward.4} parent=0 // loop_header_branch
    %11 = sbr.rel (%p9) target = $region8
  $region5: #{bottleneck_forward.4} parent=0 // loop_body
    %s13 = ssub.s32 %s8, 1
    %s14 = ssub.s32 %s8, 2
    %s15 = sadd.s32 %s8, 1
    %s16 = ssub.s32 %s8, %s15
    %p17 = scmp.eq.s32.totalorder %s16, 0
    %s19 = sadd.s32 %s18, 1
    %s20 = scalar_select %p17, %s18, %s19
    %p23 = pneg %p17
    %p24 = scmp.eq.s32.totalorder %s8, 1
    %p25 = por %p23, %p24
    %p26 = scmp.ne.s32.totalorder %s18, %s21
    %p27 = scmp.eq.s32.totalorder %s8, 0
    %p28 = por %p26, %p27
    %p29 = scmp.ne.s32.totalorder %s18, %s21
    %p30 = scmp.eq.s32.totalorder %s13, 1
    %p31 = por %p29, %p30
    %p32 = scmp.ne.s32.totalorder %s21, %s22
    %p33 = scmp.eq.s32.totalorder %s13, 0
    %p34 = por %p32, %p33
    %p35 = scmp.ne.s32.totalorder %s21, %s22
    %p36 = scmp.eq.s32.totalorder %s14, 1
    %p37 = por %p35, %p36
    %p39 = scmp.ne.s32.totalorder %s22, %s38
    %p40 = scmp.eq.s32.totalorder %s14, 0
    %p41 = por %p39, %p40
    %s43 = sadd.s32 %s42, 1
    %p46 = scmp.eq.s32.totalorder %s8, 1
    %p47 = scmp.ne.s32.totalorder %s42, %s44
    %p48 = scmp.eq.s32.totalorder %s8, 0
    %p49 = por %p47, %p48
    %p50 = scmp.ne.s32.totalorder %s42, %s44
    %p51 = scmp.eq.s32.totalorder %s13, 1
    %p52 = por %p50, %p51
    %p53 = scmp.ne.s32.totalorder %s44, %s45
    %p54 = scmp.eq.s32.totalorder %s13, 0
    %p55 = por %p53, %p54
    %p56 = scmp.ne.s32.totalorder %s44, %s45
    %p57 = scmp.eq.s32.totalorder %s14, 1
    %p58 = por %p56, %p57
    %p60 = scmp.ne.s32.totalorder %s45, %s59
    %p61 = scmp.eq.s32.totalorder %s14, 0
    %p62 = por %p60, %p61
    %s63 = ssub.s32 %s8, %s15
    %p64 = scmp.eq.s32.totalorder %s63, 0
    %s66 = sadd.s32 %s65, 1
    %s67 = scalar_select %p64, %s65, %s66
    %p70 = pneg %p64
    %p71 = scmp.eq.s32.totalorder %s8, 1
    %p72 = por %p70, %p71
    %p73 = scmp.ne.s32.totalorder %s65, %s68
    %p74 = scmp.eq.s32.totalorder %s8, 0
    %p75 = por %p73, %p74
    %p76 = scmp.ne.s32.totalorder %s65, %s68
    %p77 = scmp.eq.s32.totalorder %s13, 1
    %p78 = por %p76, %p77
    %p79 = scmp.ne.s32.totalorder %s68, %s69
    %p80 = scmp.eq.s32.totalorder %s13, 0
    %p81 = por %p79, %p80
    %p82 = scmp.ne.s32.totalorder %s68, %s69
    %p83 = scmp.eq.s32.totalorder %s14, 1
    %p84 = por %p82, %p83
    %p86 = scmp.ne.s32.totalorder %s69, %s85
    %p87 = scmp.eq.s32.totalorder %s14, 0
    %p88 = por %p86, %p87
    %p89 = scmp.le.s32.totalorder 1, %s8
    %p90 = scmp.lt.s32.totalorder %s8, 3
    %p91 = pnand %p89, %p90
    %p92 = pneg %p91
    // Predicated region
    $region9: #{bottleneck_forward.4} parent=5 // pred_check
      _
    $region10: #{bottleneck_forward.4} parent=5 // pred_check_branch
      %94 = sbr.rel (%p91) target = $region12
    $region11: #{bottleneck_forward.4} parent=5 // pred_region
      %s95 = ssub.s32 %s8, 1
      // Predicated region
      $region13: #{bottleneck_forward.4} parent=11 // pred_check
        %p96 = pneg %p55
      $region14: #{bottleneck_forward.4} parent=11 // pred_check_branch
        %98 = sbr.rel (%p96) target = $region16
      $region15: #{bottleneck_forward.4} parent=11 // pred_region
        _
      $region16: #{bottleneck_forward.4} parent=11 // pred_fallthru
        _
    $region12: #{bottleneck_forward.4} parent=5 // pred_fallthru
      _
    %p99 = scmp.lt.s32.totalorder %s8, 2
    // Predicated region
    $region17: #{bottleneck_forward.4} parent=5 // pred_check
      %p100 = pneg %p99
    $region18: #{bottleneck_forward.4} parent=5 // pred_check_branch
      %102 = sbr.rel (%p100) target = $region20
    $region19: #{bottleneck_forward.4} parent=5 // pred_region
      // Predicated region
      $region21: #{bottleneck_forward.4} parent=19 // pred_check
        %p103 = pneg %p28
      $region22: #{bottleneck_forward.4} parent=19 // pred_check_branch
        %105 = sbr.rel (%p103) target = $region24
      $region23: #{bottleneck_forward.4} parent=19 // pred_region
        %p106 = scmp.lt.s32.totalorder %s8, 1
        %s107 = scalar_select %p106, %s8, 1
        %s108 = smul.addr %s107, 32
        %s109 = smul.addr %s108, 8
        %s110 = scalar_lea.vmem %s0, %s109
      $region24: #{bottleneck_forward.4} parent=19 // pred_fallthru
        _
    $region20: #{bottleneck_forward.4} parent=5 // pred_fallthru
      _
    %p111 = scmp.le.s32.totalorder 1, %s8
    %p112 = scmp.lt.s32.totalorder %s8, 3
    %p113 = pnand %p111, %p112
    %p114 = pneg %p113
    // Predicated region
    $region25: #{bottleneck_forward.4} parent=5 // pred_check
      _
    $region26: #{bottleneck_forward.4} parent=5 // pred_check_branch
      %116 = sbr.rel (%p113) target = $region28
    $region27: #{bottleneck_forward.4} parent=5 // pred_region
      %s117 = ssub.s32 %s8, 1
      %p118 = scmp.lt.s32.totalorder %s13, 1
      %s119 = scalar_select %p118, %s13, 1
      %s120 = smul.addr %s119, 32
      %s121 = smul.addr %s120, 8
      %s122 = scalar_lea.vmem %s0, %s121
      %p123 = pneg %p34
      %p124 = pneg %p31
      %p125 = pneg %p55
      %p126 = pneg %p52
      %p127 = pneg %p81
      %p128 = pneg %p78
      %p129 = scmp.lt.s32.totalorder %s13, 1
      %s130 = scalar_select %p129, %s13, 1
      %s131 = smul.addr %s130, 2
      %s132 = scalar_lea.vmem %s2, %s131
      %p133 = scmp.lt.s32.totalorder %s13, 1
      %s134 = scalar_select %p133, %s13, 1
      %s135 = smul.addr %s134, 32
      %s136 = smul.addr %s135, 8
      %s137 = scalar_lea.vmem %s0, %s136
      %p138 = scmp.lt.s32.totalorder %s13, 1
      %s139 = scalar_select %p138, %s13, 1
      %s140 = smul.addr %s139, 2
      %s141 = scalar_lea.vmem %s2, %s140
      %v142 = vld [vmem:[%s137] sm:$0xff]
      %v143 = vld [vmem:[%s137 + $0x8] sm:$0xff]
      %v144 = vld [vmem:[%s137 + $0x10] sm:$0xff]
      %v145 = vld [vmem:[%s137 + $0x18] sm:$0xff]
      %v146 = vld [vmem:[%s137 + $0x20] sm:$0xff]
      %v147 = vld [vmem:[%s137 + $0x28] sm:$0xff]
      %v148 = vld [vmem:[%s137 + $0x30] sm:$0xff]
      %v149 = vld [vmem:[%s137 + $0x38] sm:$0xff]
      %v150 = vld [vmem:[%s137 + $0x40] sm:$0xff]
      %v151 = vld [vmem:[%s137 + $0x48] sm:$0xff]
      %v152 = vld [vmem:[%s137 + $0x50] sm:$0xff]
      %v153 = vld [vmem:[%s137 + $0x58] sm:$0xff]
      %v154 = vld [vmem:[%s137 + $0x60] sm:$0xff]
      %v155 = vld [vmem:[%s137 + $0x68] sm:$0xff]
      %v156 = vld [vmem:[%s137 + $0x70] sm:$0xff]
      %v157 = vld [vmem:[%s137 + $0x78] sm:$0xff]
      %v158 = vld [vmem:[%s137 + $0x80] sm:$0xff]
      %v159 = vld [vmem:[%s137 + $0x88] sm:$0xff]
      %v160 = vld [vmem:[%s137 + $0x90] sm:$0xff]
      %v161 = vld [vmem:[%s137 + $0x98] sm:$0xff]
      %v162 = vld [vmem:[%s137 + $0xa0] sm:$0xff]
      %v163 = vld [vmem:[%s137 + $0xa8] sm:$0xff]
      %v164 = vld [vmem:[%s137 + $0xb0] sm:$0xff]
      %v165 = vld [vmem:[%s137 + $0xb8] sm:$0xff]
      %v166 = vld [vmem:[%s137 + $0xc0] sm:$0xff]
      %v167 = vld [vmem:[%s137 + $0xc8] sm:$0xff]
      %v168 = vld [vmem:[%s137 + $0xd0] sm:$0xff]
      %v169 = vld [vmem:[%s137 + $0xd8] sm:$0xff]
      %v170 = vld [vmem:[%s137 + $0xe0] sm:$0xff]
      %v171 = vld [vmem:[%s137 + $0xe8] sm:$0xff]
      %v172 = vld [vmem:[%s137 + $0xf0] sm:$0xff]
      %v173 = vld [vmem:[%s137 + $0xf8] sm:$0xff]
      %v174 = vld [vmem:[%s1] sm:$0xf]
      %vm175 = vcmask 31744
      %v177 = vsel %vm175, %v142, 0
      %v180 = vsel %vm175, %v143, 0
      %v183 = vsel %vm175, %v144, 0
      %v186 = vsel %vm175, %v145, 0
      %v189 = vsel %vm175, %v146, 0
      %v192 = vsel %vm175, %v147, 0
      %v195 = vsel %vm175, %v148, 0
      %v198 = vsel %vm175, %v149, 0
      %v201 = vsel %vm175, %v150, 0
      %v204 = vsel %vm175, %v151, 0
      %v207 = vsel %vm175, %v152, 0
      %v210 = vsel %vm175, %v153, 0
      %v213 = vsel %vm175, %v154, 0
      %v216 = vsel %vm175, %v155, 0
      %v219 = vsel %vm175, %v156, 0
      %v222 = vsel %vm175, %v157, 0
      %v225 = vsel %vm175, %v158, 0
      %v228 = vsel %vm175, %v159, 0
      %v231 = vsel %vm175, %v160, 0
      %v234 = vsel %vm175, %v161, 0
      %v237 = vsel %vm175, %v162, 0
      %v240 = vsel %vm175, %v163, 0
      %v243 = vsel %vm175, %v164, 0
      %v246 = vsel %vm175, %v165, 0
      %v249 = vsel %vm175, %v166, 0
      %v252 = vsel %vm175, %v167, 0
      %v255 = vsel %vm175, %v168, 0
      %v258 = vsel %vm175, %v169, 0
      %v261 = vsel %vm175, %v170, 0
      %v264 = vsel %vm175, %v171, 0
      %v267 = vsel %vm175, %v172, 0
      %v270 = vsel %vm175, %v173, 0
      %vm272 = vcmask 1043456
      %v274 = vsel %vm272, %v174, 0
      %276 = vmatprep.subr.mxu0 0.0
      %277 = vmatpush1.msra.mxu0 0.0
      %278 = vmatprep.subr.mxu0 0.0
      %279 = vmatpush1.msra.mxu0 0.0
      %280 = vmatprep.subr.mxu0 0.0
      %281 = vmatpush1.msra.mxu0 0.0
      %282 = vmatprep.subr.mxu0 0.0
      %283 = vmatpush1.msra.mxu0 0.0
      %284 = vmatprep.subr.mxu0 0.0
      %285 = vmatpush1.msra.mxu0 0.0
      %286 = vmatprep.subr.mxu0 0.0
      %287 = vmatpush1.msra.mxu0 0.0
      %288 = vmatprep.subr.mxu0 0.0
      %289 = vmatpush1.msra.mxu0 0.0
      %290 = vmatprep.subr.mxu0 0.0
      %291 = vmatpush1.msra.mxu0 0.0
      %292 = vmatprep.subr.mxu0 0.0
      %293 = vmatpush1.msra.mxu0 0.0
      %294 = vmatprep.subr.mxu0 0.0
      %295 = vmatpush1.msra.mxu0 0.0
      %296 = vmatprep.subr.mxu0 0.0
      %297 = vmatpush1.msra.mxu0 0.0
      %298 = vmatprep.subr.mxu0 0.0
      %299 = vmatpush1.msra.mxu0 0.0
      %300 = vmatprep.subr.mxu0 0.0
      %301 = vmatpush1.msra.mxu0 0.0
      %302 = vmatprep.subr.mxu0 0.0
      %303 = vmatpush1.msra.mxu0 0.0
      %304 = vmatprep.subr.mxu0 0.0
      %305 = vmatpush1.msra.mxu0 0.0
      %306 = vmatprep.subr.mxu0 0.0
      %307 = vmatpush1.msra.mxu0 %v274
      %308 = vmatprep.subr.mxu0 0.0
      %309 = vmatpush2.msra.mxu0 0.0
      %310 = vmatprep.subr.mxu0 0.0
      %311 = vmatpush2.msra.mxu0 0.0
      %312 = vmatprep.subr.mxu0 0.0
      %313 = vmatpush2.msra.mxu0 0.0
      %314 = vmatprep.subr.mxu0 0.0
      %315 = vmatpush2.msra.mxu0 0.0
      %316 = vmatprep.subr.mxu0 0.0
      %317 = vmatpush2.msra.mxu0 0.0
      %318 = vmatprep.subr.mxu0 0.0
      %319 = vmatpush2.msra.mxu0 0.0
      %320 = vmatprep.subr.mxu0 0.0
      %321 = vmatpush2.msra.mxu0 0.0
      %322 = vmatprep.subr.mxu0 0.0
      %323 = vmatpush2.msra.mxu0 0.0
      %324 = vmatprep.subr.mxu0 0.0
      %325 = vmatpush2.msra.mxu0 0.0
      %326 = vmatprep.subr.mxu0 0.0
      %327 = vmatpush2.msra.mxu0 0.0
      %328 = vmatprep.subr.mxu0 0.0
      %329 = vmatpush2.msra.mxu0 0.0
      %330 = vmatprep.subr.mxu0 0.0
      %331 = vmatpush2.msra.mxu0 0.0
      %332 = vmatprep.subr.mxu0 0.0
      %333 = vmatpush2.msra.mxu0 0.0
      %334 = vmatprep.subr.mxu0 0.0
      %335 = vmatpush2.msra.mxu0 0.0
      %336 = vmatprep.subr.mxu0 0.0
      %337 = vmatpush2.msra.mxu0 0.0
      %338 = vmatprep.subr.mxu0 0.0
      %339 = vmatpush2.msra.mxu0 0.0
      %340 = vmatprep.mubr.f32.mxu0 0.0
      %341 = vmatmul.mubr.f32.gmra.mxu0 %v177
      %v342 = vpop.f32.mrf.mxu0
      %v343 = vadd.f32 0.0, %v342
      %v344 = vpop.f32.mrf.mxu0
      %345 = vmatprep.mubr.f32.mxu0 0.0
      %346 = vmatmul.mubr.f32.gmra.mxu0 %v180
      %v347 = vpop.f32.mrf.mxu0
      %v348 = vadd.f32 0.0, %v347
      %v349 = vpop.f32.mrf.mxu0
      %350 = vmatprep.mubr.f32.mxu0 0.0
      %351 = vmatmul.mubr.f32.gmra.mxu0 %v183
      %v352 = vpop.f32.mrf.mxu0
      %v353 = vadd.f32 0.0, %v352
      %v354 = vpop.f32.mrf.mxu0
      %355 = vmatprep.mubr.f32.mxu0 0.0
      %356 = vmatmul.mubr.f32.gmra.mxu0 %v186
      %v357 = vpop.f32.mrf.mxu0
      %v358 = vadd.f32 0.0, %v357
      %v359 = vpop.f32.mrf.mxu0
      %360 = vmatprep.mubr.f32.mxu0 0.0
      %361 = vmatmul.mubr.f32.gmra.mxu0 %v189
      %v362 = vpop.f32.mrf.mxu0
      %v363 = vadd.f32 0.0, %v362
      %v364 = vpop.f32.mrf.mxu0
      %365 = vmatprep.mubr.f32.mxu0 0.0
      %366 = vmatmul.mubr.f32.gmra.mxu0 %v192
      %v367 = vpop.f32.mrf.mxu0
      %v368 = vadd.f32 0.0, %v367
      %v369 = vpop.f32.mrf.mxu0
      %370 = vmatprep.mubr.f32.mxu0 0.0
      %371 = vmatmul.mubr.f32.gmra.mxu0 %v195
      %v372 = vpop.f32.mrf.mxu0
      %v373 = vadd.f32 0.0, %v372
      %v374 = vpop.f32.mrf.mxu0
      %375 = vmatprep.mubr.f32.mxu0 0.0
      %376 = vmatmul.mubr.f32.gmra.mxu0 %v198
      %v377 = vpop.f32.mrf.mxu0
      %v378 = vadd.f32 0.0, %v377
      %v379 = vpop.f32.mrf.mxu0
      %380 = vmatprep.mubr.f32.mxu0 0.0
      %381 = vmatmul.mubr.f32.gmra.mxu0 %v201
      %v382 = vpop.f32.mrf.mxu0
      %v383 = vadd.f32 0.0, %v382
      %v384 = vpop.f32.mrf.mxu0
      %385 = vmatprep.mubr.f32.mxu0 0.0
      %386 = vmatmul.mubr.f32.gmra.mxu0 %v204
      %v387 = vpop.f32.mrf.mxu0
      %v388 = vadd.f32 0.0, %v387
      %v389 = vpop.f32.mrf.mxu0
      %390 = vmatprep.mubr.f32.mxu0 0.0
      %391 = vmatmul.mubr.f32.gmra.mxu0 %v207
      %v392 = vpop.f32.mrf.mxu0
      %v393 = vadd.f32 0.0, %v392
      %v394 = vpop.f32.mrf.mxu0
      %395 = vmatprep.mubr.f32.mxu0 0.0
      %396 = vmatmul.mubr.f32.gmra.mxu0 %v210
      %v397 = vpop.f32.mrf.mxu0
      %v398 = vadd.f32 0.0, %v397
      %v399 = vpop.f32.mrf.mxu0
      %400 = vmatprep.mubr.f32.mxu0 0.0
      %401 = vmatmul.mubr.f32.gmra.mxu0 %v213
      %v402 = vpop.f32.mrf.mxu0
      %v403 = vadd.f32 0.0, %v402
      %v404 = vpop.f32.mrf.mxu0
      %405 = vmatprep.mubr.f32.mxu0 0.0
      %406 = vmatmul.mubr.f32.gmra.mxu0 %v216
      %v407 = vpop.f32.mrf.mxu0
      %v408 = vadd.f32 0.0, %v407
      %v409 = vpop.f32.mrf.mxu0
      %410 = vmatprep.mubr.f32.mxu0 0.0
      %411 = vmatmul.mubr.f32.gmra.mxu0 %v219
      %v412 = vpop.f32.mrf.mxu0
      %v413 = vadd.f32 0.0, %v412
      %v414 = vpop.f32.mrf.mxu0
      %415 = vmatprep.mubr.f32.mxu0 0.0
      %416 = vmatmul.mubr.f32.gmra.mxu0 %v222
      %v417 = vpop.f32.mrf.mxu0
      %v418 = vadd.f32 0.0, %v417
      %v419 = vpop.f32.mrf.mxu0
      %420 = vmatprep.mubr.f32.mxu0 0.0
      %421 = vmatmul.mubr.f32.gmra.mxu0 %v225
      %v422 = vpop.f32.mrf.mxu0
      %v423 = vadd.f32 0.0, %v422
      %v424 = vpop.f32.mrf.mxu0
      %425 = vmatprep.mubr.f32.mxu0 0.0
      %426 = vmatmul.mubr.f32.gmra.mxu0 %v228
      %v427 = vpop.f32.mrf.mxu0
      %v428 = vadd.f32 0.0, %v427
      %v429 = vpop.f32.mrf.mxu0
      %430 = vmatprep.mubr.f32.mxu0 0.0
      %431 = vmatmul.mubr.f32.gmra.mxu0 %v231
      %v432 = vpop.f32.mrf.mxu0
      %v433 = vadd.f32 0.0, %v432
      %v434 = vpop.f32.mrf.mxu0
      %435 = vmatprep.mubr.f32.mxu0 0.0
      %436 = vmatmul.mubr.f32.gmra.mxu0 %v234
      %v437 = vpop.f32.mrf.mxu0
      %v438 = vadd.f32 0.0, %v437
      %v439 = vpop.f32.mrf.mxu0
      %440 = vmatprep.mubr.f32.mxu0 0.0
      %441 = vmatmul.mubr.f32.gmra.mxu0 %v237
      %v442 = vpop.f32.mrf.mxu0
      %v443 = vadd.f32 0.0, %v442
      %v444 = vpop.f32.mrf.mxu0
      %445 = vmatprep.mubr.f32.mxu0 0.0
      %446 = vmatmul.mubr.f32.gmra.mxu0 %v240
      %v447 = vpop.f32.mrf.mxu0
      %v448 = vadd.f32 0.0, %v447
      %v449 = vpop.f32.mrf.mxu0
      %450 = vmatprep.mubr.f32.mxu0 0.0
      %451 = vmatmul.mubr.f32.gmra.mxu0 %v243
      %v452 = vpop.f32.mrf.mxu0
      %v453 = vadd.f32 0.0, %v452
      %v454 = vpop.f32.mrf.mxu0
      %455 = vmatprep.mubr.f32.mxu0 0.0
      %456 = vmatmul.mubr.f32.gmra.mxu0 %v246
      %v457 = vpop.f32.mrf.mxu0
      %v458 = vadd.f32 0.0, %v457
      %v459 = vpop.f32.mrf.mxu0
      %460 = vmatprep.mubr.f32.mxu0 0.0
      %461 = vmatmul.mubr.f32.gmra.mxu0 %v249
      %v462 = vpop.f32.mrf.mxu0
      %v463 = vadd.f32 0.0, %v462
      %v464 = vpop.f32.mrf.mxu0
      %465 = vmatprep.mubr.f32.mxu0 0.0
      %466 = vmatmul.mubr.f32.gmra.mxu0 %v252
      %v467 = vpop.f32.mrf.mxu0
      %v468 = vadd.f32 0.0, %v467
      %v469 = vpop.f32.mrf.mxu0
      %470 = vmatprep.mubr.f32.mxu0 0.0
      %471 = vmatmul.mubr.f32.gmra.mxu0 %v255
      %v472 = vpop.f32.mrf.mxu0
      %v473 = vadd.f32 0.0, %v472
      %v474 = vpop.f32.mrf.mxu0
      %475 = vmatprep.mubr.f32.mxu0 0.0
      %476 = vmatmul.mubr.f32.gmra.mxu0 %v258
      %v477 = vpop.f32.mrf.mxu0
      %v478 = vadd.f32 0.0, %v477
      %v479 = vpop.f32.mrf.mxu0
      %480 = vmatprep.mubr.f32.mxu0 0.0
      %481 = vmatmul.mubr.f32.gmra.mxu0 %v261
      %v482 = vpop.f32.mrf.mxu0
      %v483 = vadd.f32 0.0, %v482
      %v484 = vpop.f32.mrf.mxu0
      %485 = vmatprep.mubr.f32.mxu0 0.0
      %486 = vmatmul.mubr.f32.gmra.mxu0 %v264
      %v487 = vpop.f32.mrf.mxu0
      %v488 = vadd.f32 0.0, %v487
      %v489 = vpop.f32.mrf.mxu0
      %490 = vmatprep.mubr.f32.mxu0 0.0
      %491 = vmatmul.mubr.f32.gmra.mxu0 %v267
      %v492 = vpop.f32.mrf.mxu0
      %v493 = vadd.f32 0.0, %v492
      %v494 = vpop.f32.mrf.mxu0
      %495 = vmatprep.mubr.f32.mxu0 0.0
      %496 = vmatmul.mubr.f32.gmra.mxu0 %v270
      %v497 = vpop.f32.mrf.mxu0
      %v498 = vadd.f32 0.0, %v497
      %v499 = vpop.f32.mrf.mxu0
      %500 = vdwg.mxu0
      %v501 = vsel %vm175, %v343, 0.0
      %v502 = vsel %vm175, %v348, 0.0
      %v503 = vadd.f32 %v501, %v502
      %v504 = vsel %vm175, %v353, 0.0
      %v505 = vadd.f32 %v503, %v504
      %v506 = vsel %vm175, %v358, 0.0
      %v507 = vadd.f32 %v505, %v506
      %v508 = vsel %vm175, %v363, 0.0
      %v509 = vadd.f32 %v507, %v508
      %v510 = vsel %vm175, %v368, 0.0
      %v511 = vadd.f32 %v509, %v510
      %v512 = vsel %vm175, %v373, 0.0
      %v513 = vadd.f32 %v511, %v512
      %v514 = vsel %vm175, %v378, 0.0
      %v515 = vadd.f32 %v513, %v514
      %v516 = vsel %vm175, %v383, 0.0
      %v517 = vadd.f32 %v515, %v516
      %v518 = vsel %vm175, %v388, 0.0
      %v519 = vadd.f32 %v517, %v518
      %v520 = vsel %vm175, %v393, 0.0
      %v521 = vadd.f32 %v519, %v520
      %v522 = vsel %vm175, %v398, 0.0
      %v523 = vadd.f32 %v521, %v522
      %v524 = vsel %vm175, %v403, 0.0
      %v525 = vadd.f32 %v523, %v524
      %v526 = vsel %vm175, %v408, 0.0
      %v527 = vadd.f32 %v525, %v526
      %v528 = vsel %vm175, %v413, 0.0
      %v529 = vadd.f32 %v527, %v528
      %v530 = vsel %vm175, %v418, 0.0
      %v531 = vadd.f32 %v529, %v530
      %v532 = vsel %vm175, %v423, 0.0
      %v533 = vadd.f32 %v531, %v532
      %v534 = vsel %vm175, %v428, 0.0
      %v535 = vadd.f32 %v533, %v534
      %v536 = vsel %vm175, %v433, 0.0
      %v537 = vadd.f32 %v535, %v536
      %v538 = vsel %vm175, %v438, 0.0
      %v539 = vadd.f32 %v537, %v538
      %v540 = vsel %vm175, %v443, 0.0
      %v541 = vadd.f32 %v539, %v540
      %v542 = vsel %vm175, %v448, 0.0
      %v543 = vadd.f32 %v541, %v542
      %v544 = vsel %vm175, %v453, 0.0
      %v545 = vadd.f32 %v543, %v544
      %v546 = vsel %vm175, %v458, 0.0
      %v547 = vadd.f32 %v545, %v546
      %v548 = vsel %vm175, %v463, 0.0
      %v549 = vadd.f32 %v547, %v548
      %v550 = vsel %vm175, %v468, 0.0
      %v551 = vadd.f32 %v549, %v550
      %v552 = vsel %vm175, %v473, 0.0
      %v553 = vadd.f32 %v551, %v552
      %v554 = vsel %vm175, %v478, 0.0
      %v555 = vadd.f32 %v553, %v554
      %v556 = vsel %vm175, %v483, 0.0
      %v557 = vadd.f32 %v555, %v556
      %v558 = vsel %vm175, %v488, 0.0
      %v559 = vadd.f32 %v557, %v558
      %v560 = vsel %vm175, %v493, 0.0
      %v561 = vadd.f32 %v559, %v560
      %v562 = vsel %vm175, %v498, 0.0
      %v563 = vadd.f32 %v561, %v562
      %v564 = vrot.slane %v563, 4
      %v565 = vadd.f32 %v563, %v564
      %v566 = vrot.slane %v565, 2
      %v567 = vadd.f32 %v565, %v566
      %v568 = vrot.slane %v567, 1
      %v569 = vadd.f32 %v567, %v568
      %v570 = vmul.f32 %v343, %v343
      %v571 = vmul.f32 %v348, %v348
      %v572 = vmul.f32 %v353, %v353
      %v573 = vmul.f32 %v358, %v358
      %v574 = vmul.f32 %v363, %v363
      %v575 = vmul.f32 %v368, %v368
      %v576 = vmul.f32 %v373, %v373
      %v577 = vmul.f32 %v378, %v378
      %v578 = vmul.f32 %v383, %v383
      %v579 = vmul.f32 %v388, %v388
      %v580 = vmul.f32 %v393, %v393
      %v581 = vmul.f32 %v398, %v398
      %v582 = vmul.f32 %v403, %v403
      %v583 = vmul.f32 %v408, %v408
      %v584 = vmul.f32 %v413, %v413
      %v585 = vmul.f32 %v418, %v418
      %v586 = vmul.f32 %v423, %v423
      %v587 = vmul.f32 %v428, %v428
      %v588 = vmul.f32 %v433, %v433
      %v589 = vmul.f32 %v438, %v438
      %v590 = vmul.f32 %v443, %v443
      %v591 = vmul.f32 %v448, %v448
      %v592 = vmul.f32 %v453, %v453
      %v593 = vmul.f32 %v458, %v458
      %v594 = vmul.f32 %v463, %v463
      %v595 = vmul.f32 %v468, %v468
      %v596 = vmul.f32 %v473, %v473
      %v597 = vmul.f32 %v478, %v478
      %v598 = vmul.f32 %v483, %v483
      %v599 = vmul.f32 %v488, %v488
      %v600 = vmul.f32 %v493, %v493
      %v601 = vmul.f32 %v498, %v498
      %v602 = vsel %vm175, %v570, 0.0
      %v603 = vsel %vm175, %v571, 0.0
      %v604 = vadd.f32 %v602, %v603
      %v605 = vsel %vm175, %v572, 0.0
      %v606 = vadd.f32 %v604, %v605
      %v607 = vsel %vm175, %v573, 0.0
      %v608 = vadd.f32 %v606, %v607
      %v609 = vsel %vm175, %v574, 0.0
      %v610 = vadd.f32 %v608, %v609
      %v611 = vsel %vm175, %v575, 0.0
      %v612 = vadd.f32 %v610, %v611
      %v613 = vsel %vm175, %v576, 0.0
      %v614 = vadd.f32 %v612, %v613
      %v615 = vsel %vm175, %v577, 0.0
      %v616 = vadd.f32 %v614, %v615
      %v617 = vsel %vm175, %v578, 0.0
      %v618 = vadd.f32 %v616, %v617
      %v619 = vsel %vm175, %v579, 0.0
      %v620 = vadd.f32 %v618, %v619
      %v621 = vsel %vm175, %v580, 0.0
      %v622 = vadd.f32 %v620, %v621
      %v623 = vsel %vm175, %v581, 0.0
      %v624 = vadd.f32 %v622, %v623
      %v625 = vsel %vm175, %v582, 0.0
      %v626 = vadd.f32 %v624, %v625
      %v627 = vsel %vm175, %v583, 0.0
      %v628 = vadd.f32 %v626, %v627
      %v629 = vsel %vm175, %v584, 0.0
      %v630 = vadd.f32 %v628, %v629
      %v631 = vsel %vm175, %v585, 0.0
      %v632 = vadd.f32 %v630, %v631
      %v633 = vsel %vm175, %v586, 0.0
      %v634 = vadd.f32 %v632, %v633
      %v635 = vsel %vm175, %v587, 0.0
      %v636 = vadd.f32 %v634, %v635
      %v637 = vsel %vm175, %v588, 0.0
      %v638 = vadd.f32 %v636, %v637
      %v639 = vsel %vm175, %v589, 0.0
      %v640 = vadd.f32 %v638, %v639
      %v641 = vsel %vm175, %v590, 0.0
      %v642 = vadd.f32 %v640, %v641
      %v643 = vsel %vm175, %v591, 0.0
      %v644 = vadd.f32 %v642, %v643
      %v645 = vsel %vm175, %v592, 0.0
      %v646 = vadd.f32 %v644, %v645
      %v647 = vsel %vm175, %v593, 0.0
      %v648 = vadd.f32 %v646, %v647
      %v649 = vsel %vm175, %v594, 0.0
      %v650 = vadd.f32 %v648, %v649
      %v651 = vsel %vm175, %v595, 0.0
      %v652 = vadd.f32 %v650, %v651
      %v653 = vsel %vm175, %v596, 0.0
      %v654 = vadd.f32 %v652, %v653
      %v655 = vsel %vm175, %v597, 0.0
      %v656 = vadd.f32 %v654, %v655
      %v657 = vsel %vm175, %v598, 0.0
      %v658 = vadd.f32 %v656, %v657
      %v659 = vsel %vm175, %v599, 0.0
      %v660 = vadd.f32 %v658, %v659
      %v661 = vsel %vm175, %v600, 0.0
      %v662 = vadd.f32 %v660, %v661
      %v663 = vsel %vm175, %v601, 0.0
      %v664 = vadd.f32 %v662, %v663
      %v665 = vrot.slane %v664, 4
      %v666 = vadd.f32 %v664, %v665
      %v667 = vrot.slane %v666, 2
      %v668 = vadd.f32 %v666, %v667
      %v669 = vrot.slane %v668, 1
      %v670 = vadd.f32 %v668, %v669
      %vm671 = vcmask 1040384
      %v672 = vsel %vm671, %v569, %v670
      %vm673 = vcmask 25600
      %674 = vst.msk [vmem:[%s141] sm:$0x3] %vm673, %v672
      %p675 = scmp.lt.s32.totalorder %s13, 1
      %s676 = scalar_select %p675, %s13, 1
      %s677 = smul.addr %s676, 2
      %s678 = scalar_lea.vmem %s2, %s677
      // Predicated region
      $region29: #{bottleneck_forward.4} parent=27 // pred_check
        %p679 = pneg %p78
      $region30: #{bottleneck_forward.4} parent=27 // pred_check_branch
        %681 = sbr.rel (%p679) target = $region32
      $region31: #{bottleneck_forward.4} parent=27 // pred_region
        _
      $region32: #{bottleneck_forward.4} parent=27 // pred_fallthru
        _
    $region28: #{bottleneck_forward.4} parent=5 // pred_fallthru
      _
    %p682 = scmp.le.s32.totalorder 2, %s8
    // Predicated region
    $region33: #{bottleneck_forward.4} parent=5 // pred_check
      %p683 = pneg %p682
    $region34: #{bottleneck_forward.4} parent=5 // pred_check_branch
      %685 = sbr.rel (%p683) target = $region36
    $region35: #{bottleneck_forward.4} parent=5 // pred_region
      %s686 = ssub.s32 %s8, 2
      // Predicated region
      $region37: #{bottleneck_forward.4} parent=35 // pred_check
        %p687 = pneg %p84
      $region38: #{bottleneck_forward.4} parent=35 // pred_check_branch
        %689 = sbr.rel (%p687) target = $region40
      $region39: #{bottleneck_forward.4} parent=35 // pred_region
        %p690 = scmp.lt.s32.totalorder %s14, 1
        %s691 = scalar_select %p690, %s14, 1
        %s692 = smul.addr %s691, 2
        %s693 = scalar_lea.vmem %s2, %s692
      $region40: #{bottleneck_forward.4} parent=35 // pred_fallthru
        _
    $region36: #{bottleneck_forward.4} parent=5 // pred_fallthru
      _
  $region6: #{bottleneck_forward.4} parent=0 // loop_footer
    %s12 = sadd.s32 1, %s8
  $region7: #{bottleneck_forward.4} parent=0 // loop_footer_branch
    %7 = sbr.rel target = $region3
  $region8: #{bottleneck_forward.4} parent=0 // loop_exit
    _

// kernel: bottleneck_forward.6
$region0: #{bottleneck_forward.6}
  #allocation0 [shape = 'u32[]', space=smem, size = 0x4, offset = 0x4, fixed_abs, tag = 'smem constant byte address 0x4 - core index']
  #allocation1 [shape = 'u32[144,128]{1,0:T(1,128)}', space=vmem, size = 0x12000, scoped, tag = 'internal scratch']
  %s0 = inlined_call_operand.vmem [shape: f32[512,4], index: 0, kind: input, shape index: {}]
  %s1 = inlined_call_operand.vmem [shape: f32[1,4], index: 1, kind: input, shape index: {}]
  %s2 = inlined_call_operand.vmem [shape: f32[1,4], index: 2, kind: input, shape index: {}]
  %s3 = inlined_call_operand.vmem [shape: f32[1,1,4], index: 3, kind: output, shape index: {0}]
  %s4 = inlined_call_operand.vmem [shape: f32[1,4,4], index: 4, kind: output, shape index: {1}]
  %5 = xla_tuple %s3, %s4
  %s6 = sld [smem:[#allocation0]]
  $region30: #{bottleneck_forward.6} parent=0
    _
  %s8 = ssub.s32 1, %s6
  %s9 = scalar_select 0, %s8, %s6
  // Predicated region
  $region2: #{bottleneck_forward.6} parent=0 // pred_check
    _
  $region3: #{bottleneck_forward.6} parent=0 // pred_check_branch
    %11 = sbr.rel (0) target = $region5
  $region4: #{bottleneck_forward.6} parent=0 // pred_region
    _
  $region5: #{bottleneck_forward.6} parent=0 // pred_fallthru
    _
  // Predicated region
  $region6: #{bottleneck_forward.6} parent=0 // pred_check
    _
  $region7: #{bottleneck_forward.6} parent=0 // pred_check_branch
    %13 = sbr.rel (0) target = $region9
  $region8: #{bottleneck_forward.6} parent=0 // pred_region
    _
  $region9: #{bottleneck_forward.6} parent=0 // pred_fallthru
    _
  // Predicated region
  $region10: #{bottleneck_forward.6} parent=0 // pred_check
    _
  $region11: #{bottleneck_forward.6} parent=0 // pred_check_branch
    %15 = sbr.rel (0) target = $region13
  $region12: #{bottleneck_forward.6} parent=0 // pred_region
    _
  $region13: #{bottleneck_forward.6} parent=0 // pred_fallthru
    _
  %v16 = vld [vmem:[%s0] sm:$0xff]
  %v17 = vld [vmem:[%s0 + $0x8] sm:$0xff]
  %v18 = vld [vmem:[%s0 + $0x10] sm:$0xff]
  %v19 = vld [vmem:[%s0 + $0x18] sm:$0xff]
  %v20 = vld [vmem:[%s0 + $0x20] sm:$0xff]
  %v21 = vld [vmem:[%s0 + $0x28] sm:$0xff]
  %v22 = vld [vmem:[%s0 + $0x30] sm:$0xff]
  %v23 = vld [vmem:[%s0 + $0x38] sm:$0xff]
  %v24 = vld [vmem:[%s0 + $0x40] sm:$0xff]
  %v25 = vld [vmem:[%s0 + $0x48] sm:$0xff]
  %v26 = vld [vmem:[%s0 + $0x50] sm:$0xff]
  %v27 = vld [vmem:[%s0 + $0x58] sm:$0xff]
  %v28 = vld [vmem:[%s0 + $0x60] sm:$0xff]
  %v29 = vld [vmem:[%s0 + $0x68] sm:$0xff]
  %v30 = vld [vmem:[%s0 + $0x70] sm:$0xff]
  %v31 = vld [vmem:[%s0 + $0x78] sm:$0xff]
  %v32 = vld [vmem:[%s0 + $0x80] sm:$0xff]
  %v33 = vld [vmem:[%s0 + $0x88] sm:$0xff]
  %v34 = vld [vmem:[%s0 + $0x90] sm:$0xff]
  %v35 = vld [vmem:[%s0 + $0x98] sm:$0xff]
  %v36 = vld [vmem:[%s0 + $0xa0] sm:$0xff]
  %v37 = vld [vmem:[%s0 + $0xa8] sm:$0xff]
  %v38 = vld [vmem:[%s0 + $0xb0] sm:$0xff]
  %v39 = vld [vmem:[%s0 + $0xb8] sm:$0xff]
  %v40 = vld [vmem:[%s0 + $0xc0] sm:$0xff]
  %v41 = vld [vmem:[%s0 + $0xc8] sm:$0xff]
  %v42 = vld [vmem:[%s0 + $0xd0] sm:$0xff]
  %v43 = vld [vmem:[%s0 + $0xd8] sm:$0xff]
  %v44 = vld [vmem:[%s0 + $0xe0] sm:$0xff]
  %v45 = vld [vmem:[%s0 + $0xe8] sm:$0xff]
  %v46 = vld [vmem:[%s0 + $0xf0] sm:$0xff]
  %v47 = vld [vmem:[%s0 + $0xf8] sm:$0xff]
  %v48 = vld [vmem:[%s0 + $0x100] sm:$0xff]
  %v49 = vld [vmem:[%s0 + $0x108] sm:$0xff]
  %v50 = vld [vmem:[%s0 + $0x110] sm:$0xff]
  %v51 = vld [vmem:[%s0 + $0x118] sm:$0xff]
  %v52 = vld [vmem:[%s0 + $0x120] sm:$0xff]
  %v53 = vld [vmem:[%s0 + $0x128] sm:$0xff]
  %v54 = vld [vmem:[%s0 + $0x130] sm:$0xff]
  %v55 = vld [vmem:[%s0 + $0x138] sm:$0xff]
  %v56 = vld [vmem:[%s0 + $0x140] sm:$0xff]
  %v57 = vld [vmem:[%s0 + $0x148] sm:$0xff]
  %v58 = vld [vmem:[%s0 + $0x150] sm:$0xff]
  %v59 = vld [vmem:[%s0 + $0x158] sm:$0xff]
  %v60 = vld [vmem:[%s0 + $0x160] sm:$0xff]
  %v61 = vld [vmem:[%s0 + $0x168] sm:$0xff]
  %v62 = vld [vmem:[%s0 + $0x170] sm:$0xff]
  %v63 = vld [vmem:[%s0 + $0x178] sm:$0xff]
  %v64 = vld [vmem:[%s0 + $0x180] sm:$0xff]
  %v65 = vld [vmem:[%s0 + $0x188] sm:$0xff]
  %v66 = vld [vmem:[%s0 + $0x190] sm:$0xff]
  %v67 = vld [vmem:[%s0 + $0x198] sm:$0xff]
  %v68 = vld [vmem:[%s0 + $0x1a0] sm:$0xff]
  %v69 = vld [vmem:[%s0 + $0x1a8] sm:$0xff]
  %v70 = vld [vmem:[%s0 + $0x1b0] sm:$0xff]
  %v71 = vld [vmem:[%s0 + $0x1b8] sm:$0xff]
  %v72 = vld [vmem:[%s0 + $0x1c0] sm:$0xff]
  %v73 = vld [vmem:[%s0 + $0x1c8] sm:$0xff]
  %v74 = vld [vmem:[%s0 + $0x1d0] sm:$0xff]
  %v75 = vld [vmem:[%s0 + $0x1d8] sm:$0xff]
  %v76 = vld [vmem:[%s0 + $0x1e0] sm:$0xff]
  %v77 = vld [vmem:[%s0 + $0x1e8] sm:$0xff]
  %v78 = vld [vmem:[%s0 + $0x1f0] sm:$0xff]
  %v79 = vld [vmem:[%s0 + $0x1f8] sm:$0xff]
  %v80 = vld [vmem:[%s1] sm:$0x1]
  %v82 = vlaneseq
  %v83 = vshrl.u32 %v82, 7
  %v84 = vsub.s32 0, %v83
  %v85 = vrot.slane %v80, %v84
  %v87 = vmul.f32 %v16, %v85
  %v88 = vmul.f32 %v17, %v85
  %v89 = vmul.f32 %v18, %v85
  %v90 = vmul.f32 %v19, %v85
  %v91 = vmul.f32 %v20, %v85
  %v92 = vmul.f32 %v21, %v85
  %v93 = vmul.f32 %v22, %v85
  %v94 = vmul.f32 %v23, %v85
  %v95 = vmul.f32 %v24, %v85
  %v96 = vmul.f32 %v25, %v85
  %v97 = vmul.f32 %v26, %v85
  %v98 = vmul.f32 %v27, %v85
  %v99 = vmul.f32 %v28, %v85
  %v100 = vmul.f32 %v29, %v85
  %v101 = vmul.f32 %v30, %v85
  %v102 = vmul.f32 %v31, %v85
  %v103 = vmul.f32 %v32, %v85
  %v104 = vmul.f32 %v33, %v85
  %v105 = vmul.f32 %v34, %v85
  %v106 = vmul.f32 %v35, %v85
  %v107 = vmul.f32 %v36, %v85
  %v108 = vmul.f32 %v37, %v85
  %v109 = vmul.f32 %v38, %v85
  %v110 = vmul.f32 %v39, %v85
  %v111 = vmul.f32 %v40, %v85
  %v112 = vmul.f32 %v41, %v85
  %v113 = vmul.f32 %v42, %v85
  %v114 = vmul.f32 %v43, %v85
  %v115 = vmul.f32 %v44, %v85
  %v116 = vmul.f32 %v45, %v85
  %v117 = vmul.f32 %v46, %v85
  %v118 = vmul.f32 %v47, %v85
  %v119 = vmul.f32 %v48, %v85
  %v120 = vmul.f32 %v49, %v85
  %v121 = vmul.f32 %v50, %v85
  %v122 = vmul.f32 %v51, %v85
  %v123 = vmul.f32 %v52, %v85
  %v124 = vmul.f32 %v53, %v85
  %v125 = vmul.f32 %v54, %v85
  %v126 = vmul.f32 %v55, %v85
  %v127 = vmul.f32 %v56, %v85
  %v128 = vmul.f32 %v57, %v85
  %v129 = vmul.f32 %v58, %v85
  %v130 = vmul.f32 %v59, %v85
  %v131 = vmul.f32 %v60, %v85
  %v132 = vmul.f32 %v61, %v85
  %v133 = vmul.f32 %v62, %v85
  %v134 = vmul.f32 %v63, %v85
  %v135 = vmul.f32 %v64, %v85
  %v136 = vmul.f32 %v65, %v85
  %v137 = vmul.f32 %v66, %v85
  %v138 = vmul.f32 %v67, %v85
  %v139 = vmul.f32 %v68, %v85
  %v140 = vmul.f32 %v69, %v85
  %v141 = vmul.f32 %v70, %v85
  %v142 = vmul.f32 %v71, %v85
  %v143 = vmul.f32 %v72, %v85
  %v144 = vmul.f32 %v73, %v85
  %v145 = vmul.f32 %v74, %v85
  %v146 = vmul.f32 %v75, %v85
  %v147 = vmul.f32 %v76, %v85
  %v148 = vmul.f32 %v77, %v85
  %v149 = vmul.f32 %v78, %v85
  %v150 = vmul.f32 %v79, %v85
  %v151 = vld [vmem:[%s2] sm:$0x1]
  %v153 = vlaneseq
  %v154 = vshrl.u32 %v153, 7
  %v155 = vsub.s32 0, %v154
  %v156 = vrot.slane %v151, %v155
  %v158 = vadd.f32 %v87, %v156
  %v159 = vadd.f32 %v88, %v156
  %v160 = vadd.f32 %v89, %v156
  %v161 = vadd.f32 %v90, %v156
  %v162 = vadd.f32 %v91, %v156
  %v163 = vadd.f32 %v92, %v156
  %v164 = vadd.f32 %v93, %v156
  %v165 = vadd.f32 %v94, %v156
  %v166 = vadd.f32 %v95, %v156
  %v167 = vadd.f32 %v96, %v156
  %v168 = vadd.f32 %v97, %v156
  %v169 = vadd.f32 %v98, %v156
  %v170 = vadd.f32 %v99, %v156
  %v171 = vadd.f32 %v100, %v156
  %v172 = vadd.f32 %v101, %v156
  %v173 = vadd.f32 %v102, %v156
  %v174 = vadd.f32 %v103, %v156
  %v175 = vadd.f32 %v104, %v156
  %v176 = vadd.f32 %v105, %v156
  %v177 = vadd.f32 %v106, %v156
  %v178 = vadd.f32 %v107, %v156
  %v179 = vadd.f32 %v108, %v156
  %v180 = vadd.f32 %v109, %v156
  %v181 = vadd.f32 %v110, %v156
  %v182 = vadd.f32 %v111, %v156
  %v183 = vadd.f32 %v112, %v156
  %v184 = vadd.f32 %v113, %v156
  %v185 = vadd.f32 %v114, %v156
  %v186 = vadd.f32 %v115, %v156
  %v187 = vadd.f32 %v116, %v156
  %v188 = vadd.f32 %v117, %v156
  %v189 = vadd.f32 %v118, %v156
  %v190 = vadd.f32 %v119, %v156
  %v191 = vadd.f32 %v120, %v156
  %v192 = vadd.f32 %v121, %v156
  %v193 = vadd.f32 %v122, %v156
  %v194 = vadd.f32 %v123, %v156
  %v195 = vadd.f32 %v124, %v156
  %v196 = vadd.f32 %v125, %v156
  %v197 = vadd.f32 %v126, %v156
  %v198 = vadd.f32 %v127, %v156
  %v199 = vadd.f32 %v128, %v156
  %v200 = vadd.f32 %v129, %v156
  %v201 = vadd.f32 %v130, %v156
  %v202 = vadd.f32 %v131, %v156
  %v203 = vadd.f32 %v132, %v156
  %v204 = vadd.f32 %v133, %v156
  %v205 = vadd.f32 %v134, %v156
  %v206 = vadd.f32 %v135, %v156
  %v207 = vadd.f32 %v136, %v156
  %v208 = vadd.f32 %v137, %v156
  %v209 = vadd.f32 %v138, %v156
  %v210 = vadd.f32 %v139, %v156
  %v211 = vadd.f32 %v140, %v156
  %v212 = vadd.f32 %v141, %v156
  %v213 = vadd.f32 %v142, %v156
  %v214 = vadd.f32 %v143, %v156
  %v215 = vadd.f32 %v144, %v156
  %v216 = vadd.f32 %v145, %v156
  %v217 = vadd.f32 %v146, %v156
  %v218 = vadd.f32 %v147, %v156
  %v219 = vadd.f32 %v148, %v156
  %v220 = vadd.f32 %v149, %v156
  %v221 = vadd.f32 %v150, %v156
  %v222 = vmax.f32 %v158, 0.0
  %v223 = vmax.f32 %v159, 0.0
  %v224 = vmax.f32 %v160, 0.0
  %v225 = vmax.f32 %v161, 0.0
  %v226 = vmax.f32 %v162, 0.0
  %v227 = vmax.f32 %v163, 0.0
  %v228 = vmax.f32 %v164, 0.0
  %v229 = vmax.f32 %v165, 0.0
  %v230 = vmax.f32 %v166, 0.0
  %v231 = vmax.f32 %v167, 0.0
  %v232 = vmax.f32 %v168, 0.0
  %v233 = vmax.f32 %v169, 0.0
  %v234 = vmax.f32 %v170, 0.0
  %v235 = vmax.f32 %v171, 0.0
  %v236 = vmax.f32 %v172, 0.0
  %v237 = vmax.f32 %v173, 0.0
  %v238 = vmax.f32 %v174, 0.0
  %v239 = vmax.f32 %v175, 0.0
  %v240 = vmax.f32 %v176, 0.0
  %v241 = vmax.f32 %v177, 0.0
  %v242 = vmax.f32 %v178, 0.0
  %v243 = vmax.f32 %v179, 0.0
  %v244 = vmax.f32 %v180, 0.0
  %v245 = vmax.f32 %v181, 0.0
  %v246 = vmax.f32 %v182, 0.0
  %v247 = vmax.f32 %v183, 0.0
  %v248 = vmax.f32 %v184, 0.0
  %v249 = vmax.f32 %v185, 0.0
  %v250 = vmax.f32 %v186, 0.0
  %v251 = vmax.f32 %v187, 0.0
  %v252 = vmax.f32 %v188, 0.0
  %v253 = vmax.f32 %v189, 0.0
  %v254 = vmax.f32 %v190, 0.0
  %v255 = vmax.f32 %v191, 0.0
  %v256 = vmax.f32 %v192, 0.0
  %v257 = vmax.f32 %v193, 0.0
  %v258 = vmax.f32 %v194, 0.0
  %v259 = vmax.f32 %v195, 0.0
  %v260 = vmax.f32 %v196, 0.0
  %v261 = vmax.f32 %v197, 0.0
  %v262 = vmax.f32 %v198, 0.0
  %v263 = vmax.f32 %v199, 0.0
  %v264 = vmax.f32 %v200, 0.0
  %v265 = vmax.f32 %v201, 0.0
  %v266 = vmax.f32 %v202, 0.0
  %v267 = vmax.f32 %v203, 0.0
  %v268 = vmax.f32 %v204, 0.0
  %v269 = vmax.f32 %v205, 0.0
  %v270 = vmax.f32 %v206, 0.0
  %v271 = vmax.f32 %v207, 0.0
  %v272 = vmax.f32 %v208, 0.0
  %v273 = vmax.f32 %v209, 0.0
  %v274 = vmax.f32 %v210, 0.0
  %v275 = vmax.f32 %v211, 0.0
  %v276 = vmax.f32 %v212, 0.0
  %v277 = vmax.f32 %v213, 0.0
  %v278 = vmax.f32 %v214, 0.0
  %v279 = vmax.f32 %v215, 0.0
  %v280 = vmax.f32 %v216, 0.0
  %v281 = vmax.f32 %v217, 0.0
  %v282 = vmax.f32 %v218, 0.0
  %v283 = vmax.f32 %v219, 0.0
  %v284 = vmax.f32 %v220, 0.0
  %v285 = vmax.f32 %v221, 0.0
  %vm286 = vcmask 31744
  %v287 = vsel %vm286, %v222, 0.0
  %v288 = vsel %vm286, %v223, 0.0
  %v289 = vadd.f32 %v287, %v288
  %v290 = vsel %vm286, %v224, 0.0
  %v291 = vadd.f32 %v289, %v290
  %v292 = vsel %vm286, %v225, 0.0
  %v293 = vadd.f32 %v291, %v292
  %v294 = vsel %vm286, %v226, 0.0
  %v295 = vadd.f32 %v293, %v294
  %v296 = vsel %vm286, %v227, 0.0
  %v297 = vadd.f32 %v295, %v296
  %v298 = vsel %vm286, %v228, 0.0
  %v299 = vadd.f32 %v297, %v298
  %v300 = vsel %vm286, %v229, 0.0
  %v301 = vadd.f32 %v299, %v300
  %v302 = vsel %vm286, %v230, 0.0
  %v303 = vadd.f32 %v301, %v302
  %v304 = vsel %vm286, %v231, 0.0
  %v305 = vadd.f32 %v303, %v304
  %v306 = vsel %vm286, %v232, 0.0
  %v307 = vadd.f32 %v305, %v306
  %v308 = vsel %vm286, %v233, 0.0
  %v309 = vadd.f32 %v307, %v308
  %v310 = vsel %vm286, %v234, 0.0
  %v311 = vadd.f32 %v309, %v310
  %v312 = vsel %vm286, %v235, 0.0
  %v313 = vadd.f32 %v311, %v312
  %v314 = vsel %vm286, %v236, 0.0
  %v315 = vadd.f32 %v313, %v314
  %v316 = vsel %vm286, %v237, 0.0
  %v317 = vadd.f32 %v315, %v316
  %v318 = vsel %vm286, %v238, 0.0
  %v319 = vadd.f32 %v317, %v318
  %v320 = vsel %vm286, %v239, 0.0
  %v321 = vadd.f32 %v319, %v320
  %v322 = vsel %vm286, %v240, 0.0
  %v323 = vadd.f32 %v321, %v322
  %v324 = vsel %vm286, %v241, 0.0
  %v325 = vadd.f32 %v323, %v324
  %v326 = vsel %vm286, %v242, 0.0
  %v327 = vadd.f32 %v325, %v326
  %v328 = vsel %vm286, %v243, 0.0
  %v329 = vadd.f32 %v327, %v328
  %v330 = vsel %vm286, %v244, 0.0
  %v331 = vadd.f32 %v329, %v330
  %v332 = vsel %vm286, %v245, 0.0
  %v333 = vadd.f32 %v331, %v332
  %v334 = vsel %vm286, %v246, 0.0
  %v335 = vadd.f32 %v333, %v334
  %v336 = vsel %vm286, %v247, 0.0
  %v337 = vadd.f32 %v335, %v336
  %v338 = vsel %vm286, %v248, 0.0
  %v339 = vadd.f32 %v337, %v338
  %v340 = vsel %vm286, %v249, 0.0
  %v341 = vadd.f32 %v339, %v340
  %v342 = vsel %vm286, %v250, 0.0
  %v343 = vadd.f32 %v341, %v342
  %v344 = vsel %vm286, %v251, 0.0
  %v345 = vadd.f32 %v343, %v344
  %v346 = vsel %vm286, %v252, 0.0
  %v347 = vadd.f32 %v345, %v346
  %v348 = vsel %vm286, %v253, 0.0
  %v349 = vadd.f32 %v347, %v348
  %v350 = vsel %vm286, %v254, 0.0
  %v351 = vadd.f32 %v349, %v350
  %v352 = vsel %vm286, %v255, 0.0
  %v353 = vadd.f32 %v351, %v352
  %v354 = vsel %vm286, %v256, 0.0
  %v355 = vadd.f32 %v353, %v354
  %v356 = vsel %vm286, %v257, 0.0
  %v357 = vadd.f32 %v355, %v356
  %v358 = vsel %vm286, %v258, 0.0
  %v359 = vadd.f32 %v357, %v358
  %v360 = vsel %vm286, %v259, 0.0
  %v361 = vadd.f32 %v359, %v360
  %v362 = vsel %vm286, %v260, 0.0
  %v363 = vadd.f32 %v361, %v362
  %v364 = vsel %vm286, %v261, 0.0
  %v365 = vadd.f32 %v363, %v364
  %v366 = vsel %vm286, %v262, 0.0
  %v367 = vadd.f32 %v365, %v366
  %v368 = vsel %vm286, %v263, 0.0
  %v369 = vadd.f32 %v367, %v368
  %v370 = vsel %vm286, %v264, 0.0
  %v371 = vadd.f32 %v369, %v370
  %v372 = vsel %vm286, %v265, 0.0
  %v373 = vadd.f32 %v371, %v372
  %v374 = vsel %vm286, %v266, 0.0
  %v375 = vadd.f32 %v373, %v374
  %v376 = vsel %vm286, %v267, 0.0
  %v377 = vadd.f32 %v375, %v376
  %v378 = vsel %vm286, %v268, 0.0
  %v379 = vadd.f32 %v377, %v378
  %v380 = vsel %vm286, %v269, 0.0
  %v381 = vadd.f32 %v379, %v380
  %v382 = vsel %vm286, %v270, 0.0
  %v383 = vadd.f32 %v381, %v382
  %v384 = vsel %vm286, %v271, 0.0
  %v385 = vadd.f32 %v383, %v384
  %v386 = vsel %vm286, %v272, 0.0
  %v387 = vadd.f32 %v385, %v386
  %v388 = vsel %vm286, %v273, 0.0
  %v389 = vadd.f32 %v387, %v388
  %v390 = vsel %vm286, %v274, 0.0
  %v391 = vadd.f32 %v389, %v390
  %v392 = vsel %vm286, %v275, 0.0
  %v393 = vadd.f32 %v391, %v392
  %v394 = vsel %vm286, %v276, 0.0
  %v395 = vadd.f32 %v393, %v394
  %v396 = vsel %vm286, %v277, 0.0
  %v397 = vadd.f32 %v395, %v396
  %v398 = vsel %vm286, %v278, 0.0
  %v399 = vadd.f32 %v397, %v398
  %v400 = vsel %vm286, %v279, 0.0
  %v401 = vadd.f32 %v399, %v400
  %v402 = vsel %vm286, %v280, 0.0
  %v403 = vadd.f32 %v401, %v402
  %v404 = vsel %vm286, %v281, 0.0
  %v405 = vadd.f32 %v403, %v404
  %v406 = vsel %vm286, %v282, 0.0
  %v407 = vadd.f32 %v405, %v406
  %v408 = vsel %vm286, %v283, 0.0
  %v409 = vadd.f32 %v407, %v408
  %v410 = vsel %vm286, %v284, 0.0
  %v411 = vadd.f32 %v409, %v410
  %v412 = vsel %vm286, %v285, 0.0
  %v413 = vadd.f32 %v411, %v412
  %v414 = vrot.slane %v413, 4
  %v415 = vadd.f32 %v413, %v414
  %v416 = vrot.slane %v415, 2
  %v417 = vadd.f32 %v415, %v416
  %v418 = vrot.slane %v417, 1
  %v419 = vadd.f32 %v417, %v418
  %vm420 = vcmask 24576
  %421 = vst.msk [vmem:[%s3] sm:$0x1] %vm420, %v419
  %422 = vxpose.xlu0.b32.start [1/16] %v222, 128
  %423 = vxpose.xlu0.b32.cont [2/16] %v223, 128
  %424 = vxpose.xlu0.b32.cont [3/16] %v224, 128
  %425 = vxpose.xlu0.b32.cont [4/16] %v225, 128
  %426 = vxpose.xlu0.b32.cont [5/16] %v226, 128
  %427 = vxpose.xlu0.b32.cont [6/16] %v227, 128
  %428 = vxpose.xlu0.b32.cont [7/16] %v228, 128
  %429 = vxpose.xlu0.b32.cont [8/16] %v229, 128
  %430 = vxpose.xlu0.b32.cont [9/16] %v230, 128
  %431 = vxpose.xlu0.b32.cont [10/16] %v231, 128
  %432 = vxpose.xlu0.b32.cont [11/16] %v232, 128
  %433 = vxpose.xlu0.b32.cont [12/16] %v233, 128
  %434 = vxpose.xlu0.b32.cont [13/16] %v234, 128
  %435 = vxpose.xlu0.b32.cont [14/16] %v235, 128
  %436 = vxpose.xlu0.b32.cont [15/16] %v236, 128
  %437 = vxpose.xlu0.b32.end [16/16] %v237, 128
  %v438 = vpop.trf.xlu0
  %v439 = vpop.trf.xlu0
  %v440 = vpop.trf.xlu0
  %v441 = vpop.trf.xlu0
  %v442 = vpop.trf.xlu0
  %v443 = vpop.trf.xlu0
  %v444 = vpop.trf.xlu0
  %v445 = vpop.trf.xlu0
  %v446 = vpop.trf.xlu0
  %v447 = vpop.trf.xlu0
  %v448 = vpop.trf.xlu0
  %v449 = vpop.trf.xlu0
  %v450 = vpop.trf.xlu0
  %v451 = vpop.trf.xlu0
  %v452 = vpop.trf.xlu0
  %v453 = vpop.trf.xlu0
  %454 = vxpose.xlu0.b32.start [1/16] %v238, 128
  %455 = vxpose.xlu0.b32.cont [2/16] %v239, 128
  %456 = vxpose.xlu0.b32.cont [3/16] %v240, 128
  %457 = vxpose.xlu0.b32.cont [4/16] %v241, 128
  %458 = vxpose.xlu0.b32.cont [5/16] %v242, 128
  %459 = vxpose.xlu0.b32.cont [6/16] %v243, 128
  %460 = vxpose.xlu0.b32.cont [7/16] %v244, 128
  %461 = vxpose.xlu0.b32.cont [8/16] %v245, 128
  %462 = vxpose.xlu0.b32.cont [9/16] %v246, 128
  %463 = vxpose.xlu0.b32.cont [10/16] %v247, 128
  %464 = vxpose.xlu0.b32.cont [11/16] %v248, 128
  %465 = vxpose.xlu0.b32.cont [12/16] %v249, 128
  %466 = vxpose.xlu0.b32.cont [13/16] %v250, 128
  %467 = vxpose.xlu0.b32.cont [14/16] %v251, 128
  %468 = vxpose.xlu0.b32.cont [15/16] %v252, 128
  %469 = vxpose.xlu0.b32.end [16/16] %v253, 128
  %v470 = vpop.trf.xlu0
  %v471 = vpop.trf.xlu0
  %v472 = vpop.trf.xlu0
  %v473 = vpop.trf.xlu0
  %v474 = vpop.trf.xlu0
  %v475 = vpop.trf.xlu0
  %v476 = vpop.trf.xlu0
  %v477 = vpop.trf.xlu0
  %v478 = vpop.trf.xlu0
  %v479 = vpop.trf.xlu0
  %v480 = vpop.trf.xlu0
  %v481 = vpop.trf.xlu0
  %v482 = vpop.trf.xlu0
  %v483 = vpop.trf.xlu0
  %v484 = vpop.trf.xlu0
  %v485 = vpop.trf.xlu0
  %486 = vxpose.xlu0.b32.start [1/16] %v254, 128
  %487 = vxpose.xlu0.b32.cont [2/16] %v255, 128
  %488 = vxpose.xlu0.b32.cont [3/16] %v256, 128
  %489 = vxpose.xlu0.b32.cont [4/16] %v257, 128
  %490 = vxpose.xlu0.b32.cont [5/16] %v258, 128
  %491 = vxpose.xlu0.b32.cont [6/16] %v259, 128
  %492 = vxpose.xlu0.b32.cont [7/16] %v260, 128
  %493 = vxpose.xlu0.b32.cont [8/16] %v261, 128
  %494 = vxpose.xlu0.b32.cont [9/16] %v262, 128
  %495 = vxpose.xlu0.b32.cont [10/16] %v263, 128
  %496 = vxpose.xlu0.b32.cont [11/16] %v264, 128
  %497 = vxpose.xlu0.b32.cont [12/16] %v265, 128
  %498 = vxpose.xlu0.b32.cont [13/16] %v266, 128
  %499 = vxpose.xlu0.b32.cont [14/16] %v267, 128
  %500 = vxpose.xlu0.b32.cont [15/16] %v268, 128
  %501 = vxpose.xlu0.b32.end [16/16] %v269, 128
  %v502 = vpop.trf.xlu0
  %v503 = vpop.trf.xlu0
  %v504 = vpop.trf.xlu0
  %v505 = vpop.trf.xlu0
  %v506 = vpop.trf.xlu0
  %v507 = vpop.trf.xlu0
  %v508 = vpop.trf.xlu0
  %v509 = vpop.trf.xlu0
  %v510 = vpop.trf.xlu0
  %v511 = vpop.trf.xlu0
  %v512 = vpop.trf.xlu0
  %v513 = vpop.trf.xlu0
  %v514 = vpop.trf.xlu0
  %v515 = vpop.trf.xlu0
  %v516 = vpop.trf.xlu0
  %v517 = vpop.trf.xlu0
  %518 = vxpose.xlu0.b32.start [1/16] %v270, 128
  %519 = vxpose.xlu0.b32.cont [2/16] %v271, 128
  %520 = vxpose.xlu0.b32.cont [3/16] %v272, 128
  %521 = vxpose.xlu0.b32.cont [4/16] %v273, 128
  %522 = vxpose.xlu0.b32.cont [5/16] %v274, 128
  %523 = vxpose.xlu0.b32.cont [6/16] %v275, 128
  %524 = vxpose.xlu0.b32.cont [7/16] %v276, 128
  %525 = vxpose.xlu0.b32.cont [8/16] %v277, 128
  %526 = vxpose.xlu0.b32.cont [9/16] %v278, 128
  %527 = vxpose.xlu0.b32.cont [10/16] %v279, 128
  %528 = vxpose.xlu0.b32.cont [11/16] %v280, 128
  %529 = vxpose.xlu0.b32.cont [12/16] %v281, 128
  %530 = vxpose.xlu0.b32.cont [13/16] %v282, 128
  %531 = vxpose.xlu0.b32.cont [14/16] %v283, 128
  %532 = vxpose.xlu0.b32.cont [15/16] %v284, 128
  %533 = vxpose.xlu0.b32.end [16/16] %v285, 128
  %v534 = vpop.trf.xlu0
  %v535 = vpop.trf.xlu0
  %v536 = vpop.trf.xlu0
  %v537 = vpop.trf.xlu0
  %v538 = vpop.trf.xlu0
  %v539 = vpop.trf.xlu0
  %v540 = vpop.trf.xlu0
  %v541 = vpop.trf.xlu0
  %v542 = vpop.trf.xlu0
  %v543 = vpop.trf.xlu0
  %v544 = vpop.trf.xlu0
  %v545 = vpop.trf.xlu0
  %v546 = vpop.trf.xlu0
  %v547 = vpop.trf.xlu0
  %v548 = vpop.trf.xlu0
  %v549 = vpop.trf.xlu0
  %550 = vmatprep.subr.mxu0 0.0
  %551 = vmatpush1.msra.mxu0 %v237
  %552 = vmatprep.subr.mxu0 0.0
  %553 = vmatpush1.msra.mxu0 %v236
  %554 = vmatprep.subr.mxu0 0.0
  %555 = vmatpush1.msra.mxu0 %v235
  %556 = vmatprep.subr.mxu0 0.0
  %557 = vmatpush1.msra.mxu0 %v234
  %558 = vmatprep.subr.mxu0 0.0
  %559 = vmatpush1.msra.mxu0 %v233
  %560 = vmatprep.subr.mxu0 0.0
  %561 = vmatpush1.msra.mxu0 %v232
  %562 = vmatprep.subr.mxu0 0.0
  %563 = vmatpush1.msra.mxu0 %v231
  %564 = vmatprep.subr.mxu0 0.0
  %565 = vmatpush1.msra.mxu0 %v230
  %566 = vmatprep.subr.mxu0 0.0
  %567 = vmatpush1.msra.mxu0 %v229
  %568 = vmatprep.subr.mxu0 0.0
  %569 = vmatpush1.msra.mxu0 %v228
  %570 = vmatprep.subr.mxu0 0.0
  %571 = vmatpush1.msra.mxu0 %v227
  %572 = vmatprep.subr.mxu0 0.0
  %573 = vmatpush1.msra.mxu0 %v226
  %574 = vmatprep.subr.mxu0 0.0
  %575 = vmatpush1.msra.mxu0 %v225
  %576 = vmatprep.subr.mxu0 0.0
  %577 = vmatpush1.msra.mxu0 %v224
  %578 = vmatprep.subr.mxu0 0.0
  %579 = vmatpush1.msra.mxu0 %v223
  %580 = vmatprep.subr.mxu0 0.0
  %581 = vmatpush1.msra.mxu0 %v222
  %582 = vmatprep.subr.mxu0 0.0
  %583 = vmatpush2.msra.mxu0 %v253
  %584 = vmatprep.subr.mxu0 0.0
  %585 = vmatpush2.msra.mxu0 %v252
  %586 = vmatprep.subr.mxu0 0.0
  %587 = vmatpush2.msra.mxu0 %v251
  %588 = vmatprep.subr.mxu0 0.0
  %589 = vmatpush2.msra.mxu0 %v250
  %590 = vmatprep.subr.mxu0 0.0
  %591 = vmatpush2.msra.mxu0 %v249
  %592 = vmatprep.subr.mxu0 0.0
  %593 = vmatpush2.msra.mxu0 %v248
  %594 = vmatprep.subr.mxu0 0.0
  %595 = vmatpush2.msra.mxu0 %v247
  %596 = vmatprep.subr.mxu0 0.0
  %597 = vmatpush2.msra.mxu0 %v246
  %598 = vmatprep.subr.mxu0 0.0
  %599 = vmatpush2.msra.mxu0 %v245
  %600 = vmatprep.subr.mxu0 0.0
  %601 = vmatpush2.msra.mxu0 %v244
  %602 = vmatprep.subr.mxu0 0.0
  %603 = vmatpush2.msra.mxu0 %v243
  %604 = vmatprep.subr.mxu0 0.0
  %605 = vmatpush2.msra.mxu0 %v242
  %606 = vmatprep.subr.mxu0 0.0
  %607 = vmatpush2.msra.mxu0 %v241
  %608 = vmatprep.subr.mxu0 0.0
  %609 = vmatpush2.msra.mxu0 %v240
  %610 = vmatprep.subr.mxu0 0.0
  %611 = vmatpush2.msra.mxu0 %v239
  %612 = vmatprep.subr.mxu0 0.0
  %613 = vmatpush2.msra.mxu0 %v238
  %614 = vmatprep.mubr.f32.mxu0 %v470
  %615 = vmatmul.mubr.f32.gmra.mxu0 %v438
  %v616 = vpop.f32.mrf.mxu0
  %v617 = vadd.f32 0.0, %v616
  %v618 = vpop.f32.mrf.mxu0
  %619 = vdwg.mxu0
  %620 = vmatprep.subr.mxu0 0.0
  %621 = vmatpush1.msra.mxu0 %v269
  %622 = vmatprep.subr.mxu0 0.0
  %623 = vmatpush1.msra.mxu0 %v268
  %624 = vmatprep.subr.mxu0 0.0
  %625 = vmatpush1.msra.mxu0 %v267
  %626 = vmatprep.subr.mxu0 0.0
  %627 = vmatpush1.msra.mxu0 %v266
  %628 = vmatprep.subr.mxu0 0.0
  %629 = vmatpush1.msra.mxu0 %v265
  %630 = vmatprep.subr.mxu0 0.0
  %631 = vmatpush1.msra.mxu0 %v264
  %632 = vmatprep.subr.mxu0 0.0
  %633 = vmatpush1.msra.mxu0 %v263
  %634 = vmatprep.subr.mxu0 0.0
  %635 = vmatpush1.msra.mxu0 %v262
  %636 = vmatprep.subr.mxu0 0.0
  %637 = vmatpush1.msra.mxu0 %v261
  %638 = vmatprep.subr.mxu0 0.0
  %639 = vmatpush1.msra.mxu0 %v260
  %640 = vmatprep.subr.mxu0 0.0
  %641 = vmatpush1.msra.mxu0 %v259
  %642 = vmatprep.subr.mxu0 0.0
  %643 = vmatpush1.msra.mxu0 %v258
  %644 = vmatprep.subr.mxu0 0.0
  %645 = vmatpush1.msra.mxu0 %v257
  %646 = vmatprep.subr.mxu0 0.0
  %647 = vmatpush1.msra.mxu0 %v256
  %648 = vmatprep.subr.mxu0 0.0
  %649 = vmatpush1.msra.mxu0 %v255
  %650 = vmatprep.subr.mxu0 0.0
  %651 = vmatpush1.msra.mxu0 %v254
  %652 = vmatprep.subr.mxu0 0.0
  %653 = vmatpush2.msra.mxu0 %v285
  %654 = vmatprep.subr.mxu0 0.0
  %655 = vmatpush2.msra.mxu0 %v284
  %656 = vmatprep.subr.mxu0 0.0
  %657 = vmatpush2.msra.mxu0 %v283
  %658 = vmatprep.subr.mxu0 0.0
  %659 = vmatpush2.msra.mxu0 %v282
  %660 = vmatprep.subr.mxu0 0.0
  %661 = vmatpush2.msra.mxu0 %v281
  %662 = vmatprep.subr.mxu0 0.0
  %663 = vmatpush2.msra.mxu0 %v280
  %664 = vmatprep.subr.mxu0 0.0
  %665 = vmatpush2.msra.mxu0 %v279
  %666 = vmatprep.subr.mxu0 0.0
  %667 = vmatpush2.msra.mxu0 %v278
  %668 = vmatprep.subr.mxu0 0.0
  %669 = vmatpush2.msra.mxu0 %v277
  %670 = vmatprep.subr.mxu0 0.0
  %671 = vmatpush2.msra.mxu0 %v276
  %672 = vmatprep.subr.mxu0 0.0
  %673 = vmatpush2.msra.mxu0 %v275
  %674 = vmatprep.subr.mxu0 0.0
  %675 = vmatpush2.msra.mxu0 %v274
  %676 = vmatprep.subr.mxu0 0.0
  %677 = vmatpush2.msra.mxu0 %v273
  %678 = vmatprep.subr.mxu0 0.0
  %679 = vmatpush2.msra.mxu0 %v272
  %680 = vmatprep.subr.mxu0 0.0
  %681 = vmatpush2.msra.mxu0 %v271
  %682 = vmatprep.subr.mxu0 0.0
  %683 = vmatpush2.msra.mxu0 %v270
  %684 = vmatprep.mubr.f32.mxu0 %v534
  %685 = vmatmul.mubr.f32.gmra.mxu0 %v502
  %v686 = vpop.f32.mrf.mxu0
  %v687 = vadd.f32 %v617, %v686
  %v688 = vpop.f32.mrf.mxu0
  %689 = vdwg.mxu0
  %vm690 = vcmask 27648
  %691 = vst.msk [vmem:[%s4] sm:$0xf] %vm690, %v687
  // Predicated region
  $region14: #{bottleneck_forward.6} parent=0 // pred_check
    _
  $region15: #{bottleneck_forward.6} parent=0 // pred_check_branch
    %693 = sbr.rel (0) target = $region17
  $region16: #{bottleneck_forward.6} parent=0 // pred_region
    _
  $region17: #{bottleneck_forward.6} parent=0 // pred_fallthru
    _
  // Predicated region
  $region18: #{bottleneck_forward.6} parent=0 // pred_check
    _
  $region19: #{bottleneck_forward.6} parent=0 // pred_check_branch
    %695 = sbr.rel (0) target = $region21
  $region20: #{bottleneck_forward.6} parent=0 // pred_region
    _
  $region21: #{bottleneck_forward.6} parent=0 // pred_fallthru
    _
  // Predicated region
  $region22: #{bottleneck_forward.6} parent=0 // pred_check
    _
  $region23: #{bottleneck_forward.6} parent=0 // pred_check_branch
    %697 = sbr.rel (0) target = $region25
  $region24: #{bottleneck_forward.6} parent=0 // pred_region
    _
  $region25: #{bottleneck_forward.6} parent=0 // pred_fallthru
    _
  // Predicated region
  $region26: #{bottleneck_forward.6} parent=0 // pred_check
    _
  $region27: #{bottleneck_forward.6} parent=0 // pred_check_branch
    %699 = sbr.rel (0) target = $region29
  $region28: #{bottleneck_forward.6} parent=0 // pred_region
    _
  $region29: #{bottleneck_forward.6} parent=0 // pred_fallthru
    _

// kernel: bottleneck_forward.7
$region0: #{bottleneck_forward.7}
  #allocation0 [shape = 'u32[]', space=smem, size = 0x4, offset = 0x4, fixed_abs, tag = 'smem constant byte address 0x4 - core index']
  #allocation1 [shape = 'u32[144,128]{1,0:T(1,128)}', space=vmem, size = 0x12000, scoped, tag = 'internal scratch']
  %s0 = inlined_call_operand.vmem [shape: f32[512,4], index: 0, kind: input, shape index: {}]
  %s1 = inlined_call_operand.vmem [shape: f32[1,4], index: 1, kind: input, shape index: {}]
  %s2 = inlined_call_operand.vmem [shape: f32[1,4], index: 2, kind: input, shape index: {}]
  %s3 = inlined_call_operand.vmem [shape: f32[4,16], index: 3, kind: input, shape index: {}]
  %s4 = inlined_call_operand.vmem [shape: f32[1,16], index: 4, kind: input, shape index: {}]
  %s5 = inlined_call_operand.vmem [shape: f32[512,16], index: 5, kind: input, shape index: {}]
  %s6 = inlined_call_operand.vmem [shape: f32[1,16], index: 6, kind: input, shape index: {}]
  %s7 = inlined_call_operand.vmem [shape: f32[1,16], index: 7, kind: input, shape index: {}]
  %s8 = inlined_call_operand.vmem [shape: f32[512,16], index: 8, kind: output, shape index: {}]
  %s9 = sld [smem:[#allocation0]]
  $region42: #{bottleneck_forward.7} parent=0
    _
  %s11 = ssub.s32 1, %s9
  %s12 = scalar_select 0, %s11, %s9
  // Predicated region
  $region2: #{bottleneck_forward.7} parent=0 // pred_check
    _
  $region3: #{bottleneck_forward.7} parent=0 // pred_check_branch
    %14 = sbr.rel (0) target = $region5
  $region4: #{bottleneck_forward.7} parent=0 // pred_region
    _
  $region5: #{bottleneck_forward.7} parent=0 // pred_fallthru
    _
  // Predicated region
  $region6: #{bottleneck_forward.7} parent=0 // pred_check
    _
  $region7: #{bottleneck_forward.7} parent=0 // pred_check_branch
    %16 = sbr.rel (0) target = $region9
  $region8: #{bottleneck_forward.7} parent=0 // pred_region
    _
  $region9: #{bottleneck_forward.7} parent=0 // pred_fallthru
    _
  // Predicated region
  $region10: #{bottleneck_forward.7} parent=0 // pred_check
    _
  $region11: #{bottleneck_forward.7} parent=0 // pred_check_branch
    %18 = sbr.rel (0) target = $region13
  $region12: #{bottleneck_forward.7} parent=0 // pred_region
    _
  $region13: #{bottleneck_forward.7} parent=0 // pred_fallthru
    _
  // Predicated region
  $region14: #{bottleneck_forward.7} parent=0 // pred_check
    _
  $region15: #{bottleneck_forward.7} parent=0 // pred_check_branch
    %20 = sbr.rel (0) target = $region17
  $region16: #{bottleneck_forward.7} parent=0 // pred_region
    _
  $region17: #{bottleneck_forward.7} parent=0 // pred_fallthru
    _
  // Predicated region
  $region18: #{bottleneck_forward.7} parent=0 // pred_check
    _
  $region19: #{bottleneck_forward.7} parent=0 // pred_check_branch
    %22 = sbr.rel (0) target = $region21
  $region20: #{bottleneck_forward.7} parent=0 // pred_region
    _
  $region21: #{bottleneck_forward.7} parent=0 // pred_fallthru
    _
  // Predicated region
  $region22: #{bottleneck_forward.7} parent=0 // pred_check
    _
  $region23: #{bottleneck_forward.7} parent=0 // pred_check_branch
    %24 = sbr.rel (0) target = $region25
  $region24: #{bottleneck_forward.7} parent=0 // pred_region
    _
  $region25: #{bottleneck_forward.7} parent=0 // pred_fallthru
    _
  // Predicated region
  $region26: #{bottleneck_forward.7} parent=0 // pred_check
    _
  $region27: #{bottleneck_forward.7} parent=0 // pred_check_branch
    %26 = sbr.rel (0) target = $region29
  $region28: #{bottleneck_forward.7} parent=0 // pred_region
    _
  $region29: #{bottleneck_forward.7} parent=0 // pred_fallthru
    _
  // Predicated region
  $region30: #{bottleneck_forward.7} parent=0 // pred_check
    _
  $region31: #{bottleneck_forward.7} parent=0 // pred_check_branch
    %28 = sbr.rel (0) target = $region33
  $region32: #{bottleneck_forward.7} parent=0 // pred_region
    _
  $region33: #{bottleneck_forward.7} parent=0 // pred_fallthru
    _
  %v29 = vld [vmem:[%s0] sm:$0xff]
  %v30 = vld [vmem:[%s0 + $0x8] sm:$0xff]
  %v31 = vld [vmem:[%s0 + $0x10] sm:$0xff]
  %v32 = vld [vmem:[%s0 + $0x18] sm:$0xff]
  %v33 = vld [vmem:[%s0 + $0x20] sm:$0xff]
  %v34 = vld [vmem:[%s0 + $0x28] sm:$0xff]
  %v35 = vld [vmem:[%s0 + $0x30] sm:$0xff]
  %v36 = vld [vmem:[%s0 + $0x38] sm:$0xff]
  %v37 = vld [vmem:[%s0 + $0x40] sm:$0xff]
  %v38 = vld [vmem:[%s0 + $0x48] sm:$0xff]
  %v39 = vld [vmem:[%s0 + $0x50] sm:$0xff]
  %v40 = vld [vmem:[%s0 + $0x58] sm:$0xff]
  %v41 = vld [vmem:[%s0 + $0x60] sm:$0xff]
  %v42 = vld [vmem:[%s0 + $0x68] sm:$0xff]
  %v43 = vld [vmem:[%s0 + $0x70] sm:$0xff]
  %v44 = vld [vmem:[%s0 + $0x78] sm:$0xff]
  %v45 = vld [vmem:[%s0 + $0x80] sm:$0xff]
  %v46 = vld [vmem:[%s0 + $0x88] sm:$0xff]
  %v47 = vld [vmem:[%s0 + $0x90] sm:$0xff]
  %v48 = vld [vmem:[%s0 + $0x98] sm:$0xff]
  %v49 = vld [vmem:[%s0 + $0xa0] sm:$0xff]
  %v50 = vld [vmem:[%s0 + $0xa8] sm:$0xff]
  %v51 = vld [vmem:[%s0 + $0xb0] sm:$0xff]
  %v52 = vld [vmem:[%s0 + $0xb8] sm:$0xff]
  %v53 = vld [vmem:[%s0 + $0xc0] sm:$0xff]
  %v54 = vld [vmem:[%s0 + $0xc8] sm:$0xff]
  %v55 = vld [vmem:[%s0 + $0xd0] sm:$0xff]
  %v56 = vld [vmem:[%s0 + $0xd8] sm:$0xff]
  %v57 = vld [vmem:[%s0 + $0xe0] sm:$0xff]
  %v58 = vld [vmem:[%s0 + $0xe8] sm:$0xff]
  %v59 = vld [vmem:[%s0 + $0xf0] sm:$0xff]
  %v60 = vld [vmem:[%s0 + $0xf8] sm:$0xff]
  %v61 = vld [vmem:[%s0 + $0x100] sm:$0xff]
  %v62 = vld [vmem:[%s0 + $0x108] sm:$0xff]
  %v63 = vld [vmem:[%s0 + $0x110] sm:$0xff]
  %v64 = vld [vmem:[%s0 + $0x118] sm:$0xff]
  %v65 = vld [vmem:[%s0 + $0x120] sm:$0xff]
  %v66 = vld [vmem:[%s0 + $0x128] sm:$0xff]
  %v67 = vld [vmem:[%s0 + $0x130] sm:$0xff]
  %v68 = vld [vmem:[%s0 + $0x138] sm:$0xff]
  %v69 = vld [vmem:[%s0 + $0x140] sm:$0xff]
  %v70 = vld [vmem:[%s0 + $0x148] sm:$0xff]
  %v71 = vld [vmem:[%s0 + $0x150] sm:$0xff]
  %v72 = vld [vmem:[%s0 + $0x158] sm:$0xff]
  %v73 = vld [vmem:[%s0 + $0x160] sm:$0xff]
  %v74 = vld [vmem:[%s0 + $0x168] sm:$0xff]
  %v75 = vld [vmem:[%s0 + $0x170] sm:$0xff]
  %v76 = vld [vmem:[%s0 + $0x178] sm:$0xff]
  %v77 = vld [vmem:[%s0 + $0x180] sm:$0xff]
  %v78 = vld [vmem:[%s0 + $0x188] sm:$0xff]
  %v79 = vld [vmem:[%s0 + $0x190] sm:$0xff]
  %v80 = vld [vmem:[%s0 + $0x198] sm:$0xff]
  %v81 = vld [vmem:[%s0 + $0x1a0] sm:$0xff]
  %v82 = vld [vmem:[%s0 + $0x1a8] sm:$0xff]
  %v83 = vld [vmem:[%s0 + $0x1b0] sm:$0xff]
  %v84 = vld [vmem:[%s0 + $0x1b8] sm:$0xff]
  %v85 = vld [vmem:[%s0 + $0x1c0] sm:$0xff]
  %v86 = vld [vmem:[%s0 + $0x1c8] sm:$0xff]
  %v87 = vld [vmem:[%s0 + $0x1d0] sm:$0xff]
  %v88 = vld [vmem:[%s0 + $0x1d8] sm:$0xff]
  %v89 = vld [vmem:[%s0 + $0x1e0] sm:$0xff]
  %v90 = vld [vmem:[%s0 + $0x1e8] sm:$0xff]
  %v91 = vld [vmem:[%s0 + $0x1f0] sm:$0xff]
  %v92 = vld [vmem:[%s0 + $0x1f8] sm:$0xff]
  %v93 = vld [vmem:[%s1] sm:$0x1]
  %v95 = vlaneseq
  %v96 = vshrl.u32 %v95, 7
  %v97 = vsub.s32 0, %v96
  %v98 = vrot.slane %v93, %v97
  %v100 = vmul.f32 %v29, %v98
  %v101 = vmul.f32 %v30, %v98
  %v102 = vmul.f32 %v31, %v98
  %v103 = vmul.f32 %v32, %v98
  %v104 = vmul.f32 %v33, %v98
  %v105 = vmul.f32 %v34, %v98
  %v106 = vmul.f32 %v35, %v98
  %v107 = vmul.f32 %v36, %v98
  %v108 = vmul.f32 %v37, %v98
  %v109 = vmul.f32 %v38, %v98
  %v110 = vmul.f32 %v39, %v98
  %v111 = vmul.f32 %v40, %v98
  %v112 = vmul.f32 %v41, %v98
  %v113 = vmul.f32 %v42, %v98
  %v114 = vmul.f32 %v43, %v98
  %v115 = vmul.f32 %v44, %v98
  %v116 = vmul.f32 %v45, %v98
  %v117 = vmul.f32 %v46, %v98
  %v118 = vmul.f32 %v47, %v98
  %v119 = vmul.f32 %v48, %v98
  %v120 = vmul.f32 %v49, %v98
  %v121 = vmul.f32 %v50, %v98
  %v122 = vmul.f32 %v51, %v98
  %v123 = vmul.f32 %v52, %v98
  %v124 = vmul.f32 %v53, %v98
  %v125 = vmul.f32 %v54, %v98
  %v126 = vmul.f32 %v55, %v98
  %v127 = vmul.f32 %v56, %v98
  %v128 = vmul.f32 %v57, %v98
  %v129 = vmul.f32 %v58, %v98
  %v130 = vmul.f32 %v59, %v98
  %v131 = vmul.f32 %v60, %v98
  %v132 = vmul.f32 %v61, %v98
  %v133 = vmul.f32 %v62, %v98
  %v134 = vmul.f32 %v63, %v98
  %v135 = vmul.f32 %v64, %v98
  %v136 = vmul.f32 %v65, %v98
  %v137 = vmul.f32 %v66, %v98
  %v138 = vmul.f32 %v67, %v98
  %v139 = vmul.f32 %v68, %v98
  %v140 = vmul.f32 %v69, %v98
  %v141 = vmul.f32 %v70, %v98
  %v142 = vmul.f32 %v71, %v98
  %v143 = vmul.f32 %v72, %v98
  %v144 = vmul.f32 %v73, %v98
  %v145 = vmul.f32 %v74, %v98
  %v146 = vmul.f32 %v75, %v98
  %v147 = vmul.f32 %v76, %v98
  %v148 = vmul.f32 %v77, %v98
  %v149 = vmul.f32 %v78, %v98
  %v150 = vmul.f32 %v79, %v98
  %v151 = vmul.f32 %v80, %v98
  %v152 = vmul.f32 %v81, %v98
  %v153 = vmul.f32 %v82, %v98
  %v154 = vmul.f32 %v83, %v98
  %v155 = vmul.f32 %v84, %v98
  %v156 = vmul.f32 %v85, %v98
  %v157 = vmul.f32 %v86, %v98
  %v158 = vmul.f32 %v87, %v98
  %v159 = vmul.f32 %v88, %v98
  %v160 = vmul.f32 %v89, %v98
  %v161 = vmul.f32 %v90, %v98
  %v162 = vmul.f32 %v91, %v98
  %v163 = vmul.f32 %v92, %v98
  %v164 = vld [vmem:[%s2] sm:$0x1]
  %v166 = vlaneseq
  %v167 = vshrl.u32 %v166, 7
  %v168 = vsub.s32 0, %v167
  %v169 = vrot.slane %v164, %v168
  %v171 = vadd.f32 %v100, %v169
  %v172 = vadd.f32 %v101, %v169
  %v173 = vadd.f32 %v102, %v169
  %v174 = vadd.f32 %v103, %v169
  %v175 = vadd.f32 %v104, %v169
  %v176 = vadd.f32 %v105, %v169
  %v177 = vadd.f32 %v106, %v169
  %v178 = vadd.f32 %v107, %v169
  %v179 = vadd.f32 %v108, %v169
  %v180 = vadd.f32 %v109, %v169
  %v181 = vadd.f32 %v110, %v169
  %v182 = vadd.f32 %v111, %v169
  %v183 = vadd.f32 %v112, %v169
  %v184 = vadd.f32 %v113, %v169
  %v185 = vadd.f32 %v114, %v169
  %v186 = vadd.f32 %v115, %v169
  %v187 = vadd.f32 %v116, %v169
  %v188 = vadd.f32 %v117, %v169
  %v189 = vadd.f32 %v118, %v169
  %v190 = vadd.f32 %v119, %v169
  %v191 = vadd.f32 %v120, %v169
  %v192 = vadd.f32 %v121, %v169
  %v193 = vadd.f32 %v122, %v169
  %v194 = vadd.f32 %v123, %v169
  %v195 = vadd.f32 %v124, %v169
  %v196 = vadd.f32 %v125, %v169
  %v197 = vadd.f32 %v126, %v169
  %v198 = vadd.f32 %v127, %v169
  %v199 = vadd.f32 %v128, %v169
  %v200 = vadd.f32 %v129, %v169
  %v201 = vadd.f32 %v130, %v169
  %v202 = vadd.f32 %v131, %v169
  %v203 = vadd.f32 %v132, %v169
  %v204 = vadd.f32 %v133, %v169
  %v205 = vadd.f32 %v134, %v169
  %v206 = vadd.f32 %v135, %v169
  %v207 = vadd.f32 %v136, %v169
  %v208 = vadd.f32 %v137, %v169
  %v209 = vadd.f32 %v138, %v169
  %v210 = vadd.f32 %v139, %v169
  %v211 = vadd.f32 %v140, %v169
  %v212 = vadd.f32 %v141, %v169
  %v213 = vadd.f32 %v142, %v169
  %v214 = vadd.f32 %v143, %v169
  %v215 = vadd.f32 %v144, %v169
  %v216 = vadd.f32 %v145, %v169
  %v217 = vadd.f32 %v146, %v169
  %v218 = vadd.f32 %v147, %v169
  %v219 = vadd.f32 %v148, %v169
  %v220 = vadd.f32 %v149, %v169
  %v221 = vadd.f32 %v150, %v169
  %v222 = vadd.f32 %v151, %v169
  %v223 = vadd.f32 %v152, %v169
  %v224 = vadd.f32 %v153, %v169
  %v225 = vadd.f32 %v154, %v169
  %v226 = vadd.f32 %v155, %v169
  %v227 = vadd.f32 %v156, %v169
  %v228 = vadd.f32 %v157, %v169
  %v229 = vadd.f32 %v158, %v169
  %v230 = vadd.f32 %v159, %v169
  %v231 = vadd.f32 %v160, %v169
  %v232 = vadd.f32 %v161, %v169
  %v233 = vadd.f32 %v162, %v169
  %v234 = vadd.f32 %v163, %v169
  %v235 = vmax.f32 %v171, 0.0
  %v236 = vmax.f32 %v172, 0.0
  %v237 = vmax.f32 %v173, 0.0
  %v238 = vmax.f32 %v174, 0.0
  %v239 = vmax.f32 %v175, 0.0
  %v240 = vmax.f32 %v176, 0.0
  %v241 = vmax.f32 %v177, 0.0
  %v242 = vmax.f32 %v178, 0.0
  %v243 = vmax.f32 %v179, 0.0
  %v244 = vmax.f32 %v180, 0.0
  %v245 = vmax.f32 %v181, 0.0
  %v246 = vmax.f32 %v182, 0.0
  %v247 = vmax.f32 %v183, 0.0
  %v248 = vmax.f32 %v184, 0.0
  %v249 = vmax.f32 %v185, 0.0
  %v250 = vmax.f32 %v186, 0.0
  %v251 = vmax.f32 %v187, 0.0
  %v252 = vmax.f32 %v188, 0.0
  %v253 = vmax.f32 %v189, 0.0
  %v254 = vmax.f32 %v190, 0.0
  %v255 = vmax.f32 %v191, 0.0
  %v256 = vmax.f32 %v192, 0.0
  %v257 = vmax.f32 %v193, 0.0
  %v258 = vmax.f32 %v194, 0.0
  %v259 = vmax.f32 %v195, 0.0
  %v260 = vmax.f32 %v196, 0.0
  %v261 = vmax.f32 %v197, 0.0
  %v262 = vmax.f32 %v198, 0.0
  %v263 = vmax.f32 %v199, 0.0
  %v264 = vmax.f32 %v200, 0.0
  %v265 = vmax.f32 %v201, 0.0
  %v266 = vmax.f32 %v202, 0.0
  %v267 = vmax.f32 %v203, 0.0
  %v268 = vmax.f32 %v204, 0.0
  %v269 = vmax.f32 %v205, 0.0
  %v270 = vmax.f32 %v206, 0.0
  %v271 = vmax.f32 %v207, 0.0
  %v272 = vmax.f32 %v208, 0.0
  %v273 = vmax.f32 %v209, 0.0
  %v274 = vmax.f32 %v210, 0.0
  %v275 = vmax.f32 %v211, 0.0
  %v276 = vmax.f32 %v212, 0.0
  %v277 = vmax.f32 %v213, 0.0
  %v278 = vmax.f32 %v214, 0.0
  %v279 = vmax.f32 %v215, 0.0
  %v280 = vmax.f32 %v216, 0.0
  %v281 = vmax.f32 %v217, 0.0
  %v282 = vmax.f32 %v218, 0.0
  %v283 = vmax.f32 %v219, 0.0
  %v284 = vmax.f32 %v220, 0.0
  %v285 = vmax.f32 %v221, 0.0
  %v286 = vmax.f32 %v222, 0.0
  %v287 = vmax.f32 %v223, 0.0
  %v288 = vmax.f32 %v224, 0.0
  %v289 = vmax.f32 %v225, 0.0
  %v290 = vmax.f32 %v226, 0.0
  %v291 = vmax.f32 %v227, 0.0
  %v292 = vmax.f32 %v228, 0.0
  %v293 = vmax.f32 %v229, 0.0
  %v294 = vmax.f32 %v230, 0.0
  %v295 = vmax.f32 %v231, 0.0
  %v296 = vmax.f32 %v232, 0.0
  %v297 = vmax.f32 %v233, 0.0
  %v298 = vmax.f32 %v234, 0.0
  %v299 = vld [vmem:[%s3] sm:$0xf]
  %v300 = vld [vmem:[%s4] sm:$0x1]
  %v302 = vlaneseq
  %v303 = vshrl.u32 %v302, 7
  %v304 = vsub.s32 0, %v303
  %v305 = vrot.slane %v300, %v304
  %vm307 = vcmask 31744
  %v309 = vsel %vm307, %v235, 0
  %v312 = vsel %vm307, %v236, 0
  %v315 = vsel %vm307, %v237, 0
  %v318 = vsel %vm307, %v238, 0
  %v321 = vsel %vm307, %v239, 0
  %v324 = vsel %vm307, %v240, 0
  %v327 = vsel %vm307, %v241, 0
  %v330 = vsel %vm307, %v242, 0
  %v333 = vsel %vm307, %v243, 0
  %v336 = vsel %vm307, %v244, 0
  %v339 = vsel %vm307, %v245, 0
  %v342 = vsel %vm307, %v246, 0
  %v345 = vsel %vm307, %v247, 0
  %v348 = vsel %vm307, %v248, 0
  %v351 = vsel %vm307, %v249, 0
  %v354 = vsel %vm307, %v250, 0
  %v357 = vsel %vm307, %v251, 0
  %v360 = vsel %vm307, %v252, 0
  %v363 = vsel %vm307, %v253, 0
  %v366 = vsel %vm307, %v254, 0
  %v369 = vsel %vm307, %v255, 0
  %v372 = vsel %vm307, %v256, 0
  %v375 = vsel %vm307, %v257, 0
  %v378 = vsel %vm307, %v258, 0
  %v381 = vsel %vm307, %v259, 0
  %v384 = vsel %vm307, %v260, 0
  %v387 = vsel %vm307, %v261, 0
  %v390 = vsel %vm307, %v262, 0
  %v393 = vsel %vm307, %v263, 0
  %v396 = vsel %vm307, %v264, 0
  %v399 = vsel %vm307, %v265, 0
  %v402 = vsel %vm307, %v266, 0
  %v405 = vsel %vm307, %v267, 0
  %v408 = vsel %vm307, %v268, 0
  %v411 = vsel %vm307, %v269, 0
  %v414 = vsel %vm307, %v270, 0
  %v417 = vsel %vm307, %v271, 0
  %v420 = vsel %vm307, %v272, 0
  %v423 = vsel %vm307, %v273, 0
  %v426 = vsel %vm307, %v274, 0
  %v429 = vsel %vm307, %v275, 0
  %v432 = vsel %vm307, %v276, 0
  %v435 = vsel %vm307, %v277, 0
  %v438 = vsel %vm307, %v278, 0
  %v441 = vsel %vm307, %v279, 0
  %v444 = vsel %vm307, %v280, 0
  %v447 = vsel %vm307, %v281, 0
  %v450 = vsel %vm307, %v282, 0
  %v453 = vsel %vm307, %v283, 0
  %v456 = vsel %vm307, %v284, 0
  %v459 = vsel %vm307, %v285, 0
  %v462 = vsel %vm307, %v286, 0
  %v465 = vsel %vm307, %v287, 0
  %v468 = vsel %vm307, %v288, 0
  %v471 = vsel %vm307, %v289, 0
  %v474 = vsel %vm307, %v290, 0
  %v477 = vsel %vm307, %v291, 0
  %v480 = vsel %vm307, %v292, 0
  %v483 = vsel %vm307, %v293, 0
  %v486 = vsel %vm307, %v294, 0
  %v489 = vsel %vm307, %v295, 0
  %v492 = vsel %vm307, %v296, 0
  %v495 = vsel %vm307, %v297, 0
  %v498 = vsel %vm307, %v298, 0
  %vm500 = vcmask 1043456
  %v502 = vsel %vm500, %v299, 0
  %504 = vmatprep.subr.mxu0 0.0
  %505 = vmatpush1.msra.mxu0 0.0
  %506 = vmatprep.subr.mxu0 0.0
  %507 = vmatpush1.msra.mxu0 0.0
  %508 = vmatprep.subr.mxu0 0.0
  %509 = vmatpush1.msra.mxu0 0.0
  %510 = vmatprep.subr.mxu0 0.0
  %511 = vmatpush1.msra.mxu0 0.0
  %512 = vmatprep.subr.mxu0 0.0
  %513 = vmatpush1.msra.mxu0 0.0
  %514 = vmatprep.subr.mxu0 0.0
  %515 = vmatpush1.msra.mxu0 0.0
  %516 = vmatprep.subr.mxu0 0.0
  %517 = vmatpush1.msra.mxu0 0.0
  %518 = vmatprep.subr.mxu0 0.0
  %519 = vmatpush1.msra.mxu0 0.0
  %520 = vmatprep.subr.mxu0 0.0
  %521 = vmatpush1.msra.mxu0 0.0
  %522 = vmatprep.subr.mxu0 0.0
  %523 = vmatpush1.msra.mxu0 0.0
  %524 = vmatprep.subr.mxu0 0.0
  %525 = vmatpush1.msra.mxu0 0.0
  %526 = vmatprep.subr.mxu0 0.0
  %527 = vmatpush1.msra.mxu0 0.0
  %528 = vmatprep.subr.mxu0 0.0
  %529 = vmatpush1.msra.mxu0 0.0
  %530 = vmatprep.subr.mxu0 0.0
  %531 = vmatpush1.msra.mxu0 0.0
  %532 = vmatprep.subr.mxu0 0.0
  %533 = vmatpush1.msra.mxu0 0.0
  %534 = vmatprep.subr.mxu0 0.0
  %535 = vmatpush1.msra.mxu0 %v502
  %536 = vmatprep.subr.mxu0 0.0
  %537 = vmatpush2.msra.mxu0 0.0
  %538 = vmatprep.subr.mxu0 0.0
  %539 = vmatpush2.msra.mxu0 0.0
  %540 = vmatprep.subr.mxu0 0.0
  %541 = vmatpush2.msra.mxu0 0.0
  %542 = vmatprep.subr.mxu0 0.0
  %543 = vmatpush2.msra.mxu0 0.0
  %544 = vmatprep.subr.mxu0 0.0
  %545 = vmatpush2.msra.mxu0 0.0
  %546 = vmatprep.subr.mxu0 0.0
  %547 = vmatpush2.msra.mxu0 0.0
  %548 = vmatprep.subr.mxu0 0.0
  %549 = vmatpush2.msra.mxu0 0.0
  %550 = vmatprep.subr.mxu0 0.0
  %551 = vmatpush2.msra.mxu0 0.0
  %552 = vmatprep.subr.mxu0 0.0
  %553 = vmatpush2.msra.mxu0 0.0
  %554 = vmatprep.subr.mxu0 0.0
  %555 = vmatpush2.msra.mxu0 0.0
  %556 = vmatprep.subr.mxu0 0.0
  %557 = vmatpush2.msra.mxu0 0.0
  %558 = vmatprep.subr.mxu0 0.0
  %559 = vmatpush2.msra.mxu0 0.0
  %560 = vmatprep.subr.mxu0 0.0
  %561 = vmatpush2.msra.mxu0 0.0
  %562 = vmatprep.subr.mxu0 0.0
  %563 = vmatpush2.msra.mxu0 0.0
  %564 = vmatprep.subr.mxu0 0.0
  %565 = vmatpush2.msra.mxu0 0.0
  %566 = vmatprep.subr.mxu0 0.0
  %567 = vmatpush2.msra.mxu0 0.0
  %568 = vmatprep.mubr.f32.mxu0 0.0
  %569 = vmatmul.mubr.f32.gmra.mxu0 %v309
  %v570 = vpop.f32.mrf.mxu0
  %v571 = vadd.f32 %v305, %v570
  %v572 = vpop.f32.mrf.mxu0
  %573 = vmatprep.mubr.f32.mxu0 0.0
  %574 = vmatmul.mubr.f32.gmra.mxu0 %v312
  %v575 = vpop.f32.mrf.mxu0
  %v576 = vadd.f32 %v305, %v575
  %v577 = vpop.f32.mrf.mxu0
  %578 = vmatprep.mubr.f32.mxu0 0.0
  %579 = vmatmul.mubr.f32.gmra.mxu0 %v315
  %v580 = vpop.f32.mrf.mxu0
  %v581 = vadd.f32 %v305, %v580
  %v582 = vpop.f32.mrf.mxu0
  %583 = vmatprep.mubr.f32.mxu0 0.0
  %584 = vmatmul.mubr.f32.gmra.mxu0 %v318
  %v585 = vpop.f32.mrf.mxu0
  %v586 = vadd.f32 %v305, %v585
  %v587 = vpop.f32.mrf.mxu0
  %588 = vmatprep.mubr.f32.mxu0 0.0
  %589 = vmatmul.mubr.f32.gmra.mxu0 %v321
  %v590 = vpop.f32.mrf.mxu0
  %v591 = vadd.f32 %v305, %v590
  %v592 = vpop.f32.mrf.mxu0
  %593 = vmatprep.mubr.f32.mxu0 0.0
  %594 = vmatmul.mubr.f32.gmra.mxu0 %v324
  %v595 = vpop.f32.mrf.mxu0
  %v596 = vadd.f32 %v305, %v595
  %v597 = vpop.f32.mrf.mxu0
  %598 = vmatprep.mubr.f32.mxu0 0.0
  %599 = vmatmul.mubr.f32.gmra.mxu0 %v327
  %v600 = vpop.f32.mrf.mxu0
  %v601 = vadd.f32 %v305, %v600
  %v602 = vpop.f32.mrf.mxu0
  %603 = vmatprep.mubr.f32.mxu0 0.0
  %604 = vmatmul.mubr.f32.gmra.mxu0 %v330
  %v605 = vpop.f32.mrf.mxu0
  %v606 = vadd.f32 %v305, %v605
  %v607 = vpop.f32.mrf.mxu0
  %608 = vmatprep.mubr.f32.mxu0 0.0
  %609 = vmatmul.mubr.f32.gmra.mxu0 %v333
  %v610 = vpop.f32.mrf.mxu0
  %v611 = vadd.f32 %v305, %v610
  %v612 = vpop.f32.mrf.mxu0
  %613 = vmatprep.mubr.f32.mxu0 0.0
  %614 = vmatmul.mubr.f32.gmra.mxu0 %v336
  %v615 = vpop.f32.mrf.mxu0
  %v616 = vadd.f32 %v305, %v615
  %v617 = vpop.f32.mrf.mxu0
  %618 = vmatprep.mubr.f32.mxu0 0.0
  %619 = vmatmul.mubr.f32.gmra.mxu0 %v339
  %v620 = vpop.f32.mrf.mxu0
  %v621 = vadd.f32 %v305, %v620
  %v622 = vpop.f32.mrf.mxu0
  %623 = vmatprep.mubr.f32.mxu0 0.0
  %624 = vmatmul.mubr.f32.gmra.mxu0 %v342
  %v625 = vpop.f32.mrf.mxu0
  %v626 = vadd.f32 %v305, %v625
  %v627 = vpop.f32.mrf.mxu0
  %628 = vmatprep.mubr.f32.mxu0 0.0
  %629 = vmatmul.mubr.f32.gmra.mxu0 %v345
  %v630 = vpop.f32.mrf.mxu0
  %v631 = vadd.f32 %v305, %v630
  %v632 = vpop.f32.mrf.mxu0
  %633 = vmatprep.mubr.f32.mxu0 0.0
  %634 = vmatmul.mubr.f32.gmra.mxu0 %v348
  %v635 = vpop.f32.mrf.mxu0
  %v636 = vadd.f32 %v305, %v635
  %v637 = vpop.f32.mrf.mxu0
  %638 = vmatprep.mubr.f32.mxu0 0.0
  %639 = vmatmul.mubr.f32.gmra.mxu0 %v351
  %v640 = vpop.f32.mrf.mxu0
  %v641 = vadd.f32 %v305, %v640
  %v642 = vpop.f32.mrf.mxu0
  %643 = vmatprep.mubr.f32.mxu0 0.0
  %644 = vmatmul.mubr.f32.gmra.mxu0 %v354
  %v645 = vpop.f32.mrf.mxu0
  %v646 = vadd.f32 %v305, %v645
  %v647 = vpop.f32.mrf.mxu0
  %648 = vmatprep.mubr.f32.mxu0 0.0
  %649 = vmatmul.mubr.f32.gmra.mxu0 %v357
  %v650 = vpop.f32.mrf.mxu0
  %v651 = vadd.f32 %v305, %v650
  %v652 = vpop.f32.mrf.mxu0
  %653 = vmatprep.mubr.f32.mxu0 0.0
  %654 = vmatmul.mubr.f32.gmra.mxu0 %v360
  %v655 = vpop.f32.mrf.mxu0
  %v656 = vadd.f32 %v305, %v655
  %v657 = vpop.f32.mrf.mxu0
  %658 = vmatprep.mubr.f32.mxu0 0.0
  %659 = vmatmul.mubr.f32.gmra.mxu0 %v363
  %v660 = vpop.f32.mrf.mxu0
  %v661 = vadd.f32 %v305, %v660
  %v662 = vpop.f32.mrf.mxu0
  %663 = vmatprep.mubr.f32.mxu0 0.0
  %664 = vmatmul.mubr.f32.gmra.mxu0 %v366
  %v665 = vpop.f32.mrf.mxu0
  %v666 = vadd.f32 %v305, %v665
  %v667 = vpop.f32.mrf.mxu0
  %668 = vmatprep.mubr.f32.mxu0 0.0
  %669 = vmatmul.mubr.f32.gmra.mxu0 %v369
  %v670 = vpop.f32.mrf.mxu0
  %v671 = vadd.f32 %v305, %v670
  %v672 = vpop.f32.mrf.mxu0
  %673 = vmatprep.mubr.f32.mxu0 0.0
  %674 = vmatmul.mubr.f32.gmra.mxu0 %v372
  %v675 = vpop.f32.mrf.mxu0
  %v676 = vadd.f32 %v305, %v675
  %v677 = vpop.f32.mrf.mxu0
  %678 = vmatprep.mubr.f32.mxu0 0.0
  %679 = vmatmul.mubr.f32.gmra.mxu0 %v375
  %v680 = vpop.f32.mrf.mxu0
  %v681 = vadd.f32 %v305, %v680
  %v682 = vpop.f32.mrf.mxu0
  %683 = vmatprep.mubr.f32.mxu0 0.0
  %684 = vmatmul.mubr.f32.gmra.mxu0 %v378
  %v685 = vpop.f32.mrf.mxu0
  %v686 = vadd.f32 %v305, %v685
  %v687 = vpop.f32.mrf.mxu0
  %688 = vmatprep.mubr.f32.mxu0 0.0
  %689 = vmatmul.mubr.f32.gmra.mxu0 %v381
  %v690 = vpop.f32.mrf.mxu0
  %v691 = vadd.f32 %v305, %v690
  %v692 = vpop.f32.mrf.mxu0
  %693 = vmatprep.mubr.f32.mxu0 0.0
  %694 = vmatmul.mubr.f32.gmra.mxu0 %v384
  %v695 = vpop.f32.mrf.mxu0
  %v696 = vadd.f32 %v305, %v695
  %v697 = vpop.f32.mrf.mxu0
  %698 = vmatprep.mubr.f32.mxu0 0.0
  %699 = vmatmul.mubr.f32.gmra.mxu0 %v387
  %v700 = vpop.f32.mrf.mxu0
  %v701 = vadd.f32 %v305, %v700
  %v702 = vpop.f32.mrf.mxu0
  %703 = vmatprep.mubr.f32.mxu0 0.0
  %704 = vmatmul.mubr.f32.gmra.mxu0 %v390
  %v705 = vpop.f32.mrf.mxu0
  %v706 = vadd.f32 %v305, %v705
  %v707 = vpop.f32.mrf.mxu0
  %708 = vmatprep.mubr.f32.mxu0 0.0
  %709 = vmatmul.mubr.f32.gmra.mxu0 %v393
  %v710 = vpop.f32.mrf.mxu0
  %v711 = vadd.f32 %v305, %v710
  %v712 = vpop.f32.mrf.mxu0
  %713 = vmatprep.mubr.f32.mxu0 0.0
  %714 = vmatmul.mubr.f32.gmra.mxu0 %v396
  %v715 = vpop.f32.mrf.mxu0
  %v716 = vadd.f32 %v305, %v715
  %v717 = vpop.f32.mrf.mxu0
  %718 = vmatprep.mubr.f32.mxu0 0.0
  %719 = vmatmul.mubr.f32.gmra.mxu0 %v399
  %v720 = vpop.f32.mrf.mxu0
  %v721 = vadd.f32 %v305, %v720
  %v722 = vpop.f32.mrf.mxu0
  %723 = vmatprep.mubr.f32.mxu0 0.0
  %724 = vmatmul.mubr.f32.gmra.mxu0 %v402
  %v725 = vpop.f32.mrf.mxu0
  %v726 = vadd.f32 %v305, %v725
  %v727 = vpop.f32.mrf.mxu0
  %728 = vmatprep.mubr.f32.mxu0 0.0
  %729 = vmatmul.mubr.f32.gmra.mxu0 %v405
  %v730 = vpop.f32.mrf.mxu0
  %v731 = vadd.f32 %v305, %v730
  %v732 = vpop.f32.mrf.mxu0
  %733 = vmatprep.mubr.f32.mxu0 0.0
  %734 = vmatmul.mubr.f32.gmra.mxu0 %v408
  %v735 = vpop.f32.mrf.mxu0
  %v736 = vadd.f32 %v305, %v735
  %v737 = vpop.f32.mrf.mxu0
  %738 = vmatprep.mubr.f32.mxu0 0.0
  %739 = vmatmul.mubr.f32.gmra.mxu0 %v411
  %v740 = vpop.f32.mrf.mxu0
  %v741 = vadd.f32 %v305, %v740
  %v742 = vpop.f32.mrf.mxu0
  %743 = vmatprep.mubr.f32.mxu0 0.0
  %744 = vmatmul.mubr.f32.gmra.mxu0 %v414
  %v745 = vpop.f32.mrf.mxu0
  %v746 = vadd.f32 %v305, %v745
  %v747 = vpop.f32.mrf.mxu0
  %748 = vmatprep.mubr.f32.mxu0 0.0
  %749 = vmatmul.mubr.f32.gmra.mxu0 %v417
  %v750 = vpop.f32.mrf.mxu0
  %v751 = vadd.f32 %v305, %v750
  %v752 = vpop.f32.mrf.mxu0
  %753 = vmatprep.mubr.f32.mxu0 0.0
  %754 = vmatmul.mubr.f32.gmra.mxu0 %v420
  %v755 = vpop.f32.mrf.mxu0
  %v756 = vadd.f32 %v305, %v755
  %v757 = vpop.f32.mrf.mxu0
  %758 = vmatprep.mubr.f32.mxu0 0.0
  %759 = vmatmul.mubr.f32.gmra.mxu0 %v423
  %v760 = vpop.f32.mrf.mxu0
  %v761 = vadd.f32 %v305, %v760
  %v762 = vpop.f32.mrf.mxu0
  %763 = vmatprep.mubr.f32.mxu0 0.0
  %764 = vmatmul.mubr.f32.gmra.mxu0 %v426
  %v765 = vpop.f32.mrf.mxu0
  %v766 = vadd.f32 %v305, %v765
  %v767 = vpop.f32.mrf.mxu0
  %768 = vmatprep.mubr.f32.mxu0 0.0
  %769 = vmatmul.mubr.f32.gmra.mxu0 %v429
  %v770 = vpop.f32.mrf.mxu0
  %v771 = vadd.f32 %v305, %v770
  %v772 = vpop.f32.mrf.mxu0
  %773 = vmatprep.mubr.f32.mxu0 0.0
  %774 = vmatmul.mubr.f32.gmra.mxu0 %v432
  %v775 = vpop.f32.mrf.mxu0
  %v776 = vadd.f32 %v305, %v775
  %v777 = vpop.f32.mrf.mxu0
  %778 = vmatprep.mubr.f32.mxu0 0.0
  %779 = vmatmul.mubr.f32.gmra.mxu0 %v435
  %v780 = vpop.f32.mrf.mxu0
  %v781 = vadd.f32 %v305, %v780
  %v782 = vpop.f32.mrf.mxu0
  %783 = vmatprep.mubr.f32.mxu0 0.0
  %784 = vmatmul.mubr.f32.gmra.mxu0 %v438
  %v785 = vpop.f32.mrf.mxu0
  %v786 = vadd.f32 %v305, %v785
  %v787 = vpop.f32.mrf.mxu0
  %788 = vmatprep.mubr.f32.mxu0 0.0
  %789 = vmatmul.mubr.f32.gmra.mxu0 %v441
  %v790 = vpop.f32.mrf.mxu0
  %v791 = vadd.f32 %v305, %v790
  %v792 = vpop.f32.mrf.mxu0
  %793 = vmatprep.mubr.f32.mxu0 0.0
  %794 = vmatmul.mubr.f32.gmra.mxu0 %v444
  %v795 = vpop.f32.mrf.mxu0
  %v796 = vadd.f32 %v305, %v795
  %v797 = vpop.f32.mrf.mxu0
  %798 = vmatprep.mubr.f32.mxu0 0.0
  %799 = vmatmul.mubr.f32.gmra.mxu0 %v447
  %v800 = vpop.f32.mrf.mxu0
  %v801 = vadd.f32 %v305, %v800
  %v802 = vpop.f32.mrf.mxu0
  %803 = vmatprep.mubr.f32.mxu0 0.0
  %804 = vmatmul.mubr.f32.gmra.mxu0 %v450
  %v805 = vpop.f32.mrf.mxu0
  %v806 = vadd.f32 %v305, %v805
  %v807 = vpop.f32.mrf.mxu0
  %808 = vmatprep.mubr.f32.mxu0 0.0
  %809 = vmatmul.mubr.f32.gmra.mxu0 %v453
  %v810 = vpop.f32.mrf.mxu0
  %v811 = vadd.f32 %v305, %v810
  %v812 = vpop.f32.mrf.mxu0
  %813 = vmatprep.mubr.f32.mxu0 0.0
  %814 = vmatmul.mubr.f32.gmra.mxu0 %v456
  %v815 = vpop.f32.mrf.mxu0
  %v816 = vadd.f32 %v305, %v815
  %v817 = vpop.f32.mrf.mxu0
  %818 = vmatprep.mubr.f32.mxu0 0.0
  %819 = vmatmul.mubr.f32.gmra.mxu0 %v459
  %v820 = vpop.f32.mrf.mxu0
  %v821 = vadd.f32 %v305, %v820
  %v822 = vpop.f32.mrf.mxu0
  %823 = vmatprep.mubr.f32.mxu0 0.0
  %824 = vmatmul.mubr.f32.gmra.mxu0 %v462
  %v825 = vpop.f32.mrf.mxu0
  %v826 = vadd.f32 %v305, %v825
  %v827 = vpop.f32.mrf.mxu0
  %828 = vmatprep.mubr.f32.mxu0 0.0
  %829 = vmatmul.mubr.f32.gmra.mxu0 %v465
  %v830 = vpop.f32.mrf.mxu0
  %v831 = vadd.f32 %v305, %v830
  %v832 = vpop.f32.mrf.mxu0
  %833 = vmatprep.mubr.f32.mxu0 0.0
  %834 = vmatmul.mubr.f32.gmra.mxu0 %v468
  %v835 = vpop.f32.mrf.mxu0
  %v836 = vadd.f32 %v305, %v835
  %v837 = vpop.f32.mrf.mxu0
  %838 = vmatprep.mubr.f32.mxu0 0.0
  %839 = vmatmul.mubr.f32.gmra.mxu0 %v471
  %v840 = vpop.f32.mrf.mxu0
  %v841 = vadd.f32 %v305, %v840
  %v842 = vpop.f32.mrf.mxu0
  %843 = vmatprep.mubr.f32.mxu0 0.0
  %844 = vmatmul.mubr.f32.gmra.mxu0 %v474
  %v845 = vpop.f32.mrf.mxu0
  %v846 = vadd.f32 %v305, %v845
  %v847 = vpop.f32.mrf.mxu0
  %848 = vmatprep.mubr.f32.mxu0 0.0
  %849 = vmatmul.mubr.f32.gmra.mxu0 %v477
  %v850 = vpop.f32.mrf.mxu0
  %v851 = vadd.f32 %v305, %v850
  %v852 = vpop.f32.mrf.mxu0
  %853 = vmatprep.mubr.f32.mxu0 0.0
  %854 = vmatmul.mubr.f32.gmra.mxu0 %v480
  %v855 = vpop.f32.mrf.mxu0
  %v856 = vadd.f32 %v305, %v855
  %v857 = vpop.f32.mrf.mxu0
  %858 = vmatprep.mubr.f32.mxu0 0.0
  %859 = vmatmul.mubr.f32.gmra.mxu0 %v483
  %v860 = vpop.f32.mrf.mxu0
  %v861 = vadd.f32 %v305, %v860
  %v862 = vpop.f32.mrf.mxu0
  %863 = vmatprep.mubr.f32.mxu0 0.0
  %864 = vmatmul.mubr.f32.gmra.mxu0 %v486
  %v865 = vpop.f32.mrf.mxu0
  %v866 = vadd.f32 %v305, %v865
  %v867 = vpop.f32.mrf.mxu0
  %868 = vmatprep.mubr.f32.mxu0 0.0
  %869 = vmatmul.mubr.f32.gmra.mxu0 %v489
  %v870 = vpop.f32.mrf.mxu0
  %v871 = vadd.f32 %v305, %v870
  %v872 = vpop.f32.mrf.mxu0
  %873 = vmatprep.mubr.f32.mxu0 0.0
  %874 = vmatmul.mubr.f32.gmra.mxu0 %v492
  %v875 = vpop.f32.mrf.mxu0
  %v876 = vadd.f32 %v305, %v875
  %v877 = vpop.f32.mrf.mxu0
  %878 = vmatprep.mubr.f32.mxu0 0.0
  %879 = vmatmul.mubr.f32.gmra.mxu0 %v495
  %v880 = vpop.f32.mrf.mxu0
  %v881 = vadd.f32 %v305, %v880
  %v882 = vpop.f32.mrf.mxu0
  %883 = vmatprep.mubr.f32.mxu0 0.0
  %884 = vmatmul.mubr.f32.gmra.mxu0 %v498
  %v885 = vpop.f32.mrf.mxu0
  %v886 = vadd.f32 %v305, %v885
  %v887 = vpop.f32.mrf.mxu0
  %888 = vdwg.mxu0
  %v889 = vld [vmem:[%s5] sm:$0xff]
  %v890 = vld [vmem:[%s5 + $0x8] sm:$0xff]
  %v891 = vld [vmem:[%s5 + $0x10] sm:$0xff]
  %v892 = vld [vmem:[%s5 + $0x18] sm:$0xff]
  %v893 = vld [vmem:[%s5 + $0x20] sm:$0xff]
  %v894 = vld [vmem:[%s5 + $0x28] sm:$0xff]
  %v895 = vld [vmem:[%s5 + $0x30] sm:$0xff]
  %v896 = vld [vmem:[%s5 + $0x38] sm:$0xff]
  %v897 = vld [vmem:[%s5 + $0x40] sm:$0xff]
  %v898 = vld [vmem:[%s5 + $0x48] sm:$0xff]
  %v899 = vld [vmem:[%s5 + $0x50] sm:$0xff]
  %v900 = vld [vmem:[%s5 + $0x58] sm:$0xff]
  %v901 = vld [vmem:[%s5 + $0x60] sm:$0xff]
  %v902 = vld [vmem:[%s5 + $0x68] sm:$0xff]
  %v903 = vld [vmem:[%s5 + $0x70] sm:$0xff]
  %v904 = vld [vmem:[%s5 + $0x78] sm:$0xff]
  %v905 = vld [vmem:[%s5 + $0x80] sm:$0xff]
  %v906 = vld [vmem:[%s5 + $0x88] sm:$0xff]
  %v907 = vld [vmem:[%s5 + $0x90] sm:$0xff]
  %v908 = vld [vmem:[%s5 + $0x98] sm:$0xff]
  %v909 = vld [vmem:[%s5 + $0xa0] sm:$0xff]
  %v910 = vld [vmem:[%s5 + $0xa8] sm:$0xff]
  %v911 = vld [vmem:[%s5 + $0xb0] sm:$0xff]
  %v912 = vld [vmem:[%s5 + $0xb8] sm:$0xff]
  %v913 = vld [vmem:[%s5 + $0xc0] sm:$0xff]
  %v914 = vld [vmem:[%s5 + $0xc8] sm:$0xff]
  %v915 = vld [vmem:[%s5 + $0xd0] sm:$0xff]
  %v916 = vld [vmem:[%s5 + $0xd8] sm:$0xff]
  %v917 = vld [vmem:[%s5 + $0xe0] sm:$0xff]
  %v918 = vld [vmem:[%s5 + $0xe8] sm:$0xff]
  %v919 = vld [vmem:[%s5 + $0xf0] sm:$0xff]
  %v920 = vld [vmem:[%s5 + $0xf8] sm:$0xff]
  %v921 = vld [vmem:[%s5 + $0x100] sm:$0xff]
  %v922 = vld [vmem:[%s5 + $0x108] sm:$0xff]
  %v923 = vld [vmem:[%s5 + $0x110] sm:$0xff]
  %v924 = vld [vmem:[%s5 + $0x118] sm:$0xff]
  %v925 = vld [vmem:[%s5 + $0x120] sm:$0xff]
  %v926 = vld [vmem:[%s5 + $0x128] sm:$0xff]
  %v927 = vld [vmem:[%s5 + $0x130] sm:$0xff]
  %v928 = vld [vmem:[%s5 + $0x138] sm:$0xff]
  %v929 = vld [vmem:[%s5 + $0x140] sm:$0xff]
  %v930 = vld [vmem:[%s5 + $0x148] sm:$0xff]
  %v931 = vld [vmem:[%s5 + $0x150] sm:$0xff]
  %v932 = vld [vmem:[%s5 + $0x158] sm:$0xff]
  %v933 = vld [vmem:[%s5 + $0x160] sm:$0xff]
  %v934 = vld [vmem:[%s5 + $0x168] sm:$0xff]
  %v935 = vld [vmem:[%s5 + $0x170] sm:$0xff]
  %v936 = vld [vmem:[%s5 + $0x178] sm:$0xff]
  %v937 = vld [vmem:[%s5 + $0x180] sm:$0xff]
  %v938 = vld [vmem:[%s5 + $0x188] sm:$0xff]
  %v939 = vld [vmem:[%s5 + $0x190] sm:$0xff]
  %v940 = vld [vmem:[%s5 + $0x198] sm:$0xff]
  %v941 = vld [vmem:[%s5 + $0x1a0] sm:$0xff]
  %v942 = vld [vmem:[%s5 + $0x1a8] sm:$0xff]
  %v943 = vld [vmem:[%s5 + $0x1b0] sm:$0xff]
  %v944 = vld [vmem:[%s5 + $0x1b8] sm:$0xff]
  %v945 = vld [vmem:[%s5 + $0x1c0] sm:$0xff]
  %v946 = vld [vmem:[%s5 + $0x1c8] sm:$0xff]
  %v947 = vld [vmem:[%s5 + $0x1d0] sm:$0xff]
  %v948 = vld [vmem:[%s5 + $0x1d8] sm:$0xff]
  %v949 = vld [vmem:[%s5 + $0x1e0] sm:$0xff]
  %v950 = vld [vmem:[%s5 + $0x1e8] sm:$0xff]
  %v951 = vld [vmem:[%s5 + $0x1f0] sm:$0xff]
  %v952 = vld [vmem:[%s5 + $0x1f8] sm:$0xff]
  %v953 = vld [vmem:[%s6] sm:$0x1]
  %v955 = vlaneseq
  %v956 = vshrl.u32 %v955, 7
  %v957 = vsub.s32 0, %v956
  %v958 = vrot.slane %v953, %v957
  %v960 = vmul.f32 %v889, %v958
  %v961 = vmul.f32 %v890, %v958
  %v962 = vmul.f32 %v891, %v958
  %v963 = vmul.f32 %v892, %v958
  %v964 = vmul.f32 %v893, %v958
  %v965 = vmul.f32 %v894, %v958
  %v966 = vmul.f32 %v895, %v958
  %v967 = vmul.f32 %v896, %v958
  %v968 = vmul.f32 %v897, %v958
  %v969 = vmul.f32 %v898, %v958
  %v970 = vmul.f32 %v899, %v958
  %v971 = vmul.f32 %v900, %v958
  %v972 = vmul.f32 %v901, %v958
  %v973 = vmul.f32 %v902, %v958
  %v974 = vmul.f32 %v903, %v958
  %v975 = vmul.f32 %v904, %v958
  %v976 = vmul.f32 %v905, %v958
  %v977 = vmul.f32 %v906, %v958
  %v978 = vmul.f32 %v907, %v958
  %v979 = vmul.f32 %v908, %v958
  %v980 = vmul.f32 %v909, %v958
  %v981 = vmul.f32 %v910, %v958
  %v982 = vmul.f32 %v911, %v958
  %v983 = vmul.f32 %v912, %v958
  %v984 = vmul.f32 %v913, %v958
  %v985 = vmul.f32 %v914, %v958
  %v986 = vmul.f32 %v915, %v958
  %v987 = vmul.f32 %v916, %v958
  %v988 = vmul.f32 %v917, %v958
  %v989 = vmul.f32 %v918, %v958
  %v990 = vmul.f32 %v919, %v958
  %v991 = vmul.f32 %v920, %v958
  %v992 = vmul.f32 %v921, %v958
  %v993 = vmul.f32 %v922, %v958
  %v994 = vmul.f32 %v923, %v958
  %v995 = vmul.f32 %v924, %v958
  %v996 = vmul.f32 %v925, %v958
  %v997 = vmul.f32 %v926, %v958
  %v998 = vmul.f32 %v927, %v958
  %v999 = vmul.f32 %v928, %v958
  %v1000 = vmul.f32 %v929, %v958
  %v1001 = vmul.f32 %v930, %v958
  %v1002 = vmul.f32 %v931, %v958
  %v1003 = vmul.f32 %v932, %v958
  %v1004 = vmul.f32 %v933, %v958
  %v1005 = vmul.f32 %v934, %v958
  %v1006 = vmul.f32 %v935, %v958
  %v1007 = vmul.f32 %v936, %v958
  %v1008 = vmul.f32 %v937, %v958
  %v1009 = vmul.f32 %v938, %v958
  %v1010 = vmul.f32 %v939, %v958
  %v1011 = vmul.f32 %v940, %v958
  %v1012 = vmul.f32 %v941, %v958
  %v1013 = vmul.f32 %v942, %v958
  %v1014 = vmul.f32 %v943, %v958
  %v1015 = vmul.f32 %v944, %v958
  %v1016 = vmul.f32 %v945, %v958
  %v1017 = vmul.f32 %v946, %v958
  %v1018 = vmul.f32 %v947, %v958
  %v1019 = vmul.f32 %v948, %v958
  %v1020 = vmul.f32 %v949, %v958
  %v1021 = vmul.f32 %v950, %v958
  %v1022 = vmul.f32 %v951, %v958
  %v1023 = vmul.f32 %v952, %v958
  %v1024 = vld [vmem:[%s7] sm:$0x1]
  %v1026 = vlaneseq
  %v1027 = vshrl.u32 %v1026, 7
  %v1028 = vsub.s32 0, %v1027
  %v1029 = vrot.slane %v1024, %v1028
  %v1031 = vadd.f32 %v960, %v1029
  %v1032 = vadd.f32 %v961, %v1029
  %v1033 = vadd.f32 %v962, %v1029
  %v1034 = vadd.f32 %v963, %v1029
  %v1035 = vadd.f32 %v964, %v1029
  %v1036 = vadd.f32 %v965, %v1029
  %v1037 = vadd.f32 %v966, %v1029
  %v1038 = vadd.f32 %v967, %v1029
  %v1039 = vadd.f32 %v968, %v1029
  %v1040 = vadd.f32 %v969, %v1029
  %v1041 = vadd.f32 %v970, %v1029
  %v1042 = vadd.f32 %v971, %v1029
  %v1043 = vadd.f32 %v972, %v1029
  %v1044 = vadd.f32 %v973, %v1029
  %v1045 = vadd.f32 %v974, %v1029
  %v1046 = vadd.f32 %v975, %v1029
  %v1047 = vadd.f32 %v976, %v1029
  %v1048 = vadd.f32 %v977, %v1029
  %v1049 = vadd.f32 %v978, %v1029
  %v1050 = vadd.f32 %v979, %v1029
  %v1051 = vadd.f32 %v980, %v1029
  %v1052 = vadd.f32 %v981, %v1029
  %v1053 = vadd.f32 %v982, %v1029
  %v1054 = vadd.f32 %v983, %v1029
  %v1055 = vadd.f32 %v984, %v1029
  %v1056 = vadd.f32 %v985, %v1029
  %v1057 = vadd.f32 %v986, %v1029
  %v1058 = vadd.f32 %v987, %v1029
  %v1059 = vadd.f32 %v988, %v1029
  %v1060 = vadd.f32 %v989, %v1029
  %v1061 = vadd.f32 %v990, %v1029
  %v1062 = vadd.f32 %v991, %v1029
  %v1063 = vadd.f32 %v992, %v1029
  %v1064 = vadd.f32 %v993, %v1029
  %v1065 = vadd.f32 %v994, %v1029
  %v1066 = vadd.f32 %v995, %v1029
  %v1067 = vadd.f32 %v996, %v1029
  %v1068 = vadd.f32 %v997, %v1029
  %v1069 = vadd.f32 %v998, %v1029
  %v1070 = vadd.f32 %v999, %v1029
  %v1071 = vadd.f32 %v1000, %v1029
  %v1072 = vadd.f32 %v1001, %v1029
  %v1073 = vadd.f32 %v1002, %v1029
  %v1074 = vadd.f32 %v1003, %v1029
  %v1075 = vadd.f32 %v1004, %v1029
  %v1076 = vadd.f32 %v1005, %v1029
  %v1077 = vadd.f32 %v1006, %v1029
  %v1078 = vadd.f32 %v1007, %v1029
  %v1079 = vadd.f32 %v1008, %v1029
  %v1080 = vadd.f32 %v1009, %v1029
  %v1081 = vadd.f32 %v1010, %v1029
  %v1082 = vadd.f32 %v1011, %v1029
  %v1083 = vadd.f32 %v1012, %v1029
  %v1084 = vadd.f32 %v1013, %v1029
  %v1085 = vadd.f32 %v1014, %v1029
  %v1086 = vadd.f32 %v1015, %v1029
  %v1087 = vadd.f32 %v1016, %v1029
  %v1088 = vadd.f32 %v1017, %v1029
  %v1089 = vadd.f32 %v1018, %v1029
  %v1090 = vadd.f32 %v1019, %v1029
  %v1091 = vadd.f32 %v1020, %v1029
  %v1092 = vadd.f32 %v1021, %v1029
  %v1093 = vadd.f32 %v1022, %v1029
  %v1094 = vadd.f32 %v1023, %v1029
  %v1095 = vadd.f32 %v571, %v1031
  %v1096 = vadd.f32 %v576, %v1032
  %v1097 = vadd.f32 %v581, %v1033
  %v1098 = vadd.f32 %v586, %v1034
  %v1099 = vadd.f32 %v591, %v1035
  %v1100 = vadd.f32 %v596, %v1036
  %v1101 = vadd.f32 %v601, %v1037
  %v1102 = vadd.f32 %v606, %v1038
  %v1103 = vadd.f32 %v611, %v1039
  %v1104 = vadd.f32 %v616, %v1040
  %v1105 = vadd.f32 %v621, %v1041
  %v1106 = vadd.f32 %v626, %v1042
  %v1107 = vadd.f32 %v631, %v1043
  %v1108 = vadd.f32 %v636, %v1044
  %v1109 = vadd.f32 %v641, %v1045
  %v1110 = vadd.f32 %v646, %v1046
  %v1111 = vadd.f32 %v651, %v1047
  %v1112 = vadd.f32 %v656, %v1048
  %v1113 = vadd.f32 %v661, %v1049
  %v1114 = vadd.f32 %v666, %v1050
  %v1115 = vadd.f32 %v671, %v1051
  %v1116 = vadd.f32 %v676, %v1052
  %v1117 = vadd.f32 %v681, %v1053
  %v1118 = vadd.f32 %v686, %v1054
  %v1119 = vadd.f32 %v691, %v1055
  %v1120 = vadd.f32 %v696, %v1056
  %v1121 = vadd.f32 %v701, %v1057
  %v1122 = vadd.f32 %v706, %v1058
  %v1123 = vadd.f32 %v711, %v1059
  %v1124 = vadd.f32 %v716, %v1060
  %v1125 = vadd.f32 %v721, %v1061
  %v1126 = vadd.f32 %v726, %v1062
  %v1127 = vadd.f32 %v731, %v1063
  %v1128 = vadd.f32 %v736, %v1064
  %v1129 = vadd.f32 %v741, %v1065
  %v1130 = vadd.f32 %v746, %v1066
  %v1131 = vadd.f32 %v751, %v1067
  %v1132 = vadd.f32 %v756, %v1068
  %v1133 = vadd.f32 %v761, %v1069
  %v1134 = vadd.f32 %v766, %v1070
  %v1135 = vadd.f32 %v771, %v1071
  %v1136 = vadd.f32 %v776, %v1072
  %v1137 = vadd.f32 %v781, %v1073
  %v1138 = vadd.f32 %v786, %v1074
  %v1139 = vadd.f32 %v791, %v1075
  %v1140 = vadd.f32 %v796, %v1076
  %v1141 = vadd.f32 %v801, %v1077
  %v1142 = vadd.f32 %v806, %v1078
  %v1143 = vadd.f32 %v811, %v1079
  %v1144 = vadd.f32 %v816, %v1080
  %v1145 = vadd.f32 %v821, %v1081
  %v1146 = vadd.f32 %v826, %v1082
  %v1147 = vadd.f32 %v831, %v1083
  %v1148 = vadd.f32 %v836, %v1084
  %v1149 = vadd.f32 %v841, %v1085
  %v1150 = vadd.f32 %v846, %v1086
  %v1151 = vadd.f32 %v851, %v1087
  %v1152 = vadd.f32 %v856, %v1088
  %v1153 = vadd.f32 %v861, %v1089
  %v1154 = vadd.f32 %v866, %v1090
  %v1155 = vadd.f32 %v871, %v1091
  %v1156 = vadd.f32 %v876, %v1092
  %v1157 = vadd.f32 %v881, %v1093
  %v1158 = vadd.f32 %v886, %v1094
  %v1159 = vmax.f32 %v1095, 0.0
  %v1160 = vmax.f32 %v1096, 0.0
  %v1161 = vmax.f32 %v1097, 0.0
  %v1162 = vmax.f32 %v1098, 0.0
  %v1163 = vmax.f32 %v1099, 0.0
  %v1164 = vmax.f32 %v1100, 0.0
  %v1165 = vmax.f32 %v1101, 0.0
  %v1166 = vmax.f32 %v1102, 0.0
  %v1167 = vmax.f32 %v1103, 0.0
  %v1168 = vmax.f32 %v1104, 0.0
  %v1169 = vmax.f32 %v1105, 0.0
  %v1170 = vmax.f32 %v1106, 0.0
  %v1171 = vmax.f32 %v1107, 0.0
  %v1172 = vmax.f32 %v1108, 0.0
  %v1173 = vmax.f32 %v1109, 0.0
  %v1174 = vmax.f32 %v1110, 0.0
  %v1175 = vmax.f32 %v1111, 0.0
  %v1176 = vmax.f32 %v1112, 0.0
  %v1177 = vmax.f32 %v1113, 0.0
  %v1178 = vmax.f32 %v1114, 0.0
  %v1179 = vmax.f32 %v1115, 0.0
  %v1180 = vmax.f32 %v1116, 0.0
  %v1181 = vmax.f32 %v1117, 0.0
  %v1182 = vmax.f32 %v1118, 0.0
  %v1183 = vmax.f32 %v1119, 0.0
  %v1184 = vmax.f32 %v1120, 0.0
  %v1185 = vmax.f32 %v1121, 0.0
  %v1186 = vmax.f32 %v1122, 0.0
  %v1187 = vmax.f32 %v1123, 0.0
  %v1188 = vmax.f32 %v1124, 0.0
  %v1189 = vmax.f32 %v1125, 0.0
  %v1190 = vmax.f32 %v1126, 0.0
  %v1191 = vmax.f32 %v1127, 0.0
  %v1192 = vmax.f32 %v1128, 0.0
  %v1193 = vmax.f32 %v1129, 0.0
  %v1194 = vmax.f32 %v1130, 0.0
  %v1195 = vmax.f32 %v1131, 0.0
  %v1196 = vmax.f32 %v1132, 0.0
  %v1197 = vmax.f32 %v1133, 0.0
  %v1198 = vmax.f32 %v1134, 0.0
  %v1199 = vmax.f32 %v1135, 0.0
  %v1200 = vmax.f32 %v1136, 0.0
  %v1201 = vmax.f32 %v1137, 0.0
  %v1202 = vmax.f32 %v1138, 0.0
  %v1203 = vmax.f32 %v1139, 0.0
  %v1204 = vmax.f32 %v1140, 0.0
  %v1205 = vmax.f32 %v1141, 0.0
  %v1206 = vmax.f32 %v1142, 0.0
  %v1207 = vmax.f32 %v1143, 0.0
  %v1208 = vmax.f32 %v1144, 0.0
  %v1209 = vmax.f32 %v1145, 0.0
  %v1210 = vmax.f32 %v1146, 0.0
  %v1211 = vmax.f32 %v1147, 0.0
  %v1212 = vmax.f32 %v1148, 0.0
  %v1213 = vmax.f32 %v1149, 0.0
  %v1214 = vmax.f32 %v1150, 0.0
  %v1215 = vmax.f32 %v1151, 0.0
  %v1216 = vmax.f32 %v1152, 0.0
  %v1217 = vmax.f32 %v1153, 0.0
  %v1218 = vmax.f32 %v1154, 0.0
  %v1219 = vmax.f32 %v1155, 0.0
  %v1220 = vmax.f32 %v1156, 0.0
  %v1221 = vmax.f32 %v1157, 0.0
  %v1222 = vmax.f32 %v1158, 0.0
  %vm1223 = vcmask 130048
  %1224 = vst.msk [vmem:[%s8] sm:$0xff] %vm1223, %v1159
  %1225 = vst.msk [vmem:[%s8 + $0x8] sm:$0xff] %vm1223, %v1160
  %1226 = vst.msk [vmem:[%s8 + $0x10] sm:$0xff] %vm1223, %v1161
  %1227 = vst.msk [vmem:[%s8 + $0x18] sm:$0xff] %vm1223, %v1162
  %1228 = vst.msk [vmem:[%s8 + $0x20] sm:$0xff] %vm1223, %v1163
  %1229 = vst.msk [vmem:[%s8 + $0x28] sm:$0xff] %vm1223, %v1164
  %1230 = vst.msk [vmem:[%s8 + $0x30] sm:$0xff] %vm1223, %v1165
  %1231 = vst.msk [vmem:[%s8 + $0x38] sm:$0xff] %vm1223, %v1166
  %1232 = vst.msk [vmem:[%s8 + $0x40] sm:$0xff] %vm1223, %v1167
  %1233 = vst.msk [vmem:[%s8 + $0x48] sm:$0xff] %vm1223, %v1168
  %1234 = vst.msk [vmem:[%s8 + $0x50] sm:$0xff] %vm1223, %v1169
  %1235 = vst.msk [vmem:[%s8 + $0x58] sm:$0xff] %vm1223, %v1170
  %1236 = vst.msk [vmem:[%s8 + $0x60] sm:$0xff] %vm1223, %v1171
  %1237 = vst.msk [vmem:[%s8 + $0x68] sm:$0xff] %vm1223, %v1172
  %1238 = vst.msk [vmem:[%s8 + $0x70] sm:$0xff] %vm1223, %v1173
  %1239 = vst.msk [vmem:[%s8 + $0x78] sm:$0xff] %vm1223, %v1174
  %1240 = vst.msk [vmem:[%s8 + $0x80] sm:$0xff] %vm1223, %v1175
  %1241 = vst.msk [vmem:[%s8 + $0x88] sm:$0xff] %vm1223, %v1176
  %1242 = vst.msk [vmem:[%s8 + $0x90] sm:$0xff] %vm1223, %v1177
  %1243 = vst.msk [vmem:[%s8 + $0x98] sm:$0xff] %vm1223, %v1178
  %1244 = vst.msk [vmem:[%s8 + $0xa0] sm:$0xff] %vm1223, %v1179
  %1245 = vst.msk [vmem:[%s8 + $0xa8] sm:$0xff] %vm1223, %v1180
  %1246 = vst.msk [vmem:[%s8 + $0xb0] sm:$0xff] %vm1223, %v1181
  %1247 = vst.msk [vmem:[%s8 + $0xb8] sm:$0xff] %vm1223, %v1182
  %1248 = vst.msk [vmem:[%s8 + $0xc0] sm:$0xff] %vm1223, %v1183
  %1249 = vst.msk [vmem:[%s8 + $0xc8] sm:$0xff] %vm1223, %v1184
  %1250 = vst.msk [vmem:[%s8 + $0xd0] sm:$0xff] %vm1223, %v1185
  %1251 = vst.msk [vmem:[%s8 + $0xd8] sm:$0xff] %vm1223, %v1186
  %1252 = vst.msk [vmem:[%s8 + $0xe0] sm:$0xff] %vm1223, %v1187
  %1253 = vst.msk [vmem:[%s8 + $0xe8] sm:$0xff] %vm1223, %v1188
  %1254 = vst.msk [vmem:[%s8 + $0xf0] sm:$0xff] %vm1223, %v1189
  %1255 = vst.msk [vmem:[%s8 + $0xf8] sm:$0xff] %vm1223, %v1190
  %1256 = vst.msk [vmem:[%s8 + $0x100] sm:$0xff] %vm1223, %v1191
  %1257 = vst.msk [vmem:[%s8 + $0x108] sm:$0xff] %vm1223, %v1192
  %1258 = vst.msk [vmem:[%s8 + $0x110] sm:$0xff] %vm1223, %v1193
  %1259 = vst.msk [vmem:[%s8 + $0x118] sm:$0xff] %vm1223, %v1194
  %1260 = vst.msk [vmem:[%s8 + $0x120] sm:$0xff] %vm1223, %v1195
  %1261 = vst.msk [vmem:[%s8 + $0x128] sm:$0xff] %vm1223, %v1196
  %1262 = vst.msk [vmem:[%s8 + $0x130] sm:$0xff] %vm1223, %v1197
  %1263 = vst.msk [vmem:[%s8 + $0x138] sm:$0xff] %vm1223, %v1198
  %1264 = vst.msk [vmem:[%s8 + $0x140] sm:$0xff] %vm1223, %v1199
  %1265 = vst.msk [vmem:[%s8 + $0x148] sm:$0xff] %vm1223, %v1200
  %1266 = vst.msk [vmem:[%s8 + $0x150] sm:$0xff] %vm1223, %v1201
  %1267 = vst.msk [vmem:[%s8 + $0x158] sm:$0xff] %vm1223, %v1202
  %1268 = vst.msk [vmem:[%s8 + $0x160] sm:$0xff] %vm1223, %v1203
  %1269 = vst.msk [vmem:[%s8 + $0x168] sm:$0xff] %vm1223, %v1204
  %1270 = vst.msk [vmem:[%s8 + $0x170] sm:$0xff] %vm1223, %v1205
  %1271 = vst.msk [vmem:[%s8 + $0x178] sm:$0xff] %vm1223, %v1206
  %1272 = vst.msk [vmem:[%s8 + $0x180] sm:$0xff] %vm1223, %v1207
  %1273 = vst.msk [vmem:[%s8 + $0x188] sm:$0xff] %vm1223, %v1208
  %1274 = vst.msk [vmem:[%s8 + $0x190] sm:$0xff] %vm1223, %v1209
  %1275 = vst.msk [vmem:[%s8 + $0x198] sm:$0xff] %vm1223, %v1210
  %1276 = vst.msk [vmem:[%s8 + $0x1a0] sm:$0xff] %vm1223, %v1211
  %1277 = vst.msk [vmem:[%s8 + $0x1a8] sm:$0xff] %vm1223, %v1212
  %1278 = vst.msk [vmem:[%s8 + $0x1b0] sm:$0xff] %vm1223, %v1213
  %1279 = vst.msk [vmem:[%s8 + $0x1b8] sm:$0xff] %vm1223, %v1214
  %1280 = vst.msk [vmem:[%s8 + $0x1c0] sm:$0xff] %vm1223, %v1215
  %1281 = vst.msk [vmem:[%s8 + $0x1c8] sm:$0xff] %vm1223, %v1216
  %1282 = vst.msk [vmem:[%s8 + $0x1d0] sm:$0xff] %vm1223, %v1217
  %1283 = vst.msk [vmem:[%s8 + $0x1d8] sm:$0xff] %vm1223, %v1218
  %1284 = vst.msk [vmem:[%s8 + $0x1e0] sm:$0xff] %vm1223, %v1219
  %1285 = vst.msk [vmem:[%s8 + $0x1e8] sm:$0xff] %vm1223, %v1220
  %1286 = vst.msk [vmem:[%s8 + $0x1f0] sm:$0xff] %vm1223, %v1221
  %1287 = vst.msk [vmem:[%s8 + $0x1f8] sm:$0xff] %vm1223, %v1222
  // Predicated region
  $region34: #{bottleneck_forward.7} parent=0 // pred_check
    _
  $region35: #{bottleneck_forward.7} parent=0 // pred_check_branch
    %1289 = sbr.rel (0) target = $region37
  $region36: #{bottleneck_forward.7} parent=0 // pred_region
    _
  $region37: #{bottleneck_forward.7} parent=0 // pred_fallthru
    _
  // Predicated region
  $region38: #{bottleneck_forward.7} parent=0 // pred_check
    _
  $region39: #{bottleneck_forward.7} parent=0 // pred_check_branch
    %1291 = sbr.rel (0) target = $region41
  $region40: #{bottleneck_forward.7} parent=0 // pred_region
    _
  $region41: #{bottleneck_forward.7} parent=0 // pred_fallthru
    _

// kernel: bottleneck_forward.5
$region0: #{bottleneck_forward.5}
  #allocation0 [shape = 'u32[]', space=smem, size = 0x4, offset = 0x4, fixed_abs, tag = 'smem constant byte address 0x4 - core index']
  #allocation1 [shape = 'u32[144,128]{1,0:T(1,128)}', space=vmem, size = 0x12000, scoped, tag = 'internal scratch']
  %s0 = inlined_call_operand.vmem [shape: f32[2,16,16,4], index: 0, kind: input, shape index: {}]
  %s1 = inlined_call_operand.vmem [shape: f32[4,4], index: 1, kind: input, shape index: {}]
  %s2 = inlined_call_operand.vmem [shape: f32[1,4], index: 2, kind: input, shape index: {}]
  %s3 = inlined_call_operand.vmem [shape: f32[36,4], index: 3, kind: input, shape index: {}]
  %s4 = inlined_call_operand.vmem [shape: f32[4,16], index: 4, kind: input, shape index: {}]
  %s5 = inlined_call_operand.vmem [shape: f32[2,256,4], index: 5, kind: output, shape index: {0}]
  %s6 = inlined_call_operand.vmem [shape: f32[2,2,4], index: 6, kind: output, shape index: {1}]
  %s7 = inlined_call_operand.vmem [shape: f32[2,256,16], index: 7, kind: output, shape index: {2}]
  %s8 = inlined_call_operand.vmem [shape: f32[2,2,16], index: 8, kind: output, shape index: {3}]
  %9 = xla_tuple %s5, %s6, %s7, %s8
  %s10 = sld [smem:[#allocation0]]
  $region77: #{bottleneck_forward.5} parent=0
    _
  %s12 = ssub.s32 1, %s10
  %s13 = scalar_select 0, %s12, %s10
  loop: start=0, step=1, limit=4
  $region2: #{bottleneck_forward.5} parent=0 // loop_pre_header
    _
  $region3: #{bottleneck_forward.5} parent=0 // loop_header
    %s15 = sphi 0, %s19
    %p16 = scmp.ge.s32.totalorder %s15, 4
    %s25 = sphi 0, %s27
    %s28 = sphi 0, %s25
    %s29 = sphi 0, %s28
    %s45 = sphi 0, %s29
    %s49 = sphi 0, %s49
    %s51 = sphi 0, %s49
    %s52 = sphi 0, %s51
    %s66 = sphi 0, %s52
    %s70 = sphi 0, %s70
    %s72 = sphi 0, %s70
    %s73 = sphi 0, %s72
    %s87 = sphi 0, %s73
    %s91 = sphi 0, %s91
    %s93 = sphi 0, %s91
    %s94 = sphi 0, %s93
    %s108 = sphi 0, %s94
    %s112 = sphi 0, %s112
    %s114 = sphi 0, %s112
    %s115 = sphi 0, %s114
    %s129 = sphi 0, %s115
    %s135 = sphi 0, %s137
    %s138 = sphi 0, %s135
    %s139 = sphi 0, %s138
    %s155 = sphi 0, %s139
    %s161 = sphi 0, %s163
    %s164 = sphi 0, %s161
    %s165 = sphi 0, %s164
    %s181 = sphi 0, %s165
    %s187 = sphi 0, %s189
    %s190 = sphi 0, %s187
    %s191 = sphi 0, %s190
    %s207 = sphi 0, %s191
    %s213 = sphi 0, %s215
    %s216 = sphi 0, %s213
    %s217 = sphi 0, %s216
    %s233 = sphi 0, %s217
  $region4: #{bottleneck_forward.5} parent=0 // loop_header_branch
    %18 = sbr.rel (%p16) target = $region8
  $region5: #{bottleneck_forward.5} parent=0 // loop_body
    %s20 = ssub.s32 %s15, 1
    %s21 = ssub.s32 %s15, 2
    %s22 = sadd.s32 %s15, 1
    %s23 = ssub.s32 %s15, %s22
    %p24 = scmp.eq.s32.totalorder %s23, 0
    %s26 = sadd.s32 %s25, 1
    %s27 = scalar_select %p24, %s25, %s26
    %p30 = pneg %p24
    %p31 = scmp.eq.s32.totalorder %s15, 1
    %p32 = por %p30, %p31
    %p33 = scmp.ne.s32.totalorder %s25, %s28
    %p34 = scmp.eq.s32.totalorder %s15, 0
    %p35 = por %p33, %p34
    %p36 = scmp.ne.s32.totalorder %s25, %s28
    %p37 = scmp.eq.s32.totalorder %s20, 1
    %p38 = por %p36, %p37
    %p39 = scmp.ne.s32.totalorder %s28, %s29
    %p40 = scmp.eq.s32.totalorder %s20, 0
    %p41 = por %p39, %p40
    %p42 = scmp.ne.s32.totalorder %s28, %s29
    %p43 = scmp.eq.s32.totalorder %s21, 1
    %p44 = por %p42, %p43
    %p46 = scmp.ne.s32.totalorder %s29, %s45
    %p47 = scmp.eq.s32.totalorder %s21, 0
    %p48 = por %p46, %p47
    %s50 = sadd.s32 %s49, 1
    %p53 = scmp.eq.s32.totalorder %s15, 1
    %p54 = scmp.ne.s32.totalorder %s49, %s51
    %p55 = scmp.eq.s32.totalorder %s15, 0
    %p56 = por %p54, %p55
    %p57 = scmp.ne.s32.totalorder %s49, %s51
    %p58 = scmp.eq.s32.totalorder %s20, 1
    %p59 = por %p57, %p58
    %p60 = scmp.ne.s32.totalorder %s51, %s52
    %p61 = scmp.eq.s32.totalorder %s20, 0
    %p62 = por %p60, %p61
    %p63 = scmp.ne.s32.totalorder %s51, %s52
    %p64 = scmp.eq.s32.totalorder %s21, 1
    %p65 = por %p63, %p64
    %p67 = scmp.ne.s32.totalorder %s52, %s66
    %p68 = scmp.eq.s32.totalorder %s21, 0
    %p69 = por %p67, %p68
    %s71 = sadd.s32 %s70, 1
    %p74 = scmp.eq.s32.totalorder %s15, 1
    %p75 = scmp.ne.s32.totalorder %s70, %s72
    %p76 = scmp.eq.s32.totalorder %s15, 0
    %p77 = por %p75, %p76
    %p78 = scmp.ne.s32.totalorder %s70, %s72
    %p79 = scmp.eq.s32.totalorder %s20, 1
    %p80 = por %p78, %p79
    %p81 = scmp.ne.s32.totalorder %s72, %s73
    %p82 = scmp.eq.s32.totalorder %s20, 0
    %p83 = por %p81, %p82
    %p84 = scmp.ne.s32.totalorder %s72, %s73
    %p85 = scmp.eq.s32.totalorder %s21, 1
    %p86 = por %p84, %p85
    %p88 = scmp.ne.s32.totalorder %s73, %s87
    %p89 = scmp.eq.s32.totalorder %s21, 0
    %p90 = por %p88, %p89
    %s92 = sadd.s32 %s91, 1
    %p95 = scmp.eq.s32.totalorder %s15, 1
    %p96 = scmp.ne.s32.totalorder %s91, %s93
    %p97 = scmp.eq.s32.totalorder %s15, 0
    %p98 = por %p96, %p97
    %p99 = scmp.ne.s32.totalorder %s91, %s93
    %p100 = scmp.eq.s32.totalorder %s20, 1
    %p101 = por %p99, %p100
    %p102 = scmp.ne.s32.totalorder %s93, %s94
    %p103 = scmp.eq.s32.totalorder %s20, 0
    %p104 = por %p102, %p103
    %p105 = scmp.ne.s32.totalorder %s93, %s94
    %p106 = scmp.eq.s32.totalorder %s21, 1
    %p107 = por %p105, %p106
    %p109 = scmp.ne.s32.totalorder %s94, %s108
    %p110 = scmp.eq.s32.totalorder %s21, 0
    %p111 = por %p109, %p110
    %s113 = sadd.s32 %s112, 1
    %p116 = scmp.eq.s32.totalorder %s15, 1
    %p117 = scmp.ne.s32.totalorder %s112, %s114
    %p118 = scmp.eq.s32.totalorder %s15, 0
    %p119 = por %p117, %p118
    %p120 = scmp.ne.s32.totalorder %s112, %s114
    %p121 = scmp.eq.s32.totalorder %s20, 1
    %p122 = por %p120, %p121
    %p123 = scmp.ne.s32.totalorder %s114, %s115
    %p124 = scmp.eq.s32.totalorder %s20, 0
    %p125 = por %p123, %p124
    %p126 = scmp.ne.s32.totalorder %s114, %s115
    %p127 = scmp.eq.s32.totalorder %s21, 1
    %p128 = por %p126, %p127
    %p130 = scmp.ne.s32.totalorder %s115, %s129
    %p131 = scmp.eq.s32.totalorder %s21, 0
    %p132 = por %p130, %p131
    %s133 = ssub.s32 %s15, %s22
    %p134 = scmp.eq.s32.totalorder %s133, 0
    %s136 = sadd.s32 %s135, 1
    %s137 = scalar_select %p134, %s135, %s136
    %p140 = pneg %p134
    %p141 = scmp.eq.s32.totalorder %s15, 1
    %p142 = por %p140, %p141
    %p143 = scmp.ne.s32.totalorder %s135, %s138
    %p144 = scmp.eq.s32.totalorder %s15, 0
    %p145 = por %p143, %p144
    %p146 = scmp.ne.s32.totalorder %s135, %s138
    %p147 = scmp.eq.s32.totalorder %s20, 1
    %p148 = por %p146, %p147
    %p149 = scmp.ne.s32.totalorder %s138, %s139
    %p150 = scmp.eq.s32.totalorder %s20, 0
    %p151 = por %p149, %p150
    %p152 = scmp.ne.s32.totalorder %s138, %s139
    %p153 = scmp.eq.s32.totalorder %s21, 1
    %p154 = por %p152, %p153
    %p156 = scmp.ne.s32.totalorder %s139, %s155
    %p157 = scmp.eq.s32.totalorder %s21, 0
    %p158 = por %p156, %p157
    %s159 = ssub.s32 %s15, %s22
    %p160 = scmp.eq.s32.totalorder %s159, 0
    %s162 = sadd.s32 %s161, 1
    %s163 = scalar_select %p160, %s161, %s162
    %p166 = pneg %p160
    %p167 = scmp.eq.s32.totalorder %s15, 1
    %p168 = por %p166, %p167
    %p169 = scmp.ne.s32.totalorder %s161, %s164
    %p170 = scmp.eq.s32.totalorder %s15, 0
    %p171 = por %p169, %p170
    %p172 = scmp.ne.s32.totalorder %s161, %s164
    %p173 = scmp.eq.s32.totalorder %s20, 1
    %p174 = por %p172, %p173
    %p175 = scmp.ne.s32.totalorder %s164, %s165
    %p176 = scmp.eq.s32.totalorder %s20, 0
    %p177 = por %p175, %p176
    %p178 = scmp.ne.s32.totalorder %s164, %s165
    %p179 = scmp.eq.s32.totalorder %s21, 1
    %p180 = por %p178, %p179
    %p182 = scmp.ne.s32.totalorder %s165, %s181
    %p183 = scmp.eq.s32.totalorder %s21, 0
    %p184 = por %p182, %p183
    %s185 = ssub.s32 %s15, %s22
    %p186 = scmp.eq.s32.totalorder %s185, 0
    %s188 = sadd.s32 %s187, 1
    %s189 = scalar_select %p186, %s187, %s188
    %p192 = pneg %p186
    %p193 = scmp.eq.s32.totalorder %s15, 1
    %p194 = por %p192, %p193
    %p195 = scmp.ne.s32.totalorder %s187, %s190
    %p196 = scmp.eq.s32.totalorder %s15, 0
    %p197 = por %p195, %p196
    %p198 = scmp.ne.s32.totalorder %s187, %s190
    %p199 = scmp.eq.s32.totalorder %s20, 1
    %p200 = por %p198, %p199
    %p201 = scmp.ne.s32.totalorder %s190, %s191
    %p202 = scmp.eq.s32.totalorder %s20, 0
    %p203 = por %p201, %p202
    %p204 = scmp.ne.s32.totalorder %s190, %s191
    %p205 = scmp.eq.s32.totalorder %s21, 1
    %p206 = por %p204, %p205
    %p208 = scmp.ne.s32.totalorder %s191, %s207
    %p209 = scmp.eq.s32.totalorder %s21, 0
    %p210 = por %p208, %p209
    %s211 = ssub.s32 %s15, %s22
    %p212 = scmp.eq.s32.totalorder %s211, 0
    %s214 = sadd.s32 %s213, 1
    %s215 = scalar_select %p212, %s213, %s214
    %p218 = pneg %p212
    %p219 = scmp.eq.s32.totalorder %s15, 1
    %p220 = por %p218, %p219
    %p221 = scmp.ne.s32.totalorder %s213, %s216
    %p222 = scmp.eq.s32.totalorder %s15, 0
    %p223 = por %p221, %p222
    %p224 = scmp.ne.s32.totalorder %s213, %s216
    %p225 = scmp.eq.s32.totalorder %s20, 1
    %p226 = por %p224, %p225
    %p227 = scmp.ne.s32.totalorder %s216, %s217
    %p228 = scmp.eq.s32.totalorder %s20, 0
    %p229 = por %p227, %p228
    %p230 = scmp.ne.s32.totalorder %s216, %s217
    %p231 = scmp.eq.s32.totalorder %s21, 1
    %p232 = por %p230, %p231
    %p234 = scmp.ne.s32.totalorder %s217, %s233
    %p235 = scmp.eq.s32.totalorder %s21, 0
    %p236 = por %p234, %p235
    %p237 = scmp.le.s32.totalorder 1, %s15
    %p238 = scmp.lt.s32.totalorder %s15, 3
    %p239 = pnand %p237, %p238
    %p240 = pneg %p239
    // Predicated region
    $region9: #{bottleneck_forward.5} parent=5 // pred_check
      _
    $region10: #{bottleneck_forward.5} parent=5 // pred_check_branch
      %242 = sbr.rel (%p239) target = $region12
    $region11: #{bottleneck_forward.5} parent=5 // pred_region
      %s243 = ssub.s32 %s15, 1
      // Predicated region
      $region13: #{bottleneck_forward.5} parent=11 // pred_check
        %p244 = pneg %p62
      $region14: #{bottleneck_forward.5} parent=11 // pred_check_branch
        %246 = sbr.rel (%p244) target = $region16
      $region15: #{bottleneck_forward.5} parent=11 // pred_region
        _
      $region16: #{bottleneck_forward.5} parent=11 // pred_fallthru
        _
      // Predicated region
      $region17: #{bottleneck_forward.5} parent=11 // pred_check
        %p247 = pneg %p83
      $region18: #{bottleneck_forward.5} parent=11 // pred_check_branch
        %249 = sbr.rel (%p247) target = $region20
      $region19: #{bottleneck_forward.5} parent=11 // pred_region
        _
      $region20: #{bottleneck_forward.5} parent=11 // pred_fallthru
        _
      // Predicated region
      $region21: #{bottleneck_forward.5} parent=11 // pred_check
        %p250 = pneg %p104
      $region22: #{bottleneck_forward.5} parent=11 // pred_check_branch
        %252 = sbr.rel (%p250) target = $region24
      $region23: #{bottleneck_forward.5} parent=11 // pred_region
        _
      $region24: #{bottleneck_forward.5} parent=11 // pred_fallthru
        _
      // Predicated region
      $region25: #{bottleneck_forward.5} parent=11 // pred_check
        %p253 = pneg %p125
      $region26: #{bottleneck_forward.5} parent=11 // pred_check_branch
        %255 = sbr.rel (%p253) target = $region28
      $region27: #{bottleneck_forward.5} parent=11 // pred_region
        _
      $region28: #{bottleneck_forward.5} parent=11 // pred_fallthru
        _
    $region12: #{bottleneck_forward.5} parent=5 // pred_fallthru
      _
    %p256 = scmp.lt.s32.totalorder %s15, 2
    // Predicated region
    $region29: #{bottleneck_forward.5} parent=5 // pred_check
      %p257 = pneg %p256
    $region30: #{bottleneck_forward.5} parent=5 // pred_check_branch
      %259 = sbr.rel (%p257) target = $region32
    $region31: #{bottleneck_forward.5} parent=5 // pred_region
      // Predicated region
      $region33: #{bottleneck_forward.5} parent=31 // pred_check
        %p260 = pneg %p35
      $region34: #{bottleneck_forward.5} parent=31 // pred_check_branch
        %262 = sbr.rel (%p260) target = $region36
      $region35: #{bottleneck_forward.5} parent=31 // pred_region
        %p263 = scmp.lt.s32.totalorder %s15, 1
        %s264 = scalar_select %p263, %s15, 1
        %s265 = smul.addr %s264, 32
        %s266 = smul.addr %s265, 8
        %s267 = scalar_lea.vmem %s0, %s266
      $region36: #{bottleneck_forward.5} parent=31 // pred_fallthru
        _
    $region32: #{bottleneck_forward.5} parent=5 // pred_fallthru
      _
    %p268 = scmp.le.s32.totalorder 1, %s15
    %p269 = scmp.lt.s32.totalorder %s15, 3
    %p270 = pnand %p268, %p269
    %p271 = pneg %p270
    // Predicated region
    $region37: #{bottleneck_forward.5} parent=5 // pred_check
      _
    $region38: #{bottleneck_forward.5} parent=5 // pred_check_branch
      %273 = sbr.rel (%p270) target = $region40
    $region39: #{bottleneck_forward.5} parent=5 // pred_region
      %s274 = ssub.s32 %s15, 1
      %p275 = scmp.lt.s32.totalorder %s20, 1
      %s276 = scalar_select %p275, %s20, 1
      %s277 = smul.addr %s276, 32
      %s278 = smul.addr %s277, 8
      %s279 = scalar_lea.vmem %s0, %s278
      %p280 = pneg %p41
      %p281 = pneg %p38
      %p282 = pneg %p62
      %p283 = pneg %p59
      %p284 = pneg %p83
      %p285 = pneg %p80
      %p286 = pneg %p104
      %p287 = pneg %p101
      %p288 = pneg %p125
      %p289 = pneg %p122
      %p290 = pneg %p151
      %p291 = pneg %p148
      %p292 = scmp.lt.s32.totalorder %s20, 1
      %s293 = scalar_select %p292, %s20, 1
      %s294 = smul.addr %s293, 32
      %s295 = smul.addr %s294, 8
      %s296 = scalar_lea.vmem %s5, %s295
      %p297 = pneg %p177
      %p298 = pneg %p174
      %p299 = scmp.lt.s32.totalorder %s20, 1
      %s300 = scalar_select %p299, %s20, 1
      %s301 = smul.addr %s300, 2
      %s302 = scalar_lea.vmem %s6, %s301
      %p303 = pneg %p203
      %p304 = pneg %p200
      %p305 = scmp.lt.s32.totalorder %s20, 1
      %s306 = scalar_select %p305, %s20, 1
      %s307 = smul.addr %s306, 32
      %s308 = smul.addr %s307, 8
      %s309 = scalar_lea.vmem %s7, %s308
      %p310 = pneg %p229
      %p311 = pneg %p226
      %p312 = scmp.lt.s32.totalorder %s20, 1
      %s313 = scalar_select %p312, %s20, 1
      %s314 = smul.addr %s313, 2
      %s315 = scalar_lea.vmem %s8, %s314
      %p316 = scmp.lt.s32.totalorder %s20, 1
      %s317 = scalar_select %p316, %s20, 1
      %s318 = smul.addr %s317, 32
      %s319 = smul.addr %s318, 8
      %s320 = scalar_lea.vmem %s0, %s319
      %p321 = scmp.lt.s32.totalorder %s20, 1
      %s322 = scalar_select %p321, %s20, 1
      %s323 = smul.addr %s322, 32
      %s324 = smul.addr %s323, 8
      %s325 = scalar_lea.vmem %s5, %s324
      %p326 = scmp.lt.s32.totalorder %s20, 1
      %s327 = scalar_select %p326, %s20, 1
      %s328 = smul.addr %s327, 2
      %s329 = scalar_lea.vmem %s6, %s328
      %p330 = scmp.lt.s32.totalorder %s20, 1
      %s331 = scalar_select %p330, %s20, 1
      %s332 = smul.addr %s331, 32
      %s333 = smul.addr %s332, 8
      %s334 = scalar_lea.vmem %s7, %s333
      %p335 = scmp.lt.s32.totalorder %s20, 1
      %s336 = scalar_select %p335, %s20, 1
      %s337 = smul.addr %s336, 2
      %s338 = scalar_lea.vmem %s8, %s337
      %v339 = vld [vmem:[%s320] sm:$0xff]
      %v340 = vld [vmem:[%s320 + $0x8] sm:$0xff]
      %v341 = vld [vmem:[%s320 + $0x10] sm:$0xff]
      %v342 = vld [vmem:[%s320 + $0x18] sm:$0xff]
      %v343 = vld [vmem:[%s320 + $0x20] sm:$0xff]
      %v344 = vld [vmem:[%s320 + $0x28] sm:$0xff]
      %v345 = vld [vmem:[%s320 + $0x30] sm:$0xff]
      %v346 = vld [vmem:[%s320 + $0x38] sm:$0xff]
      %v347 = vld [vmem:[%s320 + $0x40] sm:$0xff]
      %v348 = vld [vmem:[%s320 + $0x48] sm:$0xff]
      %v349 = vld [vmem:[%s320 + $0x50] sm:$0xff]
      %v350 = vld [vmem:[%s320 + $0x58] sm:$0xff]
      %v351 = vld [vmem:[%s320 + $0x60] sm:$0xff]
      %v352 = vld [vmem:[%s320 + $0x68] sm:$0xff]
      %v353 = vld [vmem:[%s320 + $0x70] sm:$0xff]
      %v354 = vld [vmem:[%s320 + $0x78] sm:$0xff]
      %v355 = vld [vmem:[%s320 + $0x80] sm:$0xff]
      %v356 = vld [vmem:[%s320 + $0x88] sm:$0xff]
      %v357 = vld [vmem:[%s320 + $0x90] sm:$0xff]
      %v358 = vld [vmem:[%s320 + $0x98] sm:$0xff]
      %v359 = vld [vmem:[%s320 + $0xa0] sm:$0xff]
      %v360 = vld [vmem:[%s320 + $0xa8] sm:$0xff]
      %v361 = vld [vmem:[%s320 + $0xb0] sm:$0xff]
      %v362 = vld [vmem:[%s320 + $0xb8] sm:$0xff]
      %v363 = vld [vmem:[%s320 + $0xc0] sm:$0xff]
      %v364 = vld [vmem:[%s320 + $0xc8] sm:$0xff]
      %v365 = vld [vmem:[%s320 + $0xd0] sm:$0xff]
      %v366 = vld [vmem:[%s320 + $0xd8] sm:$0xff]
      %v367 = vld [vmem:[%s320 + $0xe0] sm:$0xff]
      %v368 = vld [vmem:[%s320 + $0xe8] sm:$0xff]
      %v369 = vld [vmem:[%s320 + $0xf0] sm:$0xff]
      %v370 = vld [vmem:[%s320 + $0xf8] sm:$0xff]
      %v371 = vld [vmem:[%s1] sm:$0xf]
      %v372 = vld [vmem:[%s2] sm:$0x1]
      %v374 = vlaneseq
      %v375 = vshrl.u32 %v374, 7
      %v376 = vsub.s32 0, %v375
      %v377 = vrot.slane %v372, %v376
      %vm379 = vcmask 31744
      %v381 = vsel %vm379, %v339, 0
      %v384 = vsel %vm379, %v340, 0
      %v387 = vsel %vm379, %v341, 0
      %v390 = vsel %vm379, %v342, 0
      %v393 = vsel %vm379, %v343, 0
      %v396 = vsel %vm379, %v344, 0
      %v399 = vsel %vm379, %v345, 0
      %v402 = vsel %vm379, %v346, 0
      %v405 = vsel %vm379, %v347, 0
      %v408 = vsel %vm379, %v348, 0
      %v411 = vsel %vm379, %v349, 0
      %v414 = vsel %vm379, %v350, 0
      %v417 = vsel %vm379, %v351, 0
      %v420 = vsel %vm379, %v352, 0
      %v423 = vsel %vm379, %v353, 0
      %v426 = vsel %vm379, %v354, 0
      %v429 = vsel %vm379, %v355, 0
      %v432 = vsel %vm379, %v356, 0
      %v435 = vsel %vm379, %v357, 0
      %v438 = vsel %vm379, %v358, 0
      %v441 = vsel %vm379, %v359, 0
      %v444 = vsel %vm379, %v360, 0
      %v447 = vsel %vm379, %v361, 0
      %v450 = vsel %vm379, %v362, 0
      %v453 = vsel %vm379, %v363, 0
      %v456 = vsel %vm379, %v364, 0
      %v459 = vsel %vm379, %v365, 0
      %v462 = vsel %vm379, %v366, 0
      %v465 = vsel %vm379, %v367, 0
      %v468 = vsel %vm379, %v368, 0
      %v471 = vsel %vm379, %v369, 0
      %v474 = vsel %vm379, %v370, 0
      %vm476 = vcmask 1043456
      %v478 = vsel %vm476, %v371, 0
      %480 = vmatprep.subr.mxu0 0.0
      %481 = vmatpush1.msra.mxu0 0.0
      %482 = vmatprep.subr.mxu0 0.0
      %483 = vmatpush1.msra.mxu0 0.0
      %484 = vmatprep.subr.mxu0 0.0
      %485 = vmatpush1.msra.mxu0 0.0
      %486 = vmatprep.subr.mxu0 0.0
      %487 = vmatpush1.msra.mxu0 0.0
      %488 = vmatprep.subr.mxu0 0.0
      %489 = vmatpush1.msra.mxu0 0.0
      %490 = vmatprep.subr.mxu0 0.0
      %491 = vmatpush1.msra.mxu0 0.0
      %492 = vmatprep.subr.mxu0 0.0
      %493 = vmatpush1.msra.mxu0 0.0
      %494 = vmatprep.subr.mxu0 0.0
      %495 = vmatpush1.msra.mxu0 0.0
      %496 = vmatprep.subr.mxu0 0.0
      %497 = vmatpush1.msra.mxu0 0.0
      %498 = vmatprep.subr.mxu0 0.0
      %499 = vmatpush1.msra.mxu0 0.0
      %500 = vmatprep.subr.mxu0 0.0
      %501 = vmatpush1.msra.mxu0 0.0
      %502 = vmatprep.subr.mxu0 0.0
      %503 = vmatpush1.msra.mxu0 0.0
      %504 = vmatprep.subr.mxu0 0.0
      %505 = vmatpush1.msra.mxu0 0.0
      %506 = vmatprep.subr.mxu0 0.0
      %507 = vmatpush1.msra.mxu0 0.0
      %508 = vmatprep.subr.mxu0 0.0
      %509 = vmatpush1.msra.mxu0 0.0
      %510 = vmatprep.subr.mxu0 0.0
      %511 = vmatpush1.msra.mxu0 %v478
      %512 = vmatprep.subr.mxu0 0.0
      %513 = vmatpush2.msra.mxu0 0.0
      %514 = vmatprep.subr.mxu0 0.0
      %515 = vmatpush2.msra.mxu0 0.0
      %516 = vmatprep.subr.mxu0 0.0
      %517 = vmatpush2.msra.mxu0 0.0
      %518 = vmatprep.subr.mxu0 0.0
      %519 = vmatpush2.msra.mxu0 0.0
      %520 = vmatprep.subr.mxu0 0.0
      %521 = vmatpush2.msra.mxu0 0.0
      %522 = vmatprep.subr.mxu0 0.0
      %523 = vmatpush2.msra.mxu0 0.0
      %524 = vmatprep.subr.mxu0 0.0
      %525 = vmatpush2.msra.mxu0 0.0
      %526 = vmatprep.subr.mxu0 0.0
      %527 = vmatpush2.msra.mxu0 0.0
      %528 = vmatprep.subr.mxu0 0.0
      %529 = vmatpush2.msra.mxu0 0.0
      %530 = vmatprep.subr.mxu0 0.0
      %531 = vmatpush2.msra.mxu0 0.0
      %532 = vmatprep.subr.mxu0 0.0
      %533 = vmatpush2.msra.mxu0 0.0
      %534 = vmatprep.subr.mxu0 0.0
      %535 = vmatpush2.msra.mxu0 0.0
      %536 = vmatprep.subr.mxu0 0.0
      %537 = vmatpush2.msra.mxu0 0.0
      %538 = vmatprep.subr.mxu0 0.0
      %539 = vmatpush2.msra.mxu0 0.0
      %540 = vmatprep.subr.mxu0 0.0
      %541 = vmatpush2.msra.mxu0 0.0
      %542 = vmatprep.subr.mxu0 0.0
      %543 = vmatpush2.msra.mxu0 0.0
      %544 = vmatprep.mubr.f32.mxu0 0.0
      %545 = vmatmul.mubr.f32.gmra.mxu0 %v381
      %v546 = vpop.f32.mrf.mxu0
      %v547 = vadd.f32 %v377, %v546
      %v548 = vpop.f32.mrf.mxu0
      %549 = vmatprep.mubr.f32.mxu0 0.0
      %550 = vmatmul.mubr.f32.gmra.mxu0 %v384
      %v551 = vpop.f32.mrf.mxu0
      %v552 = vadd.f32 %v377, %v551
      %v553 = vpop.f32.mrf.mxu0
      %554 = vmatprep.mubr.f32.mxu0 0.0
      %555 = vmatmul.mubr.f32.gmra.mxu0 %v387
      %v556 = vpop.f32.mrf.mxu0
      %v557 = vadd.f32 %v377, %v556
      %v558 = vpop.f32.mrf.mxu0
      %559 = vmatprep.mubr.f32.mxu0 0.0
      %560 = vmatmul.mubr.f32.gmra.mxu0 %v390
      %v561 = vpop.f32.mrf.mxu0
      %v562 = vadd.f32 %v377, %v561
      %v563 = vpop.f32.mrf.mxu0
      %564 = vmatprep.mubr.f32.mxu0 0.0
      %565 = vmatmul.mubr.f32.gmra.mxu0 %v393
      %v566 = vpop.f32.mrf.mxu0
      %v567 = vadd.f32 %v377, %v566
      %v568 = vpop.f32.mrf.mxu0
      %569 = vmatprep.mubr.f32.mxu0 0.0
      %570 = vmatmul.mubr.f32.gmra.mxu0 %v396
      %v571 = vpop.f32.mrf.mxu0
      %v572 = vadd.f32 %v377, %v571
      %v573 = vpop.f32.mrf.mxu0
      %574 = vmatprep.mubr.f32.mxu0 0.0
      %575 = vmatmul.mubr.f32.gmra.mxu0 %v399
      %v576 = vpop.f32.mrf.mxu0
      %v577 = vadd.f32 %v377, %v576
      %v578 = vpop.f32.mrf.mxu0
      %579 = vmatprep.mubr.f32.mxu0 0.0
      %580 = vmatmul.mubr.f32.gmra.mxu0 %v402
      %v581 = vpop.f32.mrf.mxu0
      %v582 = vadd.f32 %v377, %v581
      %v583 = vpop.f32.mrf.mxu0
      %584 = vmatprep.mubr.f32.mxu0 0.0
      %585 = vmatmul.mubr.f32.gmra.mxu0 %v405
      %v586 = vpop.f32.mrf.mxu0
      %v587 = vadd.f32 %v377, %v586
      %v588 = vpop.f32.mrf.mxu0
      %589 = vmatprep.mubr.f32.mxu0 0.0
      %590 = vmatmul.mubr.f32.gmra.mxu0 %v408
      %v591 = vpop.f32.mrf.mxu0
      %v592 = vadd.f32 %v377, %v591
      %v593 = vpop.f32.mrf.mxu0
      %594 = vmatprep.mubr.f32.mxu0 0.0
      %595 = vmatmul.mubr.f32.gmra.mxu0 %v411
      %v596 = vpop.f32.mrf.mxu0
      %v597 = vadd.f32 %v377, %v596
      %v598 = vpop.f32.mrf.mxu0
      %599 = vmatprep.mubr.f32.mxu0 0.0
      %600 = vmatmul.mubr.f32.gmra.mxu0 %v414
      %v601 = vpop.f32.mrf.mxu0
      %v602 = vadd.f32 %v377, %v601
      %v603 = vpop.f32.mrf.mxu0
      %604 = vmatprep.mubr.f32.mxu0 0.0
      %605 = vmatmul.mubr.f32.gmra.mxu0 %v417
      %v606 = vpop.f32.mrf.mxu0
      %v607 = vadd.f32 %v377, %v606
      %v608 = vpop.f32.mrf.mxu0
      %609 = vmatprep.mubr.f32.mxu0 0.0
      %610 = vmatmul.mubr.f32.gmra.mxu0 %v420
      %v611 = vpop.f32.mrf.mxu0
      %v612 = vadd.f32 %v377, %v611
      %v613 = vpop.f32.mrf.mxu0
      %614 = vmatprep.mubr.f32.mxu0 0.0
      %615 = vmatmul.mubr.f32.gmra.mxu0 %v423
      %v616 = vpop.f32.mrf.mxu0
      %v617 = vadd.f32 %v377, %v616
      %v618 = vpop.f32.mrf.mxu0
      %619 = vmatprep.mubr.f32.mxu0 0.0
      %620 = vmatmul.mubr.f32.gmra.mxu0 %v426
      %v621 = vpop.f32.mrf.mxu0
      %v622 = vadd.f32 %v377, %v621
      %v623 = vpop.f32.mrf.mxu0
      %624 = vmatprep.mubr.f32.mxu0 0.0
      %625 = vmatmul.mubr.f32.gmra.mxu0 %v429
      %v626 = vpop.f32.mrf.mxu0
      %v627 = vadd.f32 %v377, %v626
      %v628 = vpop.f32.mrf.mxu0
      %629 = vmatprep.mubr.f32.mxu0 0.0
      %630 = vmatmul.mubr.f32.gmra.mxu0 %v432
      %v631 = vpop.f32.mrf.mxu0
      %v632 = vadd.f32 %v377, %v631
      %v633 = vpop.f32.mrf.mxu0
      %634 = vmatprep.mubr.f32.mxu0 0.0
      %635 = vmatmul.mubr.f32.gmra.mxu0 %v435
      %v636 = vpop.f32.mrf.mxu0
      %v637 = vadd.f32 %v377, %v636
      %v638 = vpop.f32.mrf.mxu0
      %639 = vmatprep.mubr.f32.mxu0 0.0
      %640 = vmatmul.mubr.f32.gmra.mxu0 %v438
      %v641 = vpop.f32.mrf.mxu0
      %v642 = vadd.f32 %v377, %v641
      %v643 = vpop.f32.mrf.mxu0
      %644 = vmatprep.mubr.f32.mxu0 0.0
      %645 = vmatmul.mubr.f32.gmra.mxu0 %v441
      %v646 = vpop.f32.mrf.mxu0
      %v647 = vadd.f32 %v377, %v646
      %v648 = vpop.f32.mrf.mxu0
      %649 = vmatprep.mubr.f32.mxu0 0.0
      %650 = vmatmul.mubr.f32.gmra.mxu0 %v444
      %v651 = vpop.f32.mrf.mxu0
      %v652 = vadd.f32 %v377, %v651
      %v653 = vpop.f32.mrf.mxu0
      %654 = vmatprep.mubr.f32.mxu0 0.0
      %655 = vmatmul.mubr.f32.gmra.mxu0 %v447
      %v656 = vpop.f32.mrf.mxu0
      %v657 = vadd.f32 %v377, %v656
      %v658 = vpop.f32.mrf.mxu0
      %659 = vmatprep.mubr.f32.mxu0 0.0
      %660 = vmatmul.mubr.f32.gmra.mxu0 %v450
      %v661 = vpop.f32.mrf.mxu0
      %v662 = vadd.f32 %v377, %v661
      %v663 = vpop.f32.mrf.mxu0
      %664 = vmatprep.mubr.f32.mxu0 0.0
      %665 = vmatmul.mubr.f32.gmra.mxu0 %v453
      %v666 = vpop.f32.mrf.mxu0
      %v667 = vadd.f32 %v377, %v666
      %v668 = vpop.f32.mrf.mxu0
      %669 = vmatprep.mubr.f32.mxu0 0.0
      %670 = vmatmul.mubr.f32.gmra.mxu0 %v456
      %v671 = vpop.f32.mrf.mxu0
      %v672 = vadd.f32 %v377, %v671
      %v673 = vpop.f32.mrf.mxu0
      %674 = vmatprep.mubr.f32.mxu0 0.0
      %675 = vmatmul.mubr.f32.gmra.mxu0 %v459
      %v676 = vpop.f32.mrf.mxu0
      %v677 = vadd.f32 %v377, %v676
      %v678 = vpop.f32.mrf.mxu0
      %679 = vmatprep.mubr.f32.mxu0 0.0
      %680 = vmatmul.mubr.f32.gmra.mxu0 %v462
      %v681 = vpop.f32.mrf.mxu0
      %v682 = vadd.f32 %v377, %v681
      %v683 = vpop.f32.mrf.mxu0
      %684 = vmatprep.mubr.f32.mxu0 0.0
      %685 = vmatmul.mubr.f32.gmra.mxu0 %v465
      %v686 = vpop.f32.mrf.mxu0
      %v687 = vadd.f32 %v377, %v686
      %v688 = vpop.f32.mrf.mxu0
      %689 = vmatprep.mubr.f32.mxu0 0.0
      %690 = vmatmul.mubr.f32.gmra.mxu0 %v468
      %v691 = vpop.f32.mrf.mxu0
      %v692 = vadd.f32 %v377, %v691
      %v693 = vpop.f32.mrf.mxu0
      %694 = vmatprep.mubr.f32.mxu0 0.0
      %695 = vmatmul.mubr.f32.gmra.mxu0 %v471
      %v696 = vpop.f32.mrf.mxu0
      %v697 = vadd.f32 %v377, %v696
      %v698 = vpop.f32.mrf.mxu0
      %699 = vmatprep.mubr.f32.mxu0 0.0
      %700 = vmatmul.mubr.f32.gmra.mxu0 %v474
      %v701 = vpop.f32.mrf.mxu0
      %v702 = vadd.f32 %v377, %v701
      %v703 = vpop.f32.mrf.mxu0
      %704 = vdwg.mxu0
      %v705 = vmax.f32 %v547, 0.0
      %v706 = vmax.f32 %v552, 0.0
      %v707 = vmax.f32 %v557, 0.0
      %v708 = vmax.f32 %v562, 0.0
      %v709 = vmax.f32 %v567, 0.0
      %v710 = vmax.f32 %v572, 0.0
      %v711 = vmax.f32 %v577, 0.0
      %v712 = vmax.f32 %v582, 0.0
      %v713 = vmax.f32 %v587, 0.0
      %v714 = vmax.f32 %v592, 0.0
      %v715 = vmax.f32 %v597, 0.0
      %v716 = vmax.f32 %v602, 0.0
      %v717 = vmax.f32 %v607, 0.0
      %v718 = vmax.f32 %v612, 0.0
      %v719 = vmax.f32 %v617, 0.0
      %v720 = vmax.f32 %v622, 0.0
      %v721 = vmax.f32 %v627, 0.0
      %v722 = vmax.f32 %v632, 0.0
      %v723 = vmax.f32 %v637, 0.0
      %v724 = vmax.f32 %v642, 0.0
      %v725 = vmax.f32 %v647, 0.0
      %v726 = vmax.f32 %v652, 0.0
      %v727 = vmax.f32 %v657, 0.0
      %v728 = vmax.f32 %v662, 0.0
      %v729 = vmax.f32 %v667, 0.0
      %v730 = vmax.f32 %v672, 0.0
      %v731 = vmax.f32 %v677, 0.0
      %v732 = vmax.f32 %v682, 0.0
      %v733 = vmax.f32 %v687, 0.0
      %v734 = vmax.f32 %v692, 0.0
      %v735 = vmax.f32 %v697, 0.0
      %v736 = vmax.f32 %v702, 0.0
      %vm769 = vcmask 1040384
      %v770 = vrot.slane %v705, 7
      %v771 = vrot.slane %v706, 7
      %v772 = vsel %vm769, %v770, %v771
      %v773 = vrot.slane %v707, 7
      %v774 = vrot.slane %v708, 7
      %v775 = vsel %vm769, %v773, %v774
      %v776 = vrot.slane %v709, 7
      %v777 = vrot.slane %v710, 7
      %v778 = vsel %vm769, %v776, %v777
      %v779 = vrot.slane %v711, 7
      %v780 = vrot.slane %v712, 7
      %v781 = vsel %vm769, %v779, %v780
      %v782 = vrot.slane %v713, 7
      %v783 = vrot.slane %v714, 7
      %v784 = vsel %vm769, %v782, %v783
      %v785 = vrot.slane %v715, 7
      %v786 = vrot.slane %v716, 7
      %v787 = vsel %vm769, %v785, %v786
      %v788 = vrot.slane %v717, 7
      %v789 = vrot.slane %v718, 7
      %v790 = vsel %vm769, %v788, %v789
      %v791 = vrot.slane %v719, 7
      %v792 = vrot.slane %v720, 7
      %v793 = vsel %vm769, %v791, %v792
      %v794 = vrot.slane %v721, 7
      %v795 = vrot.slane %v722, 7
      %v796 = vsel %vm769, %v794, %v795
      %v797 = vrot.slane %v723, 7
      %v798 = vrot.slane %v724, 7
      %v799 = vsel %vm769, %v797, %v798
      %v800 = vrot.slane %v725, 7
      %v801 = vrot.slane %v726, 7
      %v802 = vsel %vm769, %v800, %v801
      %v803 = vrot.slane %v727, 7
      %v804 = vrot.slane %v728, 7
      %v805 = vsel %vm769, %v803, %v804
      %v806 = vrot.slane %v729, 7
      %v807 = vrot.slane %v730, 7
      %v808 = vsel %vm769, %v806, %v807
      %v809 = vrot.slane %v731, 7
      %v810 = vrot.slane %v732, 7
      %v811 = vsel %vm769, %v809, %v810
      %v812 = vrot.slane %v733, 7
      %v813 = vrot.slane %v734, 7
      %v814 = vsel %vm769, %v812, %v813
      %v815 = vrot.slane %v735, 7
      %v816 = vrot.slane %v736, 7
      %v817 = vsel %vm769, %v815, %v816
      %v865 = vsel %vm769, 0.0, %v770
      %v866 = vsel %vm769, 0.0, %v773
      %v867 = vsel %vm769, 0.0, %v776
      %v868 = vsel %vm769, 0.0, %v779
      %v869 = vsel %vm769, 0.0, %v782
      %v870 = vsel %vm769, 0.0, %v785
      %v871 = vsel %vm769, 0.0, %v788
      %v872 = vsel %vm769, 0.0, %v791
      %v873 = vsel %vm769, 0.0, %v794
      %v874 = vsel %vm769, 0.0, %v797
      %v875 = vsel %vm769, 0.0, %v800
      %v876 = vsel %vm769, 0.0, %v803
      %v877 = vsel %vm769, 0.0, %v806
      %v878 = vsel %vm769, 0.0, %v809
      %v879 = vsel %vm769, 0.0, %v812
      %v880 = vsel %vm769, 0.0, %v815
      %v881 = vsel %vm769, %v771, 0.0
      %v882 = vsel %vm769, %v774, 0.0
      %v883 = vsel %vm769, %v777, 0.0
      %v884 = vsel %vm769, %v780, 0.0
      %v885 = vsel %vm769, %v783, 0.0
      %v886 = vsel %vm769, %v786, 0.0
      %v887 = vsel %vm769, %v789, 0.0
      %v888 = vsel %vm769, %v792, 0.0
      %v889 = vsel %vm769, %v795, 0.0
      %v890 = vsel %vm769, %v798, 0.0
      %v891 = vsel %vm769, %v801, 0.0
      %v892 = vsel %vm769, %v804, 0.0
      %v893 = vsel %vm769, %v807, 0.0
      %v894 = vsel %vm769, %v810, 0.0
      %v895 = vsel %vm769, %v813, 0.0
      %v896 = vsel %vm769, %v816, 0.0
      %vm928 = vcmask 1046528
      %v929 = vrot.slane 0.0, 1
      %v930 = vsel %vm928, %v929, %v929
      %v931 = vrot.slane %v865, 1
      %v932 = vrot.slane %v772, 1
      %v933 = vsel %vm928, %v931, %v932
      %v934 = vrot.slane %v881, 1
      %v935 = vsel %vm928, %v932, %v934
      %v936 = vrot.slane %v866, 1
      %v937 = vrot.slane %v775, 1
      %v938 = vsel %vm928, %v936, %v937
      %v939 = vrot.slane %v882, 1
      %v940 = vsel %vm928, %v937, %v939
      %v941 = vrot.slane %v867, 1
      %v942 = vrot.slane %v778, 1
      %v943 = vsel %vm928, %v941, %v942
      %v944 = vrot.slane %v883, 1
      %v945 = vsel %vm928, %v942, %v944
      %v946 = vrot.slane %v868, 1
      %v947 = vrot.slane %v781, 1
      %v948 = vsel %vm928, %v946, %v947
      %v949 = vrot.slane %v884, 1
      %v950 = vsel %vm928, %v947, %v949
      %v951 = vrot.slane %v869, 1
      %v952 = vrot.slane %v784, 1
      %v953 = vsel %vm928, %v951, %v952
      %v954 = vrot.slane %v885, 1
      %v955 = vsel %vm928, %v952, %v954
      %v956 = vrot.slane %v870, 1
      %v957 = vrot.slane %v787, 1
      %v958 = vsel %vm928, %v956, %v957
      %v959 = vrot.slane %v886, 1
      %v960 = vsel %vm928, %v957, %v959
      %v961 = vrot.slane %v871, 1
      %v962 = vrot.slane %v790, 1
      %v963 = vsel %vm928, %v961, %v962
      %v964 = vrot.slane %v887, 1
      %v965 = vsel %vm928, %v962, %v964
      %v966 = vrot.slane %v872, 1
      %v967 = vrot.slane %v793, 1
      %v968 = vsel %vm928, %v966, %v967
      %v969 = vrot.slane %v888, 1
      %v970 = vsel %vm928, %v967, %v969
      %v971 = vrot.slane %v873, 1
      %v972 = vrot.slane %v796, 1
      %v973 = vsel %vm928, %v971, %v972
      %v974 = vrot.slane %v889, 1
      %v975 = vsel %vm928, %v972, %v974
      %v976 = vrot.slane %v874, 1
      %v977 = vrot.slane %v799, 1
      %v978 = vsel %vm928, %v976, %v977
      %v979 = vrot.slane %v890, 1
      %v980 = vsel %vm928, %v977, %v979
      %v981 = vrot.slane %v875, 1
      %v982 = vrot.slane %v802, 1
      %v983 = vsel %vm928, %v981, %v982
      %v984 = vrot.slane %v891, 1
      %v985 = vsel %vm928, %v982, %v984
      %v986 = vrot.slane %v876, 1
      %v987 = vrot.slane %v805, 1
      %v988 = vsel %vm928, %v986, %v987
      %v989 = vrot.slane %v892, 1
      %v990 = vsel %vm928, %v987, %v989
      %v991 = vrot.slane %v877, 1
      %v992 = vrot.slane %v808, 1
      %v993 = vsel %vm928, %v991, %v992
      %v994 = vrot.slane %v893, 1
      %v995 = vsel %vm928, %v992, %v994
      %v996 = vrot.slane %v878, 1
      %v997 = vrot.slane %v811, 1
      %v998 = vsel %vm928, %v996, %v997
      %v999 = vrot.slane %v894, 1
      %v1000 = vsel %vm928, %v997, %v999
      %v1001 = vrot.slane %v879, 1
      %v1002 = vrot.slane %v814, 1
      %v1003 = vsel %vm928, %v1001, %v1002
      %v1004 = vrot.slane %v895, 1
      %v1005 = vsel %vm928, %v1002, %v1004
      %vm1006 = vcmask 1045504
      %v1007 = vrot.slane 0.0, 2
      %v1008 = vsel %vm1006, %v1007, %v1007
      %v1009 = vrot.slane %v865, 2
      %v1010 = vrot.slane %v772, 2
      %v1011 = vsel %vm1006, %v1009, %v1010
      %v1012 = vrot.slane %v881, 2
      %v1013 = vsel %vm1006, %v1010, %v1012
      %v1014 = vrot.slane %v866, 2
      %v1015 = vrot.slane %v775, 2
      %v1016 = vsel %vm1006, %v1014, %v1015
      %v1017 = vrot.slane %v882, 2
      %v1018 = vsel %vm1006, %v1015, %v1017
      %v1019 = vrot.slane %v867, 2
      %v1020 = vrot.slane %v778, 2
      %v1021 = vsel %vm1006, %v1019, %v1020
      %v1022 = vrot.slane %v883, 2
      %v1023 = vsel %vm1006, %v1020, %v1022
      %v1024 = vrot.slane %v868, 2
      %v1025 = vrot.slane %v781, 2
      %v1026 = vsel %vm1006, %v1024, %v1025
      %v1027 = vrot.slane %v884, 2
      %v1028 = vsel %vm1006, %v1025, %v1027
      %v1029 = vrot.slane %v869, 2
      %v1030 = vrot.slane %v784, 2
      %v1031 = vsel %vm1006, %v1029, %v1030
      %v1032 = vrot.slane %v885, 2
      %v1033 = vsel %vm1006, %v1030, %v1032
      %v1034 = vrot.slane %v870, 2
      %v1035 = vrot.slane %v787, 2
      %v1036 = vsel %vm1006, %v1034, %v1035
      %v1037 = vrot.slane %v886, 2
      %v1038 = vsel %vm1006, %v1035, %v1037
      %v1039 = vrot.slane %v871, 2
      %v1040 = vrot.slane %v790, 2
      %v1041 = vsel %vm1006, %v1039, %v1040
      %v1042 = vrot.slane %v887, 2
      %v1043 = vsel %vm1006, %v1040, %v1042
      %v1044 = vrot.slane %v872, 2
      %v1045 = vrot.slane %v793, 2
      %v1046 = vsel %vm1006, %v1044, %v1045
      %v1047 = vrot.slane %v888, 2
      %v1048 = vsel %vm1006, %v1045, %v1047
      %v1049 = vrot.slane %v873, 2
      %v1050 = vrot.slane %v796, 2
      %v1051 = vsel %vm1006, %v1049, %v1050
      %v1052 = vrot.slane %v889, 2
      %v1053 = vsel %vm1006, %v1050, %v1052
      %v1054 = vrot.slane %v874, 2
      %v1055 = vrot.slane %v799, 2
      %v1056 = vsel %vm1006, %v1054, %v1055
      %v1057 = vrot.slane %v890, 2
      %v1058 = vsel %vm1006, %v1055, %v1057
      %v1059 = vrot.slane %v875, 2
      %v1060 = vrot.slane %v802, 2
      %v1061 = vsel %vm1006, %v1059, %v1060
      %v1062 = vrot.slane %v891, 2
      %v1063 = vsel %vm1006, %v1060, %v1062
      %v1064 = vrot.slane %v876, 2
      %v1065 = vrot.slane %v805, 2
      %v1066 = vsel %vm1006, %v1064, %v1065
      %v1067 = vrot.slane %v892, 2
      %v1068 = vsel %vm1006, %v1065, %v1067
      %v1069 = vrot.slane %v877, 2
      %v1070 = vrot.slane %v808, 2
      %v1071 = vsel %vm1006, %v1069, %v1070
      %v1072 = vrot.slane %v893, 2
      %v1073 = vsel %vm1006, %v1070, %v1072
      %v1074 = vrot.slane %v878, 2
      %v1075 = vrot.slane %v811, 2
      %v1076 = vsel %vm1006, %v1074, %v1075
      %v1077 = vrot.slane %v894, 2
      %v1078 = vsel %vm1006, %v1075, %v1077
      %v1079 = vrot.slane %v879, 2
      %v1080 = vrot.slane %v814, 2
      %v1081 = vsel %vm1006, %v1079, %v1080
      %v1082 = vrot.slane %v895, 2
      %v1083 = vsel %vm1006, %v1080, %v1082
      %v1086 = vrot.slane %v880, 1
      %v1087 = vrot.slane %v817, 1
      %v1088 = vsel %vm928, %v1086, %v1087
      %v1089 = vrot.slane %v896, 1
      %v1090 = vsel %vm928, %v1087, %v1089
      %v1091 = vrot.slane %v880, 2
      %v1092 = vrot.slane %v817, 2
      %v1093 = vsel %vm1006, %v1091, %v1092
      %v1094 = vrot.slane %v896, 2
      %v1095 = vsel %vm1006, %v1092, %v1094
      %1096 = vrot.lane.b32.xlu0 %v930, 4
      %v1097 = vpop.permute.xlu0 %1096
      %1098 = vrot.lane.b32.xlu0 %v933, 4
      %v1099 = vpop.permute.xlu0 %1098
      %1100 = vrot.lane.b32.xlu0 %v935, 4
      %v1101 = vpop.permute.xlu0 %1100
      %1102 = vrot.lane.b32.xlu0 %v938, 4
      %v1103 = vpop.permute.xlu0 %1102
      %1104 = vrot.lane.b32.xlu0 %v940, 4
      %v1105 = vpop.permute.xlu0 %1104
      %1106 = vrot.lane.b32.xlu0 %v943, 4
      %v1107 = vpop.permute.xlu0 %1106
      %1108 = vrot.lane.b32.xlu0 %v945, 4
      %v1109 = vpop.permute.xlu0 %1108
      %1110 = vrot.lane.b32.xlu0 %v948, 4
      %v1111 = vpop.permute.xlu0 %1110
      %1112 = vrot.lane.b32.xlu0 %v950, 4
      %v1113 = vpop.permute.xlu0 %1112
      %1114 = vrot.lane.b32.xlu0 %v953, 4
      %v1115 = vpop.permute.xlu0 %1114
      %1116 = vrot.lane.b32.xlu0 %v955, 4
      %v1117 = vpop.permute.xlu0 %1116
      %1118 = vrot.lane.b32.xlu0 %v958, 4
      %v1119 = vpop.permute.xlu0 %1118
      %1120 = vrot.lane.b32.xlu0 %v960, 4
      %v1121 = vpop.permute.xlu0 %1120
      %1122 = vrot.lane.b32.xlu0 %v963, 4
      %v1123 = vpop.permute.xlu0 %1122
      %1124 = vrot.lane.b32.xlu0 %v965, 4
      %v1125 = vpop.permute.xlu0 %1124
      %1126 = vrot.lane.b32.xlu0 %v968, 4
      %v1127 = vpop.permute.xlu0 %1126
      %1128 = vrot.lane.b32.xlu0 %v970, 4
      %v1129 = vpop.permute.xlu0 %1128
      %1130 = vrot.lane.b32.xlu0 %v973, 4
      %v1131 = vpop.permute.xlu0 %1130
      %1132 = vrot.lane.b32.xlu0 %v975, 4
      %v1133 = vpop.permute.xlu0 %1132
      %1134 = vrot.lane.b32.xlu0 %v978, 4
      %v1135 = vpop.permute.xlu0 %1134
      %1136 = vrot.lane.b32.xlu0 %v980, 4
      %v1137 = vpop.permute.xlu0 %1136
      %1138 = vrot.lane.b32.xlu0 %v983, 4
      %v1139 = vpop.permute.xlu0 %1138
      %1140 = vrot.lane.b32.xlu0 %v985, 4
      %v1141 = vpop.permute.xlu0 %1140
      %1142 = vrot.lane.b32.xlu0 %v988, 4
      %v1143 = vpop.permute.xlu0 %1142
      %1144 = vrot.lane.b32.xlu0 %v990, 4
      %v1145 = vpop.permute.xlu0 %1144
      %1146 = vrot.lane.b32.xlu0 %v993, 4
      %v1147 = vpop.permute.xlu0 %1146
      %1148 = vrot.lane.b32.xlu0 %v995, 4
      %v1149 = vpop.permute.xlu0 %1148
      %1150 = vrot.lane.b32.xlu0 %v998, 4
      %v1151 = vpop.permute.xlu0 %1150
      %1152 = vrot.lane.b32.xlu0 %v1000, 4
      %v1153 = vpop.permute.xlu0 %1152
      %1154 = vrot.lane.b32.xlu0 %v1003, 4
      %v1155 = vpop.permute.xlu0 %1154
      %1156 = vrot.lane.b32.xlu0 %v1005, 4
      %v1157 = vpop.permute.xlu0 %1156
      %1189 = vrot.lane.b32.xlu0 %v1008, 8
      %v1190 = vpop.permute.xlu0 %1189
      %1191 = vrot.lane.b32.xlu0 %v1011, 8
      %v1192 = vpop.permute.xlu0 %1191
      %1193 = vrot.lane.b32.xlu0 %v1013, 8
      %v1194 = vpop.permute.xlu0 %1193
      %1195 = vrot.lane.b32.xlu0 %v1016, 8
      %v1196 = vpop.permute.xlu0 %1195
      %1197 = vrot.lane.b32.xlu0 %v1018, 8
      %v1198 = vpop.permute.xlu0 %1197
      %1199 = vrot.lane.b32.xlu0 %v1021, 8
      %v1200 = vpop.permute.xlu0 %1199
      %1201 = vrot.lane.b32.xlu0 %v1023, 8
      %v1202 = vpop.permute.xlu0 %1201
      %1203 = vrot.lane.b32.xlu0 %v1026, 8
      %v1204 = vpop.permute.xlu0 %1203
      %1205 = vrot.lane.b32.xlu0 %v1028, 8
      %v1206 = vpop.permute.xlu0 %1205
      %1207 = vrot.lane.b32.xlu0 %v1031, 8
      %v1208 = vpop.permute.xlu0 %1207
      %1209 = vrot.lane.b32.xlu0 %v1033, 8
      %v1210 = vpop.permute.xlu0 %1209
      %1211 = vrot.lane.b32.xlu0 %v1036, 8
      %v1212 = vpop.permute.xlu0 %1211
      %1213 = vrot.lane.b32.xlu0 %v1038, 8
      %v1214 = vpop.permute.xlu0 %1213
      %1215 = vrot.lane.b32.xlu0 %v1041, 8
      %v1216 = vpop.permute.xlu0 %1215
      %1217 = vrot.lane.b32.xlu0 %v1043, 8
      %v1218 = vpop.permute.xlu0 %1217
      %1219 = vrot.lane.b32.xlu0 %v1046, 8
      %v1220 = vpop.permute.xlu0 %1219
      %1221 = vrot.lane.b32.xlu0 %v1048, 8
      %v1222 = vpop.permute.xlu0 %1221
      %1223 = vrot.lane.b32.xlu0 %v1051, 8
      %v1224 = vpop.permute.xlu0 %1223
      %1225 = vrot.lane.b32.xlu0 %v1053, 8
      %v1226 = vpop.permute.xlu0 %1225
      %1227 = vrot.lane.b32.xlu0 %v1056, 8
      %v1228 = vpop.permute.xlu0 %1227
      %1229 = vrot.lane.b32.xlu0 %v1058, 8
      %v1230 = vpop.permute.xlu0 %1229
      %1231 = vrot.lane.b32.xlu0 %v1061, 8
      %v1232 = vpop.permute.xlu0 %1231
      %1233 = vrot.lane.b32.xlu0 %v1063, 8
      %v1234 = vpop.permute.xlu0 %1233
      %1235 = vrot.lane.b32.xlu0 %v1066, 8
      %v1236 = vpop.permute.xlu0 %1235
      %1237 = vrot.lane.b32.xlu0 %v1068, 8
      %v1238 = vpop.permute.xlu0 %1237
      %1239 = vrot.lane.b32.xlu0 %v1071, 8
      %v1240 = vpop.permute.xlu0 %1239
      %1241 = vrot.lane.b32.xlu0 %v1073, 8
      %v1242 = vpop.permute.xlu0 %1241
      %1243 = vrot.lane.b32.xlu0 %v1076, 8
      %v1244 = vpop.permute.xlu0 %1243
      %1245 = vrot.lane.b32.xlu0 %v1078, 8
      %v1246 = vpop.permute.xlu0 %1245
      %1247 = vrot.lane.b32.xlu0 %v1081, 8
      %v1248 = vpop.permute.xlu0 %1247
      %1249 = vrot.lane.b32.xlu0 %v1083, 8
      %v1250 = vpop.permute.xlu0 %1249
      %1282 = vrot.lane.b32.xlu0 %v865, 12
      %v1283 = vpop.permute.xlu0 %1282
      %1284 = vrot.lane.b32.xlu0 %v772, 12
      %v1285 = vpop.permute.xlu0 %1284
      %1286 = vrot.lane.b32.xlu0 %v866, 12
      %v1287 = vpop.permute.xlu0 %1286
      %1288 = vrot.lane.b32.xlu0 %v775, 12
      %v1289 = vpop.permute.xlu0 %1288
      %1290 = vrot.lane.b32.xlu0 %v867, 12
      %v1291 = vpop.permute.xlu0 %1290
      %1292 = vrot.lane.b32.xlu0 %v778, 12
      %v1293 = vpop.permute.xlu0 %1292
      %1294 = vrot.lane.b32.xlu0 %v868, 12
      %v1295 = vpop.permute.xlu0 %1294
      %1296 = vrot.lane.b32.xlu0 %v781, 12
      %v1297 = vpop.permute.xlu0 %1296
      %1298 = vrot.lane.b32.xlu0 %v869, 12
      %v1299 = vpop.permute.xlu0 %1298
      %1300 = vrot.lane.b32.xlu0 %v784, 12
      %v1301 = vpop.permute.xlu0 %1300
      %1302 = vrot.lane.b32.xlu0 %v870, 12
      %v1303 = vpop.permute.xlu0 %1302
      %1304 = vrot.lane.b32.xlu0 %v787, 12
      %v1305 = vpop.permute.xlu0 %1304
      %1306 = vrot.lane.b32.xlu0 %v871, 12
      %v1307 = vpop.permute.xlu0 %1306
      %1308 = vrot.lane.b32.xlu0 %v790, 12
      %v1309 = vpop.permute.xlu0 %1308
      %1310 = vrot.lane.b32.xlu0 %v872, 12
      %v1311 = vpop.permute.xlu0 %1310
      %1312 = vrot.lane.b32.xlu0 %v793, 12
      %v1313 = vpop.permute.xlu0 %1312
      %1314 = vrot.lane.b32.xlu0 %v873, 12
      %v1315 = vpop.permute.xlu0 %1314
      %1316 = vrot.lane.b32.xlu0 %v796, 12
      %v1317 = vpop.permute.xlu0 %1316
      %1318 = vrot.lane.b32.xlu0 %v874, 12
      %v1319 = vpop.permute.xlu0 %1318
      %1320 = vrot.lane.b32.xlu0 %v799, 12
      %v1321 = vpop.permute.xlu0 %1320
      %1322 = vrot.lane.b32.xlu0 %v875, 12
      %v1323 = vpop.permute.xlu0 %1322
      %1324 = vrot.lane.b32.xlu0 %v802, 12
      %v1325 = vpop.permute.xlu0 %1324
      %1326 = vrot.lane.b32.xlu0 %v876, 12
      %v1327 = vpop.permute.xlu0 %1326
      %1328 = vrot.lane.b32.xlu0 %v805, 12
      %v1329 = vpop.permute.xlu0 %1328
      %1330 = vrot.lane.b32.xlu0 %v877, 12
      %v1331 = vpop.permute.xlu0 %1330
      %1332 = vrot.lane.b32.xlu0 %v808, 12
      %v1333 = vpop.permute.xlu0 %1332
      %1334 = vrot.lane.b32.xlu0 %v878, 12
      %v1335 = vpop.permute.xlu0 %1334
      %1336 = vrot.lane.b32.xlu0 %v811, 12
      %v1337 = vpop.permute.xlu0 %1336
      %1338 = vrot.lane.b32.xlu0 %v879, 12
      %v1339 = vpop.permute.xlu0 %1338
      %1340 = vrot.lane.b32.xlu0 %v814, 12
      %v1341 = vpop.permute.xlu0 %1340
      %1342 = vrot.lane.b32.xlu0 %v880, 12
      %v1343 = vpop.permute.xlu0 %1342
      %1344 = vrot.lane.b32.xlu0 %v817, 12
      %v1345 = vpop.permute.xlu0 %1344
      %1378 = vrot.lane.b32.xlu0 %v933, 16
      %v1379 = vpop.permute.xlu0 %1378
      %1380 = vrot.lane.b32.xlu0 %v935, 16
      %v1381 = vpop.permute.xlu0 %1380
      %1382 = vrot.lane.b32.xlu0 %v938, 16
      %v1383 = vpop.permute.xlu0 %1382
      %1384 = vrot.lane.b32.xlu0 %v940, 16
      %v1385 = vpop.permute.xlu0 %1384
      %1386 = vrot.lane.b32.xlu0 %v943, 16
      %v1387 = vpop.permute.xlu0 %1386
      %1388 = vrot.lane.b32.xlu0 %v945, 16
      %v1389 = vpop.permute.xlu0 %1388
      %1390 = vrot.lane.b32.xlu0 %v948, 16
      %v1391 = vpop.permute.xlu0 %1390
      %1392 = vrot.lane.b32.xlu0 %v950, 16
      %v1393 = vpop.permute.xlu0 %1392
      %1394 = vrot.lane.b32.xlu0 %v953, 16
      %v1395 = vpop.permute.xlu0 %1394
      %1396 = vrot.lane.b32.xlu0 %v955, 16
      %v1397 = vpop.permute.xlu0 %1396
      %1398 = vrot.lane.b32.xlu0 %v958, 16
      %v1399 = vpop.permute.xlu0 %1398
      %1400 = vrot.lane.b32.xlu0 %v960, 16
      %v1401 = vpop.permute.xlu0 %1400
      %1402 = vrot.lane.b32.xlu0 %v963, 16
      %v1403 = vpop.permute.xlu0 %1402
      %1404 = vrot.lane.b32.xlu0 %v965, 16
      %v1405 = vpop.permute.xlu0 %1404
      %1406 = vrot.lane.b32.xlu0 %v968, 16
      %v1407 = vpop.permute.xlu0 %1406
      %1408 = vrot.lane.b32.xlu0 %v970, 16
      %v1409 = vpop.permute.xlu0 %1408
      %1410 = vrot.lane.b32.xlu0 %v973, 16
      %v1411 = vpop.permute.xlu0 %1410
      %1412 = vrot.lane.b32.xlu0 %v975, 16
      %v1413 = vpop.permute.xlu0 %1412
      %1414 = vrot.lane.b32.xlu0 %v978, 16
      %v1415 = vpop.permute.xlu0 %1414
      %1416 = vrot.lane.b32.xlu0 %v980, 16
      %v1417 = vpop.permute.xlu0 %1416
      %1418 = vrot.lane.b32.xlu0 %v983, 16
      %v1419 = vpop.permute.xlu0 %1418
      %1420 = vrot.lane.b32.xlu0 %v985, 16
      %v1421 = vpop.permute.xlu0 %1420
      %1422 = vrot.lane.b32.xlu0 %v988, 16
      %v1423 = vpop.permute.xlu0 %1422
      %1424 = vrot.lane.b32.xlu0 %v990, 16
      %v1425 = vpop.permute.xlu0 %1424
      %1426 = vrot.lane.b32.xlu0 %v993, 16
      %v1427 = vpop.permute.xlu0 %1426
      %1428 = vrot.lane.b32.xlu0 %v995, 16
      %v1429 = vpop.permute.xlu0 %1428
      %1430 = vrot.lane.b32.xlu0 %v998, 16
      %v1431 = vpop.permute.xlu0 %1430
      %1432 = vrot.lane.b32.xlu0 %v1000, 16
      %v1433 = vpop.permute.xlu0 %1432
      %1434 = vrot.lane.b32.xlu0 %v1003, 16
      %v1435 = vpop.permute.xlu0 %1434
      %1436 = vrot.lane.b32.xlu0 %v1005, 16
      %v1437 = vpop.permute.xlu0 %1436
      %1438 = vrot.lane.b32.xlu0 %v1088, 16
      %v1439 = vpop.permute.xlu0 %1438
      %1440 = vrot.lane.b32.xlu0 %v1090, 16
      %v1441 = vpop.permute.xlu0 %1440
      %1474 = vrot.lane.b32.xlu0 %v1011, 20
      %v1475 = vpop.permute.xlu0 %1474
      %1476 = vrot.lane.b32.xlu0 %v1013, 20
      %v1477 = vpop.permute.xlu0 %1476
      %1478 = vrot.lane.b32.xlu0 %v1016, 20
      %v1479 = vpop.permute.xlu0 %1478
      %1480 = vrot.lane.b32.xlu0 %v1018, 20
      %v1481 = vpop.permute.xlu0 %1480
      %1482 = vrot.lane.b32.xlu0 %v1021, 20
      %v1483 = vpop.permute.xlu0 %1482
      %1484 = vrot.lane.b32.xlu0 %v1023, 20
      %v1485 = vpop.permute.xlu0 %1484
      %1486 = vrot.lane.b32.xlu0 %v1026, 20
      %v1487 = vpop.permute.xlu0 %1486
      %1488 = vrot.lane.b32.xlu0 %v1028, 20
      %v1489 = vpop.permute.xlu0 %1488
      %1490 = vrot.lane.b32.xlu0 %v1031, 20
      %v1491 = vpop.permute.xlu0 %1490
      %1492 = vrot.lane.b32.xlu0 %v1033, 20
      %v1493 = vpop.permute.xlu0 %1492
      %1494 = vrot.lane.b32.xlu0 %v1036, 20
      %v1495 = vpop.permute.xlu0 %1494
      %1496 = vrot.lane.b32.xlu0 %v1038, 20
      %v1497 = vpop.permute.xlu0 %1496
      %1498 = vrot.lane.b32.xlu0 %v1041, 20
      %v1499 = vpop.permute.xlu0 %1498
      %1500 = vrot.lane.b32.xlu0 %v1043, 20
      %v1501 = vpop.permute.xlu0 %1500
      %1502 = vrot.lane.b32.xlu0 %v1046, 20
      %v1503 = vpop.permute.xlu0 %1502
      %1504 = vrot.lane.b32.xlu0 %v1048, 20
      %v1505 = vpop.permute.xlu0 %1504
      %1506 = vrot.lane.b32.xlu0 %v1051, 20
      %v1507 = vpop.permute.xlu0 %1506
      %1508 = vrot.lane.b32.xlu0 %v1053, 20
      %v1509 = vpop.permute.xlu0 %1508
      %1510 = vrot.lane.b32.xlu0 %v1056, 20
      %v1511 = vpop.permute.xlu0 %1510
      %1512 = vrot.lane.b32.xlu0 %v1058, 20
      %v1513 = vpop.permute.xlu0 %1512
      %1514 = vrot.lane.b32.xlu0 %v1061, 20
      %v1515 = vpop.permute.xlu0 %1514
      %1516 = vrot.lane.b32.xlu0 %v1063, 20
      %v1517 = vpop.permute.xlu0 %1516
      %1518 = vrot.lane.b32.xlu0 %v1066, 20
      %v1519 = vpop.permute.xlu0 %1518
      %1520 = vrot.lane.b32.xlu0 %v1068, 20
      %v1521 = vpop.permute.xlu0 %1520
      %1522 = vrot.lane.b32.xlu0 %v1071, 20
      %v1523 = vpop.permute.xlu0 %1522
      %1524 = vrot.lane.b32.xlu0 %v1073, 20
      %v1525 = vpop.permute.xlu0 %1524
      %1526 = vrot.lane.b32.xlu0 %v1076, 20
      %v1527 = vpop.permute.xlu0 %1526
      %1528 = vrot.lane.b32.xlu0 %v1078, 20
      %v1529 = vpop.permute.xlu0 %1528
      %1530 = vrot.lane.b32.xlu0 %v1081, 20
      %v1531 = vpop.permute.xlu0 %1530
      %1532 = vrot.lane.b32.xlu0 %v1083, 20
      %v1533 = vpop.permute.xlu0 %1532
      %1534 = vrot.lane.b32.xlu0 %v1093, 20
      %v1535 = vpop.permute.xlu0 %1534
      %1536 = vrot.lane.b32.xlu0 %v1095, 20
      %v1537 = vpop.permute.xlu0 %1536
      %1570 = vrot.lane.b32.xlu0 %v866, 24
      %v1571 = vpop.permute.xlu0 %1570
      %1572 = vrot.lane.b32.xlu0 %v775, 24
      %v1573 = vpop.permute.xlu0 %1572
      %1574 = vrot.lane.b32.xlu0 %v867, 24
      %v1575 = vpop.permute.xlu0 %1574
      %1576 = vrot.lane.b32.xlu0 %v778, 24
      %v1577 = vpop.permute.xlu0 %1576
      %1578 = vrot.lane.b32.xlu0 %v868, 24
      %v1579 = vpop.permute.xlu0 %1578
      %1580 = vrot.lane.b32.xlu0 %v781, 24
      %v1581 = vpop.permute.xlu0 %1580
      %1582 = vrot.lane.b32.xlu0 %v869, 24
      %v1583 = vpop.permute.xlu0 %1582
      %1584 = vrot.lane.b32.xlu0 %v784, 24
      %v1585 = vpop.permute.xlu0 %1584
      %1586 = vrot.lane.b32.xlu0 %v870, 24
      %v1587 = vpop.permute.xlu0 %1586
      %1588 = vrot.lane.b32.xlu0 %v787, 24
      %v1589 = vpop.permute.xlu0 %1588
      %1590 = vrot.lane.b32.xlu0 %v871, 24
      %v1591 = vpop.permute.xlu0 %1590
      %1592 = vrot.lane.b32.xlu0 %v790, 24
      %v1593 = vpop.permute.xlu0 %1592
      %1594 = vrot.lane.b32.xlu0 %v872, 24
      %v1595 = vpop.permute.xlu0 %1594
      %1596 = vrot.lane.b32.xlu0 %v793, 24
      %v1597 = vpop.permute.xlu0 %1596
      %1598 = vrot.lane.b32.xlu0 %v873, 24
      %v1599 = vpop.permute.xlu0 %1598
      %1600 = vrot.lane.b32.xlu0 %v796, 24
      %v1601 = vpop.permute.xlu0 %1600
      %1602 = vrot.lane.b32.xlu0 %v874, 24
      %v1603 = vpop.permute.xlu0 %1602
      %1604 = vrot.lane.b32.xlu0 %v799, 24
      %v1605 = vpop.permute.xlu0 %1604
      %1606 = vrot.lane.b32.xlu0 %v875, 24
      %v1607 = vpop.permute.xlu0 %1606
      %1608 = vrot.lane.b32.xlu0 %v802, 24
      %v1609 = vpop.permute.xlu0 %1608
      %1610 = vrot.lane.b32.xlu0 %v876, 24
      %v1611 = vpop.permute.xlu0 %1610
      %1612 = vrot.lane.b32.xlu0 %v805, 24
      %v1613 = vpop.permute.xlu0 %1612
      %1614 = vrot.lane.b32.xlu0 %v877, 24
      %v1615 = vpop.permute.xlu0 %1614
      %1616 = vrot.lane.b32.xlu0 %v808, 24
      %v1617 = vpop.permute.xlu0 %1616
      %1618 = vrot.lane.b32.xlu0 %v878, 24
      %v1619 = vpop.permute.xlu0 %1618
      %1620 = vrot.lane.b32.xlu0 %v811, 24
      %v1621 = vpop.permute.xlu0 %1620
      %1622 = vrot.lane.b32.xlu0 %v879, 24
      %v1623 = vpop.permute.xlu0 %1622
      %1624 = vrot.lane.b32.xlu0 %v814, 24
      %v1625 = vpop.permute.xlu0 %1624
      %1626 = vrot.lane.b32.xlu0 %v880, 24
      %v1627 = vpop.permute.xlu0 %1626
      %1628 = vrot.lane.b32.xlu0 %v817, 24
      %v1629 = vpop.permute.xlu0 %1628
      %1630 = vrot.lane.b32.xlu0 0.0, 24
      %v1631 = vpop.permute.xlu0 %1630
      %1663 = vrot.lane.b32.xlu0 %v938, 28
      %v1664 = vpop.permute.xlu0 %1663
      %1665 = vrot.lane.b32.xlu0 %v940, 28
      %v1666 = vpop.permute.xlu0 %1665
      %1667 = vrot.lane.b32.xlu0 %v943, 28
      %v1668 = vpop.permute.xlu0 %1667
      %1669 = vrot.lane.b32.xlu0 %v945, 28
      %v1670 = vpop.permute.xlu0 %1669
      %1671 = vrot.lane.b32.xlu0 %v948, 28
      %v1672 = vpop.permute.xlu0 %1671
      %1673 = vrot.lane.b32.xlu0 %v950, 28
      %v1674 = vpop.permute.xlu0 %1673
      %1675 = vrot.lane.b32.xlu0 %v953, 28
      %v1676 = vpop.permute.xlu0 %1675
      %1677 = vrot.lane.b32.xlu0 %v955, 28
      %v1678 = vpop.permute.xlu0 %1677
      %1679 = vrot.lane.b32.xlu0 %v958, 28
      %v1680 = vpop.permute.xlu0 %1679
      %1681 = vrot.lane.b32.xlu0 %v960, 28
      %v1682 = vpop.permute.xlu0 %1681
      %1683 = vrot.lane.b32.xlu0 %v963, 28
      %v1684 = vpop.permute.xlu0 %1683
      %1685 = vrot.lane.b32.xlu0 %v965, 28
      %v1686 = vpop.permute.xlu0 %1685
      %1687 = vrot.lane.b32.xlu0 %v968, 28
      %v1688 = vpop.permute.xlu0 %1687
      %1689 = vrot.lane.b32.xlu0 %v970, 28
      %v1690 = vpop.permute.xlu0 %1689
      %1691 = vrot.lane.b32.xlu0 %v973, 28
      %v1692 = vpop.permute.xlu0 %1691
      %1693 = vrot.lane.b32.xlu0 %v975, 28
      %v1694 = vpop.permute.xlu0 %1693
      %1695 = vrot.lane.b32.xlu0 %v978, 28
      %v1696 = vpop.permute.xlu0 %1695
      %1697 = vrot.lane.b32.xlu0 %v980, 28
      %v1698 = vpop.permute.xlu0 %1697
      %1699 = vrot.lane.b32.xlu0 %v983, 28
      %v1700 = vpop.permute.xlu0 %1699
      %1701 = vrot.lane.b32.xlu0 %v985, 28
      %v1702 = vpop.permute.xlu0 %1701
      %1703 = vrot.lane.b32.xlu0 %v988, 28
      %v1704 = vpop.permute.xlu0 %1703
      %1705 = vrot.lane.b32.xlu0 %v990, 28
      %v1706 = vpop.permute.xlu0 %1705
      %1707 = vrot.lane.b32.xlu0 %v993, 28
      %v1708 = vpop.permute.xlu0 %1707
      %1709 = vrot.lane.b32.xlu0 %v995, 28
      %v1710 = vpop.permute.xlu0 %1709
      %1711 = vrot.lane.b32.xlu0 %v998, 28
      %v1712 = vpop.permute.xlu0 %1711
      %1713 = vrot.lane.b32.xlu0 %v1000, 28
      %v1714 = vpop.permute.xlu0 %1713
      %1715 = vrot.lane.b32.xlu0 %v1003, 28
      %v1716 = vpop.permute.xlu0 %1715
      %1717 = vrot.lane.b32.xlu0 %v1005, 28
      %v1718 = vpop.permute.xlu0 %1717
      %1719 = vrot.lane.b32.xlu0 %v1088, 28
      %v1720 = vpop.permute.xlu0 %1719
      %1721 = vrot.lane.b32.xlu0 %v1090, 28
      %v1722 = vpop.permute.xlu0 %1721
      %1723 = vrot.lane.b32.xlu0 %v930, 28
      %v1724 = vpop.permute.xlu0 %1723
      %1756 = vrot.lane.b32.xlu0 %v1016, 32
      %v1757 = vpop.permute.xlu0 %1756
      %1758 = vrot.lane.b32.xlu0 %v1018, 32
      %v1759 = vpop.permute.xlu0 %1758
      %1760 = vrot.lane.b32.xlu0 %v1021, 32
      %v1761 = vpop.permute.xlu0 %1760
      %1762 = vrot.lane.b32.xlu0 %v1023, 32
      %v1763 = vpop.permute.xlu0 %1762
      %1764 = vrot.lane.b32.xlu0 %v1026, 32
      %v1765 = vpop.permute.xlu0 %1764
      %1766 = vrot.lane.b32.xlu0 %v1028, 32
      %v1767 = vpop.permute.xlu0 %1766
      %1768 = vrot.lane.b32.xlu0 %v1031, 32
      %v1769 = vpop.permute.xlu0 %1768
      %1770 = vrot.lane.b32.xlu0 %v1033, 32
      %v1771 = vpop.permute.xlu0 %1770
      %1772 = vrot.lane.b32.xlu0 %v1036, 32
      %v1773 = vpop.permute.xlu0 %1772
      %1774 = vrot.lane.b32.xlu0 %v1038, 32
      %v1775 = vpop.permute.xlu0 %1774
      %1776 = vrot.lane.b32.xlu0 %v1041, 32
      %v1777 = vpop.permute.xlu0 %1776
      %1778 = vrot.lane.b32.xlu0 %v1043, 32
      %v1779 = vpop.permute.xlu0 %1778
      %1780 = vrot.lane.b32.xlu0 %v1046, 32
      %v1781 = vpop.permute.xlu0 %1780
      %1782 = vrot.lane.b32.xlu0 %v1048, 32
      %v1783 = vpop.permute.xlu0 %1782
      %1784 = vrot.lane.b32.xlu0 %v1051, 32
      %v1785 = vpop.permute.xlu0 %1784
      %1786 = vrot.lane.b32.xlu0 %v1053, 32
      %v1787 = vpop.permute.xlu0 %1786
      %1788 = vrot.lane.b32.xlu0 %v1056, 32
      %v1789 = vpop.permute.xlu0 %1788
      %1790 = vrot.lane.b32.xlu0 %v1058, 32
      %v1791 = vpop.permute.xlu0 %1790
      %1792 = vrot.lane.b32.xlu0 %v1061, 32
      %v1793 = vpop.permute.xlu0 %1792
      %1794 = vrot.lane.b32.xlu0 %v1063, 32
      %v1795 = vpop.permute.xlu0 %1794
      %1796 = vrot.lane.b32.xlu0 %v1066, 32
      %v1797 = vpop.permute.xlu0 %1796
      %1798 = vrot.lane.b32.xlu0 %v1068, 32
      %v1799 = vpop.permute.xlu0 %1798
      %1800 = vrot.lane.b32.xlu0 %v1071, 32
      %v1801 = vpop.permute.xlu0 %1800
      %1802 = vrot.lane.b32.xlu0 %v1073, 32
      %v1803 = vpop.permute.xlu0 %1802
      %1804 = vrot.lane.b32.xlu0 %v1076, 32
      %v1805 = vpop.permute.xlu0 %1804
      %1806 = vrot.lane.b32.xlu0 %v1078, 32
      %v1807 = vpop.permute.xlu0 %1806
      %1808 = vrot.lane.b32.xlu0 %v1081, 32
      %v1809 = vpop.permute.xlu0 %1808
      %1810 = vrot.lane.b32.xlu0 %v1083, 32
      %v1811 = vpop.permute.xlu0 %1810
      %1812 = vrot.lane.b32.xlu0 %v1093, 32
      %v1813 = vpop.permute.xlu0 %1812
      %1814 = vrot.lane.b32.xlu0 %v1095, 32
      %v1815 = vpop.permute.xlu0 %1814
      %1816 = vrot.lane.b32.xlu0 %v1008, 32
      %v1817 = vpop.permute.xlu0 %1816
      %v1849 = vsel %vm379, 0.0, %v1097
      %v1850 = vsel %vm379, %v865, %v1099
      %v1851 = vsel %vm379, %v772, %v1101
      %v1852 = vsel %vm379, %v866, %v1103
      %v1853 = vsel %vm379, %v775, %v1105
      %v1854 = vsel %vm379, %v867, %v1107
      %v1855 = vsel %vm379, %v778, %v1109
      %v1856 = vsel %vm379, %v868, %v1111
      %v1857 = vsel %vm379, %v781, %v1113
      %v1858 = vsel %vm379, %v869, %v1115
      %v1859 = vsel %vm379, %v784, %v1117
      %v1860 = vsel %vm379, %v870, %v1119
      %v1861 = vsel %vm379, %v787, %v1121
      %v1862 = vsel %vm379, %v871, %v1123
      %v1863 = vsel %vm379, %v790, %v1125
      %v1864 = vsel %vm379, %v872, %v1127
      %v1865 = vsel %vm379, %v793, %v1129
      %v1866 = vsel %vm379, %v873, %v1131
      %v1867 = vsel %vm379, %v796, %v1133
      %v1868 = vsel %vm379, %v874, %v1135
      %v1869 = vsel %vm379, %v799, %v1137
      %v1870 = vsel %vm379, %v875, %v1139
      %v1871 = vsel %vm379, %v802, %v1141
      %v1872 = vsel %vm379, %v876, %v1143
      %v1873 = vsel %vm379, %v805, %v1145
      %v1874 = vsel %vm379, %v877, %v1147
      %v1875 = vsel %vm379, %v808, %v1149
      %v1876 = vsel %vm379, %v878, %v1151
      %v1877 = vsel %vm379, %v811, %v1153
      %v1878 = vsel %vm379, %v879, %v1155
      %v1879 = vsel %vm379, %v814, %v1157
      %vm1880 = vcmask 64512
      %v1881 = vsel %vm1880, %v1849, %v1190
      %v1882 = vsel %vm1880, %v1850, %v1192
      %v1883 = vsel %vm1880, %v1851, %v1194
      %v1884 = vsel %vm1880, %v1852, %v1196
      %v1885 = vsel %vm1880, %v1853, %v1198
      %v1886 = vsel %vm1880, %v1854, %v1200
      %v1887 = vsel %vm1880, %v1855, %v1202
      %v1888 = vsel %vm1880, %v1856, %v1204
      %v1889 = vsel %vm1880, %v1857, %v1206
      %v1890 = vsel %vm1880, %v1858, %v1208
      %v1891 = vsel %vm1880, %v1859, %v1210
      %v1892 = vsel %vm1880, %v1860, %v1212
      %v1893 = vsel %vm1880, %v1861, %v1214
      %v1894 = vsel %vm1880, %v1862, %v1216
      %v1895 = vsel %vm1880, %v1863, %v1218
      %v1896 = vsel %vm1880, %v1864, %v1220
      %v1897 = vsel %vm1880, %v1865, %v1222
      %v1898 = vsel %vm1880, %v1866, %v1224
      %v1899 = vsel %vm1880, %v1867, %v1226
      %v1900 = vsel %vm1880, %v1868, %v1228
      %v1901 = vsel %vm1880, %v1869, %v1230
      %v1902 = vsel %vm1880, %v1870, %v1232
      %v1903 = vsel %vm1880, %v1871, %v1234
      %v1904 = vsel %vm1880, %v1872, %v1236
      %v1905 = vsel %vm1880, %v1873, %v1238
      %v1906 = vsel %vm1880, %v1874, %v1240
      %v1907 = vsel %vm1880, %v1875, %v1242
      %v1908 = vsel %vm1880, %v1876, %v1244
      %v1909 = vsel %vm1880, %v1877, %v1246
      %v1910 = vsel %vm1880, %v1878, %v1248
      %v1911 = vsel %vm1880, %v1879, %v1250
      %vm1912 = vcmask 97280
      %v1913 = vsel %vm1912, %v1881, %v1283
      %v1914 = vsel %vm1912, %v1881, %v1285
      %v1915 = vsel %vm1912, %v1882, %v1287
      %v1916 = vsel %vm1912, %v1883, %v1289
      %v1917 = vsel %vm1912, %v1884, %v1291
      %v1918 = vsel %vm1912, %v1885, %v1293
      %v1919 = vsel %vm1912, %v1886, %v1295
      %v1920 = vsel %vm1912, %v1887, %v1297
      %v1921 = vsel %vm1912, %v1888, %v1299
      %v1922 = vsel %vm1912, %v1889, %v1301
      %v1923 = vsel %vm1912, %v1890, %v1303
      %v1924 = vsel %vm1912, %v1891, %v1305
      %v1925 = vsel %vm1912, %v1892, %v1307
      %v1926 = vsel %vm1912, %v1893, %v1309
      %v1927 = vsel %vm1912, %v1894, %v1311
      %v1928 = vsel %vm1912, %v1895, %v1313
      %v1929 = vsel %vm1912, %v1896, %v1315
      %v1930 = vsel %vm1912, %v1897, %v1317
      %v1931 = vsel %vm1912, %v1898, %v1319
      %v1932 = vsel %vm1912, %v1899, %v1321
      %v1933 = vsel %vm1912, %v1900, %v1323
      %v1934 = vsel %vm1912, %v1901, %v1325
      %v1935 = vsel %vm1912, %v1902, %v1327
      %v1936 = vsel %vm1912, %v1903, %v1329
      %v1937 = vsel %vm1912, %v1904, %v1331
      %v1938 = vsel %vm1912, %v1905, %v1333
      %v1939 = vsel %vm1912, %v1906, %v1335
      %v1940 = vsel %vm1912, %v1907, %v1337
      %v1941 = vsel %vm1912, %v1908, %v1339
      %v1942 = vsel %vm1912, %v1909, %v1341
      %v1943 = vsel %vm1912, %v1910, %v1343
      %v1944 = vsel %vm1912, %v1911, %v1345
      %vm1945 = vcmask 130048
      %v1946 = vsel %vm1945, %v1913, %v1379
      %v1947 = vsel %vm1945, %v1914, %v1381
      %v1948 = vsel %vm1945, %v1915, %v1383
      %v1949 = vsel %vm1945, %v1916, %v1385
      %v1950 = vsel %vm1945, %v1917, %v1387
      %v1951 = vsel %vm1945, %v1918, %v1389
      %v1952 = vsel %vm1945, %v1919, %v1391
      %v1953 = vsel %vm1945, %v1920, %v1393
      %v1954 = vsel %vm1945, %v1921, %v1395
      %v1955 = vsel %vm1945, %v1922, %v1397
      %v1956 = vsel %vm1945, %v1923, %v1399
      %v1957 = vsel %vm1945, %v1924, %v1401
      %v1958 = vsel %vm1945, %v1925, %v1403
      %v1959 = vsel %vm1945, %v1926, %v1405
      %v1960 = vsel %vm1945, %v1927, %v1407
      %v1961 = vsel %vm1945, %v1928, %v1409
      %v1962 = vsel %vm1945, %v1929, %v1411
      %v1963 = vsel %vm1945, %v1930, %v1413
      %v1964 = vsel %vm1945, %v1931, %v1415
      %v1965 = vsel %vm1945, %v1932, %v1417
      %v1966 = vsel %vm1945, %v1933, %v1419
      %v1967 = vsel %vm1945, %v1934, %v1421
      %v1968 = vsel %vm1945, %v1935, %v1423
      %v1969 = vsel %vm1945, %v1936, %v1425
      %v1970 = vsel %vm1945, %v1937, %v1427
      %v1971 = vsel %vm1945, %v1938, %v1429
      %v1972 = vsel %vm1945, %v1939, %v1431
      %v1973 = vsel %vm1945, %v1940, %v1433
      %v1974 = vsel %vm1945, %v1941, %v1435
      %v1975 = vsel %vm1945, %v1942, %v1437
      %v1976 = vsel %vm1945, %v1943, %v1439
      %v1977 = vsel %vm1945, %v1944, %v1441
      %vm1978 = vcmask 162816
      %v1979 = vsel %vm1978, %v1946, %v1475
      %v1980 = vsel %vm1978, %v1947, %v1477
      %v1981 = vsel %vm1978, %v1948, %v1479
      %v1982 = vsel %vm1978, %v1949, %v1481
      %v1983 = vsel %vm1978, %v1950, %v1483
      %v1984 = vsel %vm1978, %v1951, %v1485
      %v1985 = vsel %vm1978, %v1952, %v1487
      %v1986 = vsel %vm1978, %v1953, %v1489
      %v1987 = vsel %vm1978, %v1954, %v1491
      %v1988 = vsel %vm1978, %v1955, %v1493
      %v1989 = vsel %vm1978, %v1956, %v1495
      %v1990 = vsel %vm1978, %v1957, %v1497
      %v1991 = vsel %vm1978, %v1958, %v1499
      %v1992 = vsel %vm1978, %v1959, %v1501
      %v1993 = vsel %vm1978, %v1960, %v1503
      %v1994 = vsel %vm1978, %v1961, %v1505
      %v1995 = vsel %vm1978, %v1962, %v1507
      %v1996 = vsel %vm1978, %v1963, %v1509
      %v1997 = vsel %vm1978, %v1964, %v1511
      %v1998 = vsel %vm1978, %v1965, %v1513
      %v1999 = vsel %vm1978, %v1966, %v1515
      %v2000 = vsel %vm1978, %v1967, %v1517
      %v2001 = vsel %vm1978, %v1968, %v1519
      %v2002 = vsel %vm1978, %v1969, %v1521
      %v2003 = vsel %vm1978, %v1970, %v1523
      %v2004 = vsel %vm1978, %v1971, %v1525
      %v2005 = vsel %vm1978, %v1972, %v1527
      %v2006 = vsel %vm1978, %v1973, %v1529
      %v2007 = vsel %vm1978, %v1974, %v1531
      %v2008 = vsel %vm1978, %v1975, %v1533
      %v2009 = vsel %vm1978, %v1976, %v1535
      %v2010 = vsel %vm1978, %v1977, %v1537
      %vm2011 = vcmask 195584
      %v2012 = vsel %vm2011, %v1979, %v1571
      %v2013 = vsel %vm2011, %v1980, %v1573
      %v2014 = vsel %vm2011, %v1981, %v1575
      %v2015 = vsel %vm2011, %v1982, %v1577
      %v2016 = vsel %vm2011, %v1983, %v1579
      %v2017 = vsel %vm2011, %v1984, %v1581
      %v2018 = vsel %vm2011, %v1985, %v1583
      %v2019 = vsel %vm2011, %v1986, %v1585
      %v2020 = vsel %vm2011, %v1987, %v1587
      %v2021 = vsel %vm2011, %v1988, %v1589
      %v2022 = vsel %vm2011, %v1989, %v1591
      %v2023 = vsel %vm2011, %v1990, %v1593
      %v2024 = vsel %vm2011, %v1991, %v1595
      %v2025 = vsel %vm2011, %v1992, %v1597
      %v2026 = vsel %vm2011, %v1993, %v1599
      %v2027 = vsel %vm2011, %v1994, %v1601
      %v2028 = vsel %vm2011, %v1995, %v1603
      %v2029 = vsel %vm2011, %v1996, %v1605
      %v2030 = vsel %vm2011, %v1997, %v1607
      %v2031 = vsel %vm2011, %v1998, %v1609
      %v2032 = vsel %vm2011, %v1999, %v1611
      %v2033 = vsel %vm2011, %v2000, %v1613
      %v2034 = vsel %vm2011, %v2001, %v1615
      %v2035 = vsel %vm2011, %v2002, %v1617
      %v2036 = vsel %vm2011, %v2003, %v1619
      %v2037 = vsel %vm2011, %v2004, %v1621
      %v2038 = vsel %vm2011, %v2005, %v1623
      %v2039 = vsel %vm2011, %v2006, %v1625
      %v2040 = vsel %vm2011, %v2007, %v1627
      %v2041 = vsel %vm2011, %v2008, %v1629
      %v2042 = vsel %vm2011, %v2009, %v1631
      %v2043 = vsel %vm2011, %v2010, %v1631
      %vm2044 = vcmask 228352
      %v2045 = vsel %vm2044, %v2012, %v1664
      %v2046 = vsel %vm2044, %v2013, %v1666
      %v2047 = vsel %vm2044, %v2014, %v1668
      %v2048 = vsel %vm2044, %v2015, %v1670
      %v2049 = vsel %vm2044, %v2016, %v1672
      %v2050 = vsel %vm2044, %v2017, %v1674
      %v2051 = vsel %vm2044, %v2018, %v1676
      %v2052 = vsel %vm2044, %v2019, %v1678
      %v2053 = vsel %vm2044, %v2020, %v1680
      %v2054 = vsel %vm2044, %v2021, %v1682
      %v2055 = vsel %vm2044, %v2022, %v1684
      %v2056 = vsel %vm2044, %v2023, %v1686
      %v2057 = vsel %vm2044, %v2024, %v1688
      %v2058 = vsel %vm2044, %v2025, %v1690
      %v2059 = vsel %vm2044, %v2026, %v1692
      %v2060 = vsel %vm2044, %v2027, %v1694
      %v2061 = vsel %vm2044, %v2028, %v1696
      %v2062 = vsel %vm2044, %v2029, %v1698
      %v2063 = vsel %vm2044, %v2030, %v1700
      %v2064 = vsel %vm2044, %v2031, %v1702
      %v2065 = vsel %vm2044, %v2032, %v1704
      %v2066 = vsel %vm2044, %v2033, %v1706
      %v2067 = vsel %vm2044, %v2034, %v1708
      %v2068 = vsel %vm2044, %v2035, %v1710
      %v2069 = vsel %vm2044, %v2036, %v1712
      %v2070 = vsel %vm2044, %v2037, %v1714
      %v2071 = vsel %vm2044, %v2038, %v1716
      %v2072 = vsel %vm2044, %v2039, %v1718
      %v2073 = vsel %vm2044, %v2040, %v1720
      %v2074 = vsel %vm2044, %v2041, %v1722
      %v2075 = vsel %vm2044, %v2042, %v1724
      %v2076 = vsel %vm2044, %v2043, %v1724
      %vm2077 = vcmask 261120
      %v2078 = vsel %vm2077, %v2045, %v1757
      %v2079 = vsel %vm2077, %v2046, %v1759
      %v2080 = vsel %vm2077, %v2047, %v1761
      %v2081 = vsel %vm2077, %v2048, %v1763
      %v2082 = vsel %vm2077, %v2049, %v1765
      %v2083 = vsel %vm2077, %v2050, %v1767
      %v2084 = vsel %vm2077, %v2051, %v1769
      %v2085 = vsel %vm2077, %v2052, %v1771
      %v2086 = vsel %vm2077, %v2053, %v1773
      %v2087 = vsel %vm2077, %v2054, %v1775
      %v2088 = vsel %vm2077, %v2055, %v1777
      %v2089 = vsel %vm2077, %v2056, %v1779
      %v2090 = vsel %vm2077, %v2057, %v1781
      %v2091 = vsel %vm2077, %v2058, %v1783
      %v2092 = vsel %vm2077, %v2059, %v1785
      %v2093 = vsel %vm2077, %v2060, %v1787
      %v2094 = vsel %vm2077, %v2061, %v1789
      %v2095 = vsel %vm2077, %v2062, %v1791
      %v2096 = vsel %vm2077, %v2063, %v1793
      %v2097 = vsel %vm2077, %v2064, %v1795
      %v2098 = vsel %vm2077, %v2065, %v1797
      %v2099 = vsel %vm2077, %v2066, %v1799
      %v2100 = vsel %vm2077, %v2067, %v1801
      %v2101 = vsel %vm2077, %v2068, %v1803
      %v2102 = vsel %vm2077, %v2069, %v1805
      %v2103 = vsel %vm2077, %v2070, %v1807
      %v2104 = vsel %vm2077, %v2071, %v1809
      %v2105 = vsel %vm2077, %v2072, %v1811
      %v2106 = vsel %vm2077, %v2073, %v1813
      %v2107 = vsel %vm2077, %v2074, %v1815
      %v2108 = vsel %vm2077, %v2075, %v1817
      %v2109 = vsel %vm2077, %v2076, %v1817
      %v2110 = vld [vmem:[%s3] sm:$0xff]
      %v2111 = vld [vmem:[%s3 + $0x8] sm:$0xff]
      %v2112 = vld [vmem:[%s3 + $0x10] sm:$0xff]
      %v2113 = vld [vmem:[%s3 + $0x18] sm:$0xff]
      %v2114 = vld [vmem:[%s3 + $0x20] sm:$0xf]
      %vm2115 = vcmask 293888
      %v2117 = vsel %vm2115, %v2078, 0
      %v2120 = vsel %vm2115, %v2079, 0
      %v2123 = vsel %vm2115, %v2080, 0
      %v2126 = vsel %vm2115, %v2081, 0
      %v2129 = vsel %vm2115, %v2082, 0
      %v2132 = vsel %vm2115, %v2083, 0
      %v2135 = vsel %vm2115, %v2084, 0
      %v2138 = vsel %vm2115, %v2085, 0
      %v2141 = vsel %vm2115, %v2086, 0
      %v2144 = vsel %vm2115, %v2087, 0
      %v2147 = vsel %vm2115, %v2088, 0
      %v2150 = vsel %vm2115, %v2089, 0
      %v2153 = vsel %vm2115, %v2090, 0
      %v2156 = vsel %vm2115, %v2091, 0
      %v2159 = vsel %vm2115, %v2092, 0
      %v2162 = vsel %vm2115, %v2093, 0
      %v2165 = vsel %vm2115, %v2094, 0
      %v2168 = vsel %vm2115, %v2095, 0
      %v2171 = vsel %vm2115, %v2096, 0
      %v2174 = vsel %vm2115, %v2097, 0
      %v2177 = vsel %vm2115, %v2098, 0
      %v2180 = vsel %vm2115, %v2099, 0
      %v2183 = vsel %vm2115, %v2100, 0
      %v2186 = vsel %vm2115, %v2101, 0
      %v2189 = vsel %vm2115, %v2102, 0
      %v2192 = vsel %vm2115, %v2103, 0
      %v2195 = vsel %vm2115, %v2104, 0
      %v2198 = vsel %vm2115, %v2105, 0
      %v2201 = vsel %vm2115, %v2106, 0
      %v2204 = vsel %vm2115, %v2107, 0
      %v2207 = vsel %vm2115, %v2108, 0
      %v2210 = vsel %vm2115, %v2109, 0
      %v2213 = vsel %vm476, %v2114, 0
      %2215 = vmatprep.subr.mxu0 0.0
      %2216 = vmatpush1.msra.mxu0 0.0
      %2217 = vmatprep.subr.mxu0 0.0
      %2218 = vmatpush1.msra.mxu0 0.0
      %2219 = vmatprep.subr.mxu0 0.0
      %2220 = vmatpush1.msra.mxu0 0.0
      %2221 = vmatprep.subr.mxu0 0.0
      %2222 = vmatpush1.msra.mxu0 0.0
      %2223 = vmatprep.subr.mxu0 0.0
      %2224 = vmatpush1.msra.mxu0 0.0
      %2225 = vmatprep.subr.mxu0 0.0
      %2226 = vmatpush1.msra.mxu0 0.0
      %2227 = vmatprep.subr.mxu0 0.0
      %2228 = vmatpush1.msra.mxu0 0.0
      %2229 = vmatprep.subr.mxu0 0.0
      %2230 = vmatpush1.msra.mxu0 0.0
      %2231 = vmatprep.subr.mxu0 0.0
      %2232 = vmatpush1.msra.mxu0 0.0
      %2233 = vmatprep.subr.mxu0 0.0
      %2234 = vmatpush1.msra.mxu0 0.0
      %2235 = vmatprep.subr.mxu0 0.0
      %2236 = vmatpush1.msra.mxu0 0.0
      %2237 = vmatprep.subr.mxu0 0.0
      %2238 = vmatpush1.msra.mxu0 %v2213
      %2239 = vmatprep.subr.mxu0 0.0
      %2240 = vmatpush1.msra.mxu0 %v2113
      %2241 = vmatprep.subr.mxu0 0.0
      %2242 = vmatpush1.msra.mxu0 %v2112
      %2243 = vmatprep.subr.mxu0 0.0
      %2244 = vmatpush1.msra.mxu0 %v2111
      %2245 = vmatprep.subr.mxu0 0.0
      %2246 = vmatpush1.msra.mxu0 %v2110
      %2247 = vmatprep.subr.mxu0 0.0
      %2248 = vmatpush2.msra.mxu0 0.0
      %2249 = vmatprep.subr.mxu0 0.0
      %2250 = vmatpush2.msra.mxu0 0.0
      %2251 = vmatprep.subr.mxu0 0.0
      %2252 = vmatpush2.msra.mxu0 0.0
      %2253 = vmatprep.subr.mxu0 0.0
      %2254 = vmatpush2.msra.mxu0 0.0
      %2255 = vmatprep.subr.mxu0 0.0
      %2256 = vmatpush2.msra.mxu0 0.0
      %2257 = vmatprep.subr.mxu0 0.0
      %2258 = vmatpush2.msra.mxu0 0.0
      %2259 = vmatprep.subr.mxu0 0.0
      %2260 = vmatpush2.msra.mxu0 0.0
      %2261 = vmatprep.subr.mxu0 0.0
      %2262 = vmatpush2.msra.mxu0 0.0
      %2263 = vmatprep.subr.mxu0 0.0
      %2264 = vmatpush2.msra.mxu0 0.0
      %2265 = vmatprep.subr.mxu0 0.0
      %2266 = vmatpush2.msra.mxu0 0.0
      %2267 = vmatprep.subr.mxu0 0.0
      %2268 = vmatpush2.msra.mxu0 0.0
      %2269 = vmatprep.subr.mxu0 0.0
      %2270 = vmatpush2.msra.mxu0 0.0
      %2271 = vmatprep.subr.mxu0 0.0
      %2272 = vmatpush2.msra.mxu0 0.0
      %2273 = vmatprep.subr.mxu0 0.0
      %2274 = vmatpush2.msra.mxu0 0.0
      %2275 = vmatprep.subr.mxu0 0.0
      %2276 = vmatpush2.msra.mxu0 0.0
      %2277 = vmatprep.subr.mxu0 0.0
      %2278 = vmatpush2.msra.mxu0 0.0
      %2279 = vmatprep.mubr.f32.mxu0 0.0
      %2280 = vmatmul.mubr.f32.gmra.mxu0 %v2117
      %v2281 = vpop.f32.mrf.mxu0
      %v2282 = vadd.f32 0.0, %v2281
      %v2283 = vpop.f32.mrf.mxu0
      %2284 = vmatprep.mubr.f32.mxu0 0.0
      %2285 = vmatmul.mubr.f32.gmra.mxu0 %v2120
      %v2286 = vpop.f32.mrf.mxu0
      %v2287 = vadd.f32 0.0, %v2286
      %v2288 = vpop.f32.mrf.mxu0
      %2289 = vmatprep.mubr.f32.mxu0 0.0
      %2290 = vmatmul.mubr.f32.gmra.mxu0 %v2123
      %v2291 = vpop.f32.mrf.mxu0
      %v2292 = vadd.f32 0.0, %v2291
      %v2293 = vpop.f32.mrf.mxu0
      %2294 = vmatprep.mubr.f32.mxu0 0.0
      %2295 = vmatmul.mubr.f32.gmra.mxu0 %v2126
      %v2296 = vpop.f32.mrf.mxu0
      %v2297 = vadd.f32 0.0, %v2296
      %v2298 = vpop.f32.mrf.mxu0
      %2299 = vmatprep.mubr.f32.mxu0 0.0
      %2300 = vmatmul.mubr.f32.gmra.mxu0 %v2129
      %v2301 = vpop.f32.mrf.mxu0
      %v2302 = vadd.f32 0.0, %v2301
      %v2303 = vpop.f32.mrf.mxu0
      %2304 = vmatprep.mubr.f32.mxu0 0.0
      %2305 = vmatmul.mubr.f32.gmra.mxu0 %v2132
      %v2306 = vpop.f32.mrf.mxu0
      %v2307 = vadd.f32 0.0, %v2306
      %v2308 = vpop.f32.mrf.mxu0
      %2309 = vmatprep.mubr.f32.mxu0 0.0
      %2310 = vmatmul.mubr.f32.gmra.mxu0 %v2135
      %v2311 = vpop.f32.mrf.mxu0
      %v2312 = vadd.f32 0.0, %v2311
      %v2313 = vpop.f32.mrf.mxu0
      %2314 = vmatprep.mubr.f32.mxu0 0.0
      %2315 = vmatmul.mubr.f32.gmra.mxu0 %v2138
      %v2316 = vpop.f32.mrf.mxu0
      %v2317 = vadd.f32 0.0, %v2316
      %v2318 = vpop.f32.mrf.mxu0
      %2319 = vmatprep.mubr.f32.mxu0 0.0
      %2320 = vmatmul.mubr.f32.gmra.mxu0 %v2141
      %v2321 = vpop.f32.mrf.mxu0
      %v2322 = vadd.f32 0.0, %v2321
      %v2323 = vpop.f32.mrf.mxu0
      %2324 = vmatprep.mubr.f32.mxu0 0.0
      %2325 = vmatmul.mubr.f32.gmra.mxu0 %v2144
      %v2326 = vpop.f32.mrf.mxu0
      %v2327 = vadd.f32 0.0, %v2326
      %v2328 = vpop.f32.mrf.mxu0
      %2329 = vmatprep.mubr.f32.mxu0 0.0
      %2330 = vmatmul.mubr.f32.gmra.mxu0 %v2147
      %v2331 = vpop.f32.mrf.mxu0
      %v2332 = vadd.f32 0.0, %v2331
      %v2333 = vpop.f32.mrf.mxu0
      %2334 = vmatprep.mubr.f32.mxu0 0.0
      %2335 = vmatmul.mubr.f32.gmra.mxu0 %v2150
      %v2336 = vpop.f32.mrf.mxu0
      %v2337 = vadd.f32 0.0, %v2336
      %v2338 = vpop.f32.mrf.mxu0
      %2339 = vmatprep.mubr.f32.mxu0 0.0
      %2340 = vmatmul.mubr.f32.gmra.mxu0 %v2153
      %v2341 = vpop.f32.mrf.mxu0
      %v2342 = vadd.f32 0.0, %v2341
      %v2343 = vpop.f32.mrf.mxu0
      %2344 = vmatprep.mubr.f32.mxu0 0.0
      %2345 = vmatmul.mubr.f32.gmra.mxu0 %v2156
      %v2346 = vpop.f32.mrf.mxu0
      %v2347 = vadd.f32 0.0, %v2346
      %v2348 = vpop.f32.mrf.mxu0
      %2349 = vmatprep.mubr.f32.mxu0 0.0
      %2350 = vmatmul.mubr.f32.gmra.mxu0 %v2159
      %v2351 = vpop.f32.mrf.mxu0
      %v2352 = vadd.f32 0.0, %v2351
      %v2353 = vpop.f32.mrf.mxu0
      %2354 = vmatprep.mubr.f32.mxu0 0.0
      %2355 = vmatmul.mubr.f32.gmra.mxu0 %v2162
      %v2356 = vpop.f32.mrf.mxu0
      %v2357 = vadd.f32 0.0, %v2356
      %v2358 = vpop.f32.mrf.mxu0
      %2359 = vmatprep.mubr.f32.mxu0 0.0
      %2360 = vmatmul.mubr.f32.gmra.mxu0 %v2165
      %v2361 = vpop.f32.mrf.mxu0
      %v2362 = vadd.f32 0.0, %v2361
      %v2363 = vpop.f32.mrf.mxu0
      %2364 = vmatprep.mubr.f32.mxu0 0.0
      %2365 = vmatmul.mubr.f32.gmra.mxu0 %v2168
      %v2366 = vpop.f32.mrf.mxu0
      %v2367 = vadd.f32 0.0, %v2366
      %v2368 = vpop.f32.mrf.mxu0
      %2369 = vmatprep.mubr.f32.mxu0 0.0
      %2370 = vmatmul.mubr.f32.gmra.mxu0 %v2171
      %v2371 = vpop.f32.mrf.mxu0
      %v2372 = vadd.f32 0.0, %v2371
      %v2373 = vpop.f32.mrf.mxu0
      %2374 = vmatprep.mubr.f32.mxu0 0.0
      %2375 = vmatmul.mubr.f32.gmra.mxu0 %v2174
      %v2376 = vpop.f32.mrf.mxu0
      %v2377 = vadd.f32 0.0, %v2376
      %v2378 = vpop.f32.mrf.mxu0
      %2379 = vmatprep.mubr.f32.mxu0 0.0
      %2380 = vmatmul.mubr.f32.gmra.mxu0 %v2177
      %v2381 = vpop.f32.mrf.mxu0
      %v2382 = vadd.f32 0.0, %v2381
      %v2383 = vpop.f32.mrf.mxu0
      %2384 = vmatprep.mubr.f32.mxu0 0.0
      %2385 = vmatmul.mubr.f32.gmra.mxu0 %v2180
      %v2386 = vpop.f32.mrf.mxu0
      %v2387 = vadd.f32 0.0, %v2386
      %v2388 = vpop.f32.mrf.mxu0
      %2389 = vmatprep.mubr.f32.mxu0 0.0
      %2390 = vmatmul.mubr.f32.gmra.mxu0 %v2183
      %v2391 = vpop.f32.mrf.mxu0
      %v2392 = vadd.f32 0.0, %v2391
      %v2393 = vpop.f32.mrf.mxu0
      %2394 = vmatprep.mubr.f32.mxu0 0.0
      %2395 = vmatmul.mubr.f32.gmra.mxu0 %v2186
      %v2396 = vpop.f32.mrf.mxu0
      %v2397 = vadd.f32 0.0, %v2396
      %v2398 = vpop.f32.mrf.mxu0
      %2399 = vmatprep.mubr.f32.mxu0 0.0
      %2400 = vmatmul.mubr.f32.gmra.mxu0 %v2189
      %v2401 = vpop.f32.mrf.mxu0
      %v2402 = vadd.f32 0.0, %v2401
      %v2403 = vpop.f32.mrf.mxu0
      %2404 = vmatprep.mubr.f32.mxu0 0.0
      %2405 = vmatmul.mubr.f32.gmra.mxu0 %v2192
      %v2406 = vpop.f32.mrf.mxu0
      %v2407 = vadd.f32 0.0, %v2406
      %v2408 = vpop.f32.mrf.mxu0
      %2409 = vmatprep.mubr.f32.mxu0 0.0
      %2410 = vmatmul.mubr.f32.gmra.mxu0 %v2195
      %v2411 = vpop.f32.mrf.mxu0
      %v2412 = vadd.f32 0.0, %v2411
      %v2413 = vpop.f32.mrf.mxu0
      %2414 = vmatprep.mubr.f32.mxu0 0.0
      %2415 = vmatmul.mubr.f32.gmra.mxu0 %v2198
      %v2416 = vpop.f32.mrf.mxu0
      %v2417 = vadd.f32 0.0, %v2416
      %v2418 = vpop.f32.mrf.mxu0
      %2419 = vmatprep.mubr.f32.mxu0 0.0
      %2420 = vmatmul.mubr.f32.gmra.mxu0 %v2201
      %v2421 = vpop.f32.mrf.mxu0
      %v2422 = vadd.f32 0.0, %v2421
      %v2423 = vpop.f32.mrf.mxu0
      %2424 = vmatprep.mubr.f32.mxu0 0.0
      %2425 = vmatmul.mubr.f32.gmra.mxu0 %v2204
      %v2426 = vpop.f32.mrf.mxu0
      %v2427 = vadd.f32 0.0, %v2426
      %v2428 = vpop.f32.mrf.mxu0
      %2429 = vmatprep.mubr.f32.mxu0 0.0
      %2430 = vmatmul.mubr.f32.gmra.mxu0 %v2207
      %v2431 = vpop.f32.mrf.mxu0
      %v2432 = vadd.f32 0.0, %v2431
      %v2433 = vpop.f32.mrf.mxu0
      %2434 = vmatprep.mubr.f32.mxu0 0.0
      %2435 = vmatmul.mubr.f32.gmra.mxu0 %v2210
      %v2436 = vpop.f32.mrf.mxu0
      %v2437 = vadd.f32 0.0, %v2436
      %v2438 = vpop.f32.mrf.mxu0
      %2439 = vdwg.mxu0
      %2440 = vst.msk [vmem:[%s325] sm:$0xff] %vm379, %v2282
      %2441 = vst.msk [vmem:[%s325 + $0x8] sm:$0xff] %vm379, %v2287
      %2442 = vst.msk [vmem:[%s325 + $0x10] sm:$0xff] %vm379, %v2292
      %2443 = vst.msk [vmem:[%s325 + $0x18] sm:$0xff] %vm379, %v2297
      %2444 = vst.msk [vmem:[%s325 + $0x20] sm:$0xff] %vm379, %v2302
      %2445 = vst.msk [vmem:[%s325 + $0x28] sm:$0xff] %vm379, %v2307
      %2446 = vst.msk [vmem:[%s325 + $0x30] sm:$0xff] %vm379, %v2312
      %2447 = vst.msk [vmem:[%s325 + $0x38] sm:$0xff] %vm379, %v2317
      %2448 = vst.msk [vmem:[%s325 + $0x40] sm:$0xff] %vm379, %v2322
      %2449 = vst.msk [vmem:[%s325 + $0x48] sm:$0xff] %vm379, %v2327
      %2450 = vst.msk [vmem:[%s325 + $0x50] sm:$0xff] %vm379, %v2332
      %2451 = vst.msk [vmem:[%s325 + $0x58] sm:$0xff] %vm379, %v2337
      %2452 = vst.msk [vmem:[%s325 + $0x60] sm:$0xff] %vm379, %v2342
      %2453 = vst.msk [vmem:[%s325 + $0x68] sm:$0xff] %vm379, %v2347
      %2454 = vst.msk [vmem:[%s325 + $0x70] sm:$0xff] %vm379, %v2352
      %2455 = vst.msk [vmem:[%s325 + $0x78] sm:$0xff] %vm379, %v2357
      %2456 = vst.msk [vmem:[%s325 + $0x80] sm:$0xff] %vm379, %v2362
      %2457 = vst.msk [vmem:[%s325 + $0x88] sm:$0xff] %vm379, %v2367
      %2458 = vst.msk [vmem:[%s325 + $0x90] sm:$0xff] %vm379, %v2372
      %2459 = vst.msk [vmem:[%s325 + $0x98] sm:$0xff] %vm379, %v2377
      %2460 = vst.msk [vmem:[%s325 + $0xa0] sm:$0xff] %vm379, %v2382
      %2461 = vst.msk [vmem:[%s325 + $0xa8] sm:$0xff] %vm379, %v2387
      %2462 = vst.msk [vmem:[%s325 + $0xb0] sm:$0xff] %vm379, %v2392
      %2463 = vst.msk [vmem:[%s325 + $0xb8] sm:$0xff] %vm379, %v2397
      %2464 = vst.msk [vmem:[%s325 + $0xc0] sm:$0xff] %vm379, %v2402
      %2465 = vst.msk [vmem:[%s325 + $0xc8] sm:$0xff] %vm379, %v2407
      %2466 = vst.msk [vmem:[%s325 + $0xd0] sm:$0xff] %vm379, %v2412
      %2467 = vst.msk [vmem:[%s325 + $0xd8] sm:$0xff] %vm379, %v2417
      %2468 = vst.msk [vmem:[%s325 + $0xe0] sm:$0xff] %vm379, %v2422
      %2469 = vst.msk [vmem:[%s325 + $0xe8] sm:$0xff] %vm379, %v2427
      %2470 = vst.msk [vmem:[%s325 + $0xf0] sm:$0xff] %vm379, %v2432
      %2471 = vst.msk [vmem:[%s325 + $0xf8] sm:$0xff] %vm379, %v2437
      %v2472 = vsel %vm379, %v2282, 0.0
      %v2473 = vsel %vm379, %v2287, 0.0
      %v2474 = vadd.f32 %v2472, %v2473
      %v2475 = vsel %vm379, %v2292, 0.0
      %v2476 = vadd.f32 %v2474, %v2475
      %v2477 = vsel %vm379, %v2297, 0.0
      %v2478 = vadd.f32 %v2476, %v2477
      %v2479 = vsel %vm379, %v2302, 0.0
      %v2480 = vadd.f32 %v2478, %v2479
      %v2481 = vsel %vm379, %v2307, 0.0
      %v2482 = vadd.f32 %v2480, %v2481
      %v2483 = vsel %vm379, %v2312, 0.0
      %v2484 = vadd.f32 %v2482, %v2483
      %v2485 = vsel %vm379, %v2317, 0.0
      %v2486 = vadd.f32 %v2484, %v2485
      %v2487 = vsel %vm379, %v2322, 0.0
      %v2488 = vadd.f32 %v2486, %v2487
      %v2489 = vsel %vm379, %v2327, 0.0
      %v2490 = vadd.f32 %v2488, %v2489
      %v2491 = vsel %vm379, %v2332, 0.0
      %v2492 = vadd.f32 %v2490, %v2491
      %v2493 = vsel %vm379, %v2337, 0.0
      %v2494 = vadd.f32 %v2492, %v2493
      %v2495 = vsel %vm379, %v2342, 0.0
      %v2496 = vadd.f32 %v2494, %v2495
      %v2497 = vsel %vm379, %v2347, 0.0
      %v2498 = vadd.f32 %v2496, %v2497
      %v2499 = vsel %vm379, %v2352, 0.0
      %v2500 = vadd.f32 %v2498, %v2499
      %v2501 = vsel %vm379, %v2357, 0.0
      %v2502 = vadd.f32 %v2500, %v2501
      %v2503 = vsel %vm379, %v2362, 0.0
      %v2504 = vadd.f32 %v2502, %v2503
      %v2505 = vsel %vm379, %v2367, 0.0
      %v2506 = vadd.f32 %v2504, %v2505
      %v2507 = vsel %vm379, %v2372, 0.0
      %v2508 = vadd.f32 %v2506, %v2507
      %v2509 = vsel %vm379, %v2377, 0.0
      %v2510 = vadd.f32 %v2508, %v2509
      %v2511 = vsel %vm379, %v2382, 0.0
      %v2512 = vadd.f32 %v2510, %v2511
      %v2513 = vsel %vm379, %v2387, 0.0
      %v2514 = vadd.f32 %v2512, %v2513
      %v2515 = vsel %vm379, %v2392, 0.0
      %v2516 = vadd.f32 %v2514, %v2515
      %v2517 = vsel %vm379, %v2397, 0.0
      %v2518 = vadd.f32 %v2516, %v2517
      %v2519 = vsel %vm379, %v2402, 0.0
      %v2520 = vadd.f32 %v2518, %v2519
      %v2521 = vsel %vm379, %v2407, 0.0
      %v2522 = vadd.f32 %v2520, %v2521
      %v2523 = vsel %vm379, %v2412, 0.0
      %v2524 = vadd.f32 %v2522, %v2523
      %v2525 = vsel %vm379, %v2417, 0.0
      %v2526 = vadd.f32 %v2524, %v2525
      %v2527 = vsel %vm379, %v2422, 0.0
      %v2528 = vadd.f32 %v2526, %v2527
      %v2529 = vsel %vm379, %v2427, 0.0
      %v2530 = vadd.f32 %v2528, %v2529
      %v2531 = vsel %vm379, %v2432, 0.0
      %v2532 = vadd.f32 %v2530, %v2531
      %v2533 = vsel %vm379, %v2437, 0.0
      %v2534 = vadd.f32 %v2532, %v2533
      %v2535 = vrot.slane %v2534, 4
      %v2536 = vadd.f32 %v2534, %v2535
      %v2537 = vrot.slane %v2536, 2
      %v2538 = vadd.f32 %v2536, %v2537
      %v2539 = vrot.slane %v2538, 1
      %v2540 = vadd.f32 %v2538, %v2539
      %v2541 = vmul.f32 %v2282, %v2282
      %v2542 = vmul.f32 %v2287, %v2287
      %v2543 = vmul.f32 %v2292, %v2292
      %v2544 = vmul.f32 %v2297, %v2297
      %v2545 = vmul.f32 %v2302, %v2302
      %v2546 = vmul.f32 %v2307, %v2307
      %v2547 = vmul.f32 %v2312, %v2312
      %v2548 = vmul.f32 %v2317, %v2317
      %v2549 = vmul.f32 %v2322, %v2322
      %v2550 = vmul.f32 %v2327, %v2327
      %v2551 = vmul.f32 %v2332, %v2332
      %v2552 = vmul.f32 %v2337, %v2337
      %v2553 = vmul.f32 %v2342, %v2342
      %v2554 = vmul.f32 %v2347, %v2347
      %v2555 = vmul.f32 %v2352, %v2352
      %v2556 = vmul.f32 %v2357, %v2357
      %v2557 = vmul.f32 %v2362, %v2362
      %v2558 = vmul.f32 %v2367, %v2367
      %v2559 = vmul.f32 %v2372, %v2372
      %v2560 = vmul.f32 %v2377, %v2377
      %v2561 = vmul.f32 %v2382, %v2382
      %v2562 = vmul.f32 %v2387, %v2387
      %v2563 = vmul.f32 %v2392, %v2392
      %v2564 = vmul.f32 %v2397, %v2397
      %v2565 = vmul.f32 %v2402, %v2402
      %v2566 = vmul.f32 %v2407, %v2407
      %v2567 = vmul.f32 %v2412, %v2412
      %v2568 = vmul.f32 %v2417, %v2417
      %v2569 = vmul.f32 %v2422, %v2422
      %v2570 = vmul.f32 %v2427, %v2427
      %v2571 = vmul.f32 %v2432, %v2432
      %v2572 = vmul.f32 %v2437, %v2437
      %v2573 = vsel %vm379, %v2541, 0.0
      %v2574 = vsel %vm379, %v2542, 0.0
      %v2575 = vadd.f32 %v2573, %v2574
      %v2576 = vsel %vm379, %v2543, 0.0
      %v2577 = vadd.f32 %v2575, %v2576
      %v2578 = vsel %vm379, %v2544, 0.0
      %v2579 = vadd.f32 %v2577, %v2578
      %v2580 = vsel %vm379, %v2545, 0.0
      %v2581 = vadd.f32 %v2579, %v2580
      %v2582 = vsel %vm379, %v2546, 0.0
      %v2583 = vadd.f32 %v2581, %v2582
      %v2584 = vsel %vm379, %v2547, 0.0
      %v2585 = vadd.f32 %v2583, %v2584
      %v2586 = vsel %vm379, %v2548, 0.0
      %v2587 = vadd.f32 %v2585, %v2586
      %v2588 = vsel %vm379, %v2549, 0.0
      %v2589 = vadd.f32 %v2587, %v2588
      %v2590 = vsel %vm379, %v2550, 0.0
      %v2591 = vadd.f32 %v2589, %v2590
      %v2592 = vsel %vm379, %v2551, 0.0
      %v2593 = vadd.f32 %v2591, %v2592
      %v2594 = vsel %vm379, %v2552, 0.0
      %v2595 = vadd.f32 %v2593, %v2594
      %v2596 = vsel %vm379, %v2553, 0.0
      %v2597 = vadd.f32 %v2595, %v2596
      %v2598 = vsel %vm379, %v2554, 0.0
      %v2599 = vadd.f32 %v2597, %v2598
      %v2600 = vsel %vm379, %v2555, 0.0
      %v2601 = vadd.f32 %v2599, %v2600
      %v2602 = vsel %vm379, %v2556, 0.0
      %v2603 = vadd.f32 %v2601, %v2602
      %v2604 = vsel %vm379, %v2557, 0.0
      %v2605 = vadd.f32 %v2603, %v2604
      %v2606 = vsel %vm379, %v2558, 0.0
      %v2607 = vadd.f32 %v2605, %v2606
      %v2608 = vsel %vm379, %v2559, 0.0
      %v2609 = vadd.f32 %v2607, %v2608
      %v2610 = vsel %vm379, %v2560, 0.0
      %v2611 = vadd.f32 %v2609, %v2610
      %v2612 = vsel %vm379, %v2561, 0.0
      %v2613 = vadd.f32 %v2611, %v2612
      %v2614 = vsel %vm379, %v2562, 0.0
      %v2615 = vadd.f32 %v2613, %v2614
      %v2616 = vsel %vm379, %v2563, 0.0
      %v2617 = vadd.f32 %v2615, %v2616
      %v2618 = vsel %vm379, %v2564, 0.0
      %v2619 = vadd.f32 %v2617, %v2618
      %v2620 = vsel %vm379, %v2565, 0.0
      %v2621 = vadd.f32 %v2619, %v2620
      %v2622 = vsel %vm379, %v2566, 0.0
      %v2623 = vadd.f32 %v2621, %v2622
      %v2624 = vsel %vm379, %v2567, 0.0
      %v2625 = vadd.f32 %v2623, %v2624
      %v2626 = vsel %vm379, %v2568, 0.0
      %v2627 = vadd.f32 %v2625, %v2626
      %v2628 = vsel %vm379, %v2569, 0.0
      %v2629 = vadd.f32 %v2627, %v2628
      %v2630 = vsel %vm379, %v2570, 0.0
      %v2631 = vadd.f32 %v2629, %v2630
      %v2632 = vsel %vm379, %v2571, 0.0
      %v2633 = vadd.f32 %v2631, %v2632
      %v2634 = vsel %vm379, %v2572, 0.0
      %v2635 = vadd.f32 %v2633, %v2634
      %v2636 = vrot.slane %v2635, 4
      %v2637 = vadd.f32 %v2635, %v2636
      %v2638 = vrot.slane %v2637, 2
      %v2639 = vadd.f32 %v2637, %v2638
      %v2640 = vrot.slane %v2639, 1
      %v2641 = vadd.f32 %v2639, %v2640
      %v2642 = vsel %vm769, %v2540, %v2641
      %vm2643 = vcmask 25600
      %2644 = vst.msk [vmem:[%s329] sm:$0x3] %vm2643, %v2642
      %v2645 = vld [vmem:[%s4] sm:$0xf]
      %v2647 = vsel %vm476, %v2645, 0
      %2649 = vmatprep.subr.mxu0 0.0
      %2650 = vmatpush1.msra.mxu0 0.0
      %2651 = vmatprep.subr.mxu0 0.0
      %2652 = vmatpush1.msra.mxu0 0.0
      %2653 = vmatprep.subr.mxu0 0.0
      %2654 = vmatpush1.msra.mxu0 0.0
      %2655 = vmatprep.subr.mxu0 0.0
      %2656 = vmatpush1.msra.mxu0 0.0
      %2657 = vmatprep.subr.mxu0 0.0
      %2658 = vmatpush1.msra.mxu0 0.0
      %2659 = vmatprep.subr.mxu0 0.0
      %2660 = vmatpush1.msra.mxu0 0.0
      %2661 = vmatprep.subr.mxu0 0.0
      %2662 = vmatpush1.msra.mxu0 0.0
      %2663 = vmatprep.subr.mxu0 0.0
      %2664 = vmatpush1.msra.mxu0 0.0
      %2665 = vmatprep.subr.mxu0 0.0
      %2666 = vmatpush1.msra.mxu0 0.0
      %2667 = vmatprep.subr.mxu0 0.0
      %2668 = vmatpush1.msra.mxu0 0.0
      %2669 = vmatprep.subr.mxu0 0.0
      %2670 = vmatpush1.msra.mxu0 0.0
      %2671 = vmatprep.subr.mxu0 0.0
      %2672 = vmatpush1.msra.mxu0 0.0
      %2673 = vmatprep.subr.mxu0 0.0
      %2674 = vmatpush1.msra.mxu0 0.0
      %2675 = vmatprep.subr.mxu0 0.0
      %2676 = vmatpush1.msra.mxu0 0.0
      %2677 = vmatprep.subr.mxu0 0.0
      %2678 = vmatpush1.msra.mxu0 0.0
      %2679 = vmatprep.subr.mxu0 0.0
      %2680 = vmatpush1.msra.mxu0 %v2647
      %2681 = vmatprep.subr.mxu0 0.0
      %2682 = vmatpush2.msra.mxu0 0.0
      %2683 = vmatprep.subr.mxu0 0.0
      %2684 = vmatpush2.msra.mxu0 0.0
      %2685 = vmatprep.subr.mxu0 0.0
      %2686 = vmatpush2.msra.mxu0 0.0
      %2687 = vmatprep.subr.mxu0 0.0
      %2688 = vmatpush2.msra.mxu0 0.0
      %2689 = vmatprep.subr.mxu0 0.0
      %2690 = vmatpush2.msra.mxu0 0.0
      %2691 = vmatprep.subr.mxu0 0.0
      %2692 = vmatpush2.msra.mxu0 0.0
      %2693 = vmatprep.subr.mxu0 0.0
      %2694 = vmatpush2.msra.mxu0 0.0
      %2695 = vmatprep.subr.mxu0 0.0
      %2696 = vmatpush2.msra.mxu0 0.0
      %2697 = vmatprep.subr.mxu0 0.0
      %2698 = vmatpush2.msra.mxu0 0.0
      %2699 = vmatprep.subr.mxu0 0.0
      %2700 = vmatpush2.msra.mxu0 0.0
      %2701 = vmatprep.subr.mxu0 0.0
      %2702 = vmatpush2.msra.mxu0 0.0
      %2703 = vmatprep.subr.mxu0 0.0
      %2704 = vmatpush2.msra.mxu0 0.0
      %2705 = vmatprep.subr.mxu0 0.0
      %2706 = vmatpush2.msra.mxu0 0.0
      %2707 = vmatprep.subr.mxu0 0.0
      %2708 = vmatpush2.msra.mxu0 0.0
      %2709 = vmatprep.subr.mxu0 0.0
      %2710 = vmatpush2.msra.mxu0 0.0
      %2711 = vmatprep.subr.mxu0 0.0
      %2712 = vmatpush2.msra.mxu0 0.0
      %2713 = vmatprep.mubr.f32.mxu0 0.0
      %2714 = vmatmul.mubr.f32.gmra.mxu0 %v381
      %v2715 = vpop.f32.mrf.mxu0
      %v2716 = vadd.f32 0.0, %v2715
      %v2717 = vpop.f32.mrf.mxu0
      %2718 = vmatprep.mubr.f32.mxu0 0.0
      %2719 = vmatmul.mubr.f32.gmra.mxu0 %v384
      %v2720 = vpop.f32.mrf.mxu0
      %v2721 = vadd.f32 0.0, %v2720
      %v2722 = vpop.f32.mrf.mxu0
      %2723 = vmatprep.mubr.f32.mxu0 0.0
      %2724 = vmatmul.mubr.f32.gmra.mxu0 %v387
      %v2725 = vpop.f32.mrf.mxu0
      %v2726 = vadd.f32 0.0, %v2725
      %v2727 = vpop.f32.mrf.mxu0
      %2728 = vmatprep.mubr.f32.mxu0 0.0
      %2729 = vmatmul.mubr.f32.gmra.mxu0 %v390
      %v2730 = vpop.f32.mrf.mxu0
      %v2731 = vadd.f32 0.0, %v2730
      %v2732 = vpop.f32.mrf.mxu0
      %2733 = vmatprep.mubr.f32.mxu0 0.0
      %2734 = vmatmul.mubr.f32.gmra.mxu0 %v393
      %v2735 = vpop.f32.mrf.mxu0
      %v2736 = vadd.f32 0.0, %v2735
      %v2737 = vpop.f32.mrf.mxu0
      %2738 = vmatprep.mubr.f32.mxu0 0.0
      %2739 = vmatmul.mubr.f32.gmra.mxu0 %v396
      %v2740 = vpop.f32.mrf.mxu0
      %v2741 = vadd.f32 0.0, %v2740
      %v2742 = vpop.f32.mrf.mxu0
      %2743 = vmatprep.mubr.f32.mxu0 0.0
      %2744 = vmatmul.mubr.f32.gmra.mxu0 %v399
      %v2745 = vpop.f32.mrf.mxu0
      %v2746 = vadd.f32 0.0, %v2745
      %v2747 = vpop.f32.mrf.mxu0
      %2748 = vmatprep.mubr.f32.mxu0 0.0
      %2749 = vmatmul.mubr.f32.gmra.mxu0 %v402
      %v2750 = vpop.f32.mrf.mxu0
      %v2751 = vadd.f32 0.0, %v2750
      %v2752 = vpop.f32.mrf.mxu0
      %2753 = vmatprep.mubr.f32.mxu0 0.0
      %2754 = vmatmul.mubr.f32.gmra.mxu0 %v405
      %v2755 = vpop.f32.mrf.mxu0
      %v2756 = vadd.f32 0.0, %v2755
      %v2757 = vpop.f32.mrf.mxu0
      %2758 = vmatprep.mubr.f32.mxu0 0.0
      %2759 = vmatmul.mubr.f32.gmra.mxu0 %v408
      %v2760 = vpop.f32.mrf.mxu0
      %v2761 = vadd.f32 0.0, %v2760
      %v2762 = vpop.f32.mrf.mxu0
      %2763 = vmatprep.mubr.f32.mxu0 0.0
      %2764 = vmatmul.mubr.f32.gmra.mxu0 %v411
      %v2765 = vpop.f32.mrf.mxu0
      %v2766 = vadd.f32 0.0, %v2765
      %v2767 = vpop.f32.mrf.mxu0
      %2768 = vmatprep.mubr.f32.mxu0 0.0
      %2769 = vmatmul.mubr.f32.gmra.mxu0 %v414
      %v2770 = vpop.f32.mrf.mxu0
      %v2771 = vadd.f32 0.0, %v2770
      %v2772 = vpop.f32.mrf.mxu0
      %2773 = vmatprep.mubr.f32.mxu0 0.0
      %2774 = vmatmul.mubr.f32.gmra.mxu0 %v417
      %v2775 = vpop.f32.mrf.mxu0
      %v2776 = vadd.f32 0.0, %v2775
      %v2777 = vpop.f32.mrf.mxu0
      %2778 = vmatprep.mubr.f32.mxu0 0.0
      %2779 = vmatmul.mubr.f32.gmra.mxu0 %v420
      %v2780 = vpop.f32.mrf.mxu0
      %v2781 = vadd.f32 0.0, %v2780
      %v2782 = vpop.f32.mrf.mxu0
      %2783 = vmatprep.mubr.f32.mxu0 0.0
      %2784 = vmatmul.mubr.f32.gmra.mxu0 %v423
      %v2785 = vpop.f32.mrf.mxu0
      %v2786 = vadd.f32 0.0, %v2785
      %v2787 = vpop.f32.mrf.mxu0
      %2788 = vmatprep.mubr.f32.mxu0 0.0
      %2789 = vmatmul.mubr.f32.gmra.mxu0 %v426
      %v2790 = vpop.f32.mrf.mxu0
      %v2791 = vadd.f32 0.0, %v2790
      %v2792 = vpop.f32.mrf.mxu0
      %2793 = vmatprep.mubr.f32.mxu0 0.0
      %2794 = vmatmul.mubr.f32.gmra.mxu0 %v429
      %v2795 = vpop.f32.mrf.mxu0
      %v2796 = vadd.f32 0.0, %v2795
      %v2797 = vpop.f32.mrf.mxu0
      %2798 = vmatprep.mubr.f32.mxu0 0.0
      %2799 = vmatmul.mubr.f32.gmra.mxu0 %v432
      %v2800 = vpop.f32.mrf.mxu0
      %v2801 = vadd.f32 0.0, %v2800
      %v2802 = vpop.f32.mrf.mxu0
      %2803 = vmatprep.mubr.f32.mxu0 0.0
      %2804 = vmatmul.mubr.f32.gmra.mxu0 %v435
      %v2805 = vpop.f32.mrf.mxu0
      %v2806 = vadd.f32 0.0, %v2805
      %v2807 = vpop.f32.mrf.mxu0
      %2808 = vmatprep.mubr.f32.mxu0 0.0
      %2809 = vmatmul.mubr.f32.gmra.mxu0 %v438
      %v2810 = vpop.f32.mrf.mxu0
      %v2811 = vadd.f32 0.0, %v2810
      %v2812 = vpop.f32.mrf.mxu0
      %2813 = vmatprep.mubr.f32.mxu0 0.0
      %2814 = vmatmul.mubr.f32.gmra.mxu0 %v441
      %v2815 = vpop.f32.mrf.mxu0
      %v2816 = vadd.f32 0.0, %v2815
      %v2817 = vpop.f32.mrf.mxu0
      %2818 = vmatprep.mubr.f32.mxu0 0.0
      %2819 = vmatmul.mubr.f32.gmra.mxu0 %v444
      %v2820 = vpop.f32.mrf.mxu0
      %v2821 = vadd.f32 0.0, %v2820
      %v2822 = vpop.f32.mrf.mxu0
      %2823 = vmatprep.mubr.f32.mxu0 0.0
      %2824 = vmatmul.mubr.f32.gmra.mxu0 %v447
      %v2825 = vpop.f32.mrf.mxu0
      %v2826 = vadd.f32 0.0, %v2825
      %v2827 = vpop.f32.mrf.mxu0
      %2828 = vmatprep.mubr.f32.mxu0 0.0
      %2829 = vmatmul.mubr.f32.gmra.mxu0 %v450
      %v2830 = vpop.f32.mrf.mxu0
      %v2831 = vadd.f32 0.0, %v2830
      %v2832 = vpop.f32.mrf.mxu0
      %2833 = vmatprep.mubr.f32.mxu0 0.0
      %2834 = vmatmul.mubr.f32.gmra.mxu0 %v453
      %v2835 = vpop.f32.mrf.mxu0
      %v2836 = vadd.f32 0.0, %v2835
      %v2837 = vpop.f32.mrf.mxu0
      %2838 = vmatprep.mubr.f32.mxu0 0.0
      %2839 = vmatmul.mubr.f32.gmra.mxu0 %v456
      %v2840 = vpop.f32.mrf.mxu0
      %v2841 = vadd.f32 0.0, %v2840
      %v2842 = vpop.f32.mrf.mxu0
      %2843 = vmatprep.mubr.f32.mxu0 0.0
      %2844 = vmatmul.mubr.f32.gmra.mxu0 %v459
      %v2845 = vpop.f32.mrf.mxu0
      %v2846 = vadd.f32 0.0, %v2845
      %v2847 = vpop.f32.mrf.mxu0
      %2848 = vmatprep.mubr.f32.mxu0 0.0
      %2849 = vmatmul.mubr.f32.gmra.mxu0 %v462
      %v2850 = vpop.f32.mrf.mxu0
      %v2851 = vadd.f32 0.0, %v2850
      %v2852 = vpop.f32.mrf.mxu0
      %2853 = vmatprep.mubr.f32.mxu0 0.0
      %2854 = vmatmul.mubr.f32.gmra.mxu0 %v465
      %v2855 = vpop.f32.mrf.mxu0
      %v2856 = vadd.f32 0.0, %v2855
      %v2857 = vpop.f32.mrf.mxu0
      %2858 = vmatprep.mubr.f32.mxu0 0.0
      %2859 = vmatmul.mubr.f32.gmra.mxu0 %v468
      %v2860 = vpop.f32.mrf.mxu0
      %v2861 = vadd.f32 0.0, %v2860
      %v2862 = vpop.f32.mrf.mxu0
      %2863 = vmatprep.mubr.f32.mxu0 0.0
      %2864 = vmatmul.mubr.f32.gmra.mxu0 %v471
      %v2865 = vpop.f32.mrf.mxu0
      %v2866 = vadd.f32 0.0, %v2865
      %v2867 = vpop.f32.mrf.mxu0
      %2868 = vmatprep.mubr.f32.mxu0 0.0
      %2869 = vmatmul.mubr.f32.gmra.mxu0 %v474
      %v2870 = vpop.f32.mrf.mxu0
      %v2871 = vadd.f32 0.0, %v2870
      %v2872 = vpop.f32.mrf.mxu0
      %2873 = vdwg.mxu0
      %2874 = vst.msk [vmem:[%s334] sm:$0xff] %vm1945, %v2716
      %2875 = vst.msk [vmem:[%s334 + $0x8] sm:$0xff] %vm1945, %v2721
      %2876 = vst.msk [vmem:[%s334 + $0x10] sm:$0xff] %vm1945, %v2726
      %2877 = vst.msk [vmem:[%s334 + $0x18] sm:$0xff] %vm1945, %v2731
      %2878 = vst.msk [vmem:[%s334 + $0x20] sm:$0xff] %vm1945, %v2736
      %2879 = vst.msk [vmem:[%s334 + $0x28] sm:$0xff] %vm1945, %v2741
      %2880 = vst.msk [vmem:[%s334 + $0x30] sm:$0xff] %vm1945, %v2746
      %2881 = vst.msk [vmem:[%s334 + $0x38] sm:$0xff] %vm1945, %v2751
      %2882 = vst.msk [vmem:[%s334 + $0x40] sm:$0xff] %vm1945, %v2756
      %2883 = vst.msk [vmem:[%s334 + $0x48] sm:$0xff] %vm1945, %v2761
      %2884 = vst.msk [vmem:[%s334 + $0x50] sm:$0xff] %vm1945, %v2766
      %2885 = vst.msk [vmem:[%s334 + $0x58] sm:$0xff] %vm1945, %v2771
      %2886 = vst.msk [vmem:[%s334 + $0x60] sm:$0xff] %vm1945, %v2776
      %2887 = vst.msk [vmem:[%s334 + $0x68] sm:$0xff] %vm1945, %v2781
      %2888 = vst.msk [vmem:[%s334 + $0x70] sm:$0xff] %vm1945, %v2786
      %2889 = vst.msk [vmem:[%s334 + $0x78] sm:$0xff] %vm1945, %v2791
      %2890 = vst.msk [vmem:[%s334 + $0x80] sm:$0xff] %vm1945, %v2796
      %2891 = vst.msk [vmem:[%s334 + $0x88] sm:$0xff] %vm1945, %v2801
      %2892 = vst.msk [vmem:[%s334 + $0x90] sm:$0xff] %vm1945, %v2806
      %2893 = vst.msk [vmem:[%s334 + $0x98] sm:$0xff] %vm1945, %v2811
      %2894 = vst.msk [vmem:[%s334 + $0xa0] sm:$0xff] %vm1945, %v2816
      %2895 = vst.msk [vmem:[%s334 + $0xa8] sm:$0xff] %vm1945, %v2821
      %2896 = vst.msk [vmem:[%s334 + $0xb0] sm:$0xff] %vm1945, %v2826
      %2897 = vst.msk [vmem:[%s334 + $0xb8] sm:$0xff] %vm1945, %v2831
      %2898 = vst.msk [vmem:[%s334 + $0xc0] sm:$0xff] %vm1945, %v2836
      %2899 = vst.msk [vmem:[%s334 + $0xc8] sm:$0xff] %vm1945, %v2841
      %2900 = vst.msk [vmem:[%s334 + $0xd0] sm:$0xff] %vm1945, %v2846
      %2901 = vst.msk [vmem:[%s334 + $0xd8] sm:$0xff] %vm1945, %v2851
      %2902 = vst.msk [vmem:[%s334 + $0xe0] sm:$0xff] %vm1945, %v2856
      %2903 = vst.msk [vmem:[%s334 + $0xe8] sm:$0xff] %vm1945, %v2861
      %2904 = vst.msk [vmem:[%s334 + $0xf0] sm:$0xff] %vm1945, %v2866
      %2905 = vst.msk [vmem:[%s334 + $0xf8] sm:$0xff] %vm1945, %v2871
      %v2906 = vsel %vm1945, %v2716, 0.0
      %v2907 = vsel %vm1945, %v2721, 0.0
      %v2908 = vadd.f32 %v2906, %v2907
      %v2909 = vsel %vm1945, %v2726, 0.0
      %v2910 = vadd.f32 %v2908, %v2909
      %v2911 = vsel %vm1945, %v2731, 0.0
      %v2912 = vadd.f32 %v2910, %v2911
      %v2913 = vsel %vm1945, %v2736, 0.0
      %v2914 = vadd.f32 %v2912, %v2913
      %v2915 = vsel %vm1945, %v2741, 0.0
      %v2916 = vadd.f32 %v2914, %v2915
      %v2917 = vsel %vm1945, %v2746, 0.0
      %v2918 = vadd.f32 %v2916, %v2917
      %v2919 = vsel %vm1945, %v2751, 0.0
      %v2920 = vadd.f32 %v2918, %v2919
      %v2921 = vsel %vm1945, %v2756, 0.0
      %v2922 = vadd.f32 %v2920, %v2921
      %v2923 = vsel %vm1945, %v2761, 0.0
      %v2924 = vadd.f32 %v2922, %v2923
      %v2925 = vsel %vm1945, %v2766, 0.0
      %v2926 = vadd.f32 %v2924, %v2925
      %v2927 = vsel %vm1945, %v2771, 0.0
      %v2928 = vadd.f32 %v2926, %v2927
      %v2929 = vsel %vm1945, %v2776, 0.0
      %v2930 = vadd.f32 %v2928, %v2929
      %v2931 = vsel %vm1945, %v2781, 0.0
      %v2932 = vadd.f32 %v2930, %v2931
      %v2933 = vsel %vm1945, %v2786, 0.0
      %v2934 = vadd.f32 %v2932, %v2933
      %v2935 = vsel %vm1945, %v2791, 0.0
      %v2936 = vadd.f32 %v2934, %v2935
      %v2937 = vsel %vm1945, %v2796, 0.0
      %v2938 = vadd.f32 %v2936, %v2937
      %v2939 = vsel %vm1945, %v2801, 0.0
      %v2940 = vadd.f32 %v2938, %v2939
      %v2941 = vsel %vm1945, %v2806, 0.0
      %v2942 = vadd.f32 %v2940, %v2941
      %v2943 = vsel %vm1945, %v2811, 0.0
      %v2944 = vadd.f32 %v2942, %v2943
      %v2945 = vsel %vm1945, %v2816, 0.0
      %v2946 = vadd.f32 %v2944, %v2945
      %v2947 = vsel %vm1945, %v2821, 0.0
      %v2948 = vadd.f32 %v2946, %v2947
      %v2949 = vsel %vm1945, %v2826, 0.0
      %v2950 = vadd.f32 %v2948, %v2949
      %v2951 = vsel %vm1945, %v2831, 0.0
      %v2952 = vadd.f32 %v2950, %v2951
      %v2953 = vsel %vm1945, %v2836, 0.0
      %v2954 = vadd.f32 %v2952, %v2953
      %v2955 = vsel %vm1945, %v2841, 0.0
      %v2956 = vadd.f32 %v2954, %v2955
      %v2957 = vsel %vm1945, %v2846, 0.0
      %v2958 = vadd.f32 %v2956, %v2957
      %v2959 = vsel %vm1945, %v2851, 0.0
      %v2960 = vadd.f32 %v2958, %v2959
      %v2961 = vsel %vm1945, %v2856, 0.0
      %v2962 = vadd.f32 %v2960, %v2961
      %v2963 = vsel %vm1945, %v2861, 0.0
      %v2964 = vadd.f32 %v2962, %v2963
      %v2965 = vsel %vm1945, %v2866, 0.0
      %v2966 = vadd.f32 %v2964, %v2965
      %v2967 = vsel %vm1945, %v2871, 0.0
      %v2968 = vadd.f32 %v2966, %v2967
      %v2969 = vrot.slane %v2968, 4
      %v2970 = vadd.f32 %v2968, %v2969
      %v2971 = vrot.slane %v2970, 2
      %v2972 = vadd.f32 %v2970, %v2971
      %v2973 = vrot.slane %v2972, 1
      %v2974 = vadd.f32 %v2972, %v2973
      %v2975 = vmul.f32 %v2716, %v2716
      %v2976 = vmul.f32 %v2721, %v2721
      %v2977 = vmul.f32 %v2726, %v2726
      %v2978 = vmul.f32 %v2731, %v2731
      %v2979 = vmul.f32 %v2736, %v2736
      %v2980 = vmul.f32 %v2741, %v2741
      %v2981 = vmul.f32 %v2746, %v2746
      %v2982 = vmul.f32 %v2751, %v2751
      %v2983 = vmul.f32 %v2756, %v2756
      %v2984 = vmul.f32 %v2761, %v2761
      %v2985 = vmul.f32 %v2766, %v2766
      %v2986 = vmul.f32 %v2771, %v2771
      %v2987 = vmul.f32 %v2776, %v2776
      %v2988 = vmul.f32 %v2781, %v2781
      %v2989 = vmul.f32 %v2786, %v2786
      %v2990 = vmul.f32 %v2791, %v2791
      %v2991 = vmul.f32 %v2796, %v2796
      %v2992 = vmul.f32 %v2801, %v2801
      %v2993 = vmul.f32 %v2806, %v2806
      %v2994 = vmul.f32 %v2811, %v2811
      %v2995 = vmul.f32 %v2816, %v2816
      %v2996 = vmul.f32 %v2821, %v2821
      %v2997 = vmul.f32 %v2826, %v2826
      %v2998 = vmul.f32 %v2831, %v2831
      %v2999 = vmul.f32 %v2836, %v2836
      %v3000 = vmul.f32 %v2841, %v2841
      %v3001 = vmul.f32 %v2846, %v2846
      %v3002 = vmul.f32 %v2851, %v2851
      %v3003 = vmul.f32 %v2856, %v2856
      %v3004 = vmul.f32 %v2861, %v2861
      %v3005 = vmul.f32 %v2866, %v2866
      %v3006 = vmul.f32 %v2871, %v2871
      %v3007 = vsel %vm1945, %v2975, 0.0
      %v3008 = vsel %vm1945, %v2976, 0.0
      %v3009 = vadd.f32 %v3007, %v3008
      %v3010 = vsel %vm1945, %v2977, 0.0
      %v3011 = vadd.f32 %v3009, %v3010
      %v3012 = vsel %vm1945, %v2978, 0.0
      %v3013 = vadd.f32 %v3011, %v3012
      %v3014 = vsel %vm1945, %v2979, 0.0
      %v3015 = vadd.f32 %v3013, %v3014
      %v3016 = vsel %vm1945, %v2980, 0.0
      %v3017 = vadd.f32 %v3015, %v3016
      %v3018 = vsel %vm1945, %v2981, 0.0
      %v3019 = vadd.f32 %v3017, %v3018
      %v3020 = vsel %vm1945, %v2982, 0.0
      %v3021 = vadd.f32 %v3019, %v3020
      %v3022 = vsel %vm1945, %v2983, 0.0
      %v3023 = vadd.f32 %v3021, %v3022
      %v3024 = vsel %vm1945, %v2984, 0.0
      %v3025 = vadd.f32 %v3023, %v3024
      %v3026 = vsel %vm1945, %v2985, 0.0
      %v3027 = vadd.f32 %v3025, %v3026
      %v3028 = vsel %vm1945, %v2986, 0.0
      %v3029 = vadd.f32 %v3027, %v3028
      %v3030 = vsel %vm1945, %v2987, 0.0
      %v3031 = vadd.f32 %v3029, %v3030
      %v3032 = vsel %vm1945, %v2988, 0.0
      %v3033 = vadd.f32 %v3031, %v3032
      %v3034 = vsel %vm1945, %v2989, 0.0
      %v3035 = vadd.f32 %v3033, %v3034
      %v3036 = vsel %vm1945, %v2990, 0.0
      %v3037 = vadd.f32 %v3035, %v3036
      %v3038 = vsel %vm1945, %v2991, 0.0
      %v3039 = vadd.f32 %v3037, %v3038
      %v3040 = vsel %vm1945, %v2992, 0.0
      %v3041 = vadd.f32 %v3039, %v3040
      %v3042 = vsel %vm1945, %v2993, 0.0
      %v3043 = vadd.f32 %v3041, %v3042
      %v3044 = vsel %vm1945, %v2994, 0.0
      %v3045 = vadd.f32 %v3043, %v3044
      %v3046 = vsel %vm1945, %v2995, 0.0
      %v3047 = vadd.f32 %v3045, %v3046
      %v3048 = vsel %vm1945, %v2996, 0.0
      %v3049 = vadd.f32 %v3047, %v3048
      %v3050 = vsel %vm1945, %v2997, 0.0
      %v3051 = vadd.f32 %v3049, %v3050
      %v3052 = vsel %vm1945, %v2998, 0.0
      %v3053 = vadd.f32 %v3051, %v3052
      %v3054 = vsel %vm1945, %v2999, 0.0
      %v3055 = vadd.f32 %v3053, %v3054
      %v3056 = vsel %vm1945, %v3000, 0.0
      %v3057 = vadd.f32 %v3055, %v3056
      %v3058 = vsel %vm1945, %v3001, 0.0
      %v3059 = vadd.f32 %v3057, %v3058
      %v3060 = vsel %vm1945, %v3002, 0.0
      %v3061 = vadd.f32 %v3059, %v3060
      %v3062 = vsel %vm1945, %v3003, 0.0
      %v3063 = vadd.f32 %v3061, %v3062
      %v3064 = vsel %vm1945, %v3004, 0.0
      %v3065 = vadd.f32 %v3063, %v3064
      %v3066 = vsel %vm1945, %v3005, 0.0
      %v3067 = vadd.f32 %v3065, %v3066
      %v3068 = vsel %vm1945, %v3006, 0.0
      %v3069 = vadd.f32 %v3067, %v3068
      %v3070 = vrot.slane %v3069, 4
      %v3071 = vadd.f32 %v3069, %v3070
      %v3072 = vrot.slane %v3071, 2
      %v3073 = vadd.f32 %v3071, %v3072
      %v3074 = vrot.slane %v3073, 1
      %v3075 = vadd.f32 %v3073, %v3074
      %v3076 = vsel %vm769, %v2974, %v3075
      %vm3077 = vcmask 123904
      %3078 = vst.msk [vmem:[%s338] sm:$0x3] %vm3077, %v3076
      %p3079 = scmp.lt.s32.totalorder %s20, 1
      %s3080 = scalar_select %p3079, %s20, 1
      %s3081 = smul.addr %s3080, 32
      %s3082 = smul.addr %s3081, 8
      %s3083 = scalar_lea.vmem %s5, %s3082
      %p3084 = scmp.lt.s32.totalorder %s20, 1
      %s3085 = scalar_select %p3084, %s20, 1
      %s3086 = smul.addr %s3085, 2
      %s3087 = scalar_lea.vmem %s6, %s3086
      %p3088 = scmp.lt.s32.totalorder %s20, 1
      %s3089 = scalar_select %p3088, %s20, 1
      %s3090 = smul.addr %s3089, 32
      %s3091 = smul.addr %s3090, 8
      %s3092 = scalar_lea.vmem %s7, %s3091
      %p3093 = scmp.lt.s32.totalorder %s20, 1
      %s3094 = scalar_select %p3093, %s20, 1
      %s3095 = smul.addr %s3094, 2
      %s3096 = scalar_lea.vmem %s8, %s3095
      // Predicated region
      $region41: #{bottleneck_forward.5} parent=39 // pred_check
        %p3097 = pneg %p148
      $region42: #{bottleneck_forward.5} parent=39 // pred_check_branch
        %3099 = sbr.rel (%p3097) target = $region44
      $region43: #{bottleneck_forward.5} parent=39 // pred_region
        _
      $region44: #{bottleneck_forward.5} parent=39 // pred_fallthru
        _
      // Predicated region
      $region45: #{bottleneck_forward.5} parent=39 // pred_check
        %p3100 = pneg %p174
      $region46: #{bottleneck_forward.5} parent=39 // pred_check_branch
        %3102 = sbr.rel (%p3100) target = $region48
      $region47: #{bottleneck_forward.5} parent=39 // pred_region
        _
      $region48: #{bottleneck_forward.5} parent=39 // pred_fallthru
        _
      // Predicated region
      $region49: #{bottleneck_forward.5} parent=39 // pred_check
        %p3103 = pneg %p200
      $region50: #{bottleneck_forward.5} parent=39 // pred_check_branch
        %3105 = sbr.rel (%p3103) target = $region52
      $region51: #{bottleneck_forward.5} parent=39 // pred_region
        _
      $region52: #{bottleneck_forward.5} parent=39 // pred_fallthru
        _
      // Predicated region
      $region53: #{bottleneck_forward.5} parent=39 // pred_check
        %p3106 = pneg %p226
      $region54: #{bottleneck_forward.5} parent=39 // pred_check_branch
        %3108 = sbr.rel (%p3106) target = $region56
      $region55: #{bottleneck_forward.5} parent=39 // pred_region
        _
      $region56: #{bottleneck_forward.5} parent=39 // pred_fallthru
        _
    $region40: #{bottleneck_forward.5} parent=5 // pred_fallthru
      _
    %p3109 = scmp.le.s32.totalorder 2, %s15
    // Predicated region
    $region57: #{bottleneck_forward.5} parent=5 // pred_check
      %p3110 = pneg %p3109
    $region58: #{bottleneck_forward.5} parent=5 // pred_check_branch
      %3112 = sbr.rel (%p3110) target = $region60
    $region59: #{bottleneck_forward.5} parent=5 // pred_region
      %s3113 = ssub.s32 %s15, 2
      // Predicated region
      $region61: #{bottleneck_forward.5} parent=59 // pred_check
        %p3114 = pneg %p154
      $region62: #{bottleneck_forward.5} parent=59 // pred_check_branch
        %3116 = sbr.rel (%p3114) target = $region64
      $region63: #{bottleneck_forward.5} parent=59 // pred_region
        %p3117 = scmp.lt.s32.totalorder %s21, 1
        %s3118 = scalar_select %p3117, %s21, 1
        %s3119 = smul.addr %s3118, 32
        %s3120 = smul.addr %s3119, 8
        %s3121 = scalar_lea.vmem %s5, %s3120
      $region64: #{bottleneck_forward.5} parent=59 // pred_fallthru
        _
      // Predicated region
      $region65: #{bottleneck_forward.5} parent=59 // pred_check
        %p3122 = pneg %p180
      $region66: #{bottleneck_forward.5} parent=59 // pred_check_branch
        %3124 = sbr.rel (%p3122) target = $region68
      $region67: #{bottleneck_forward.5} parent=59 // pred_region
        %p3125 = scmp.lt.s32.totalorder %s21, 1
        %s3126 = scalar_select %p3125, %s21, 1
        %s3127 = smul.addr %s3126, 2
        %s3128 = scalar_lea.vmem %s6, %s3127
      $region68: #{bottleneck_forward.5} parent=59 // pred_fallthru
        _
      // Predicated region
      $region69: #{bottleneck_forward.5} parent=59 // pred_check
        %p3129 = pneg %p206
      $region70: #{bottleneck_forward.5} parent=59 // pred_check_branch
        %3131 = sbr.rel (%p3129) target = $region72
      $region71: #{bottleneck_forward.5} parent=59 // pred_region
        %p3132 = scmp.lt.s32.totalorder %s21, 1
        %s3133 = scalar_select %p3132, %s21, 1
        %s3134 = smul.addr %s3133, 32
        %s3135 = smul.addr %s3134, 8
        %s3136 = scalar_lea.vmem %s7, %s3135
      $region72: #{bottleneck_forward.5} parent=59 // pred_fallthru
        _
      // Predicated region
      $region73: #{bottleneck_forward.5} parent=59 // pred_check
        %p3137 = pneg %p232
      $region74: #{bottleneck_forward.5} parent=59 // pred_check_branch
        %3139 = sbr.rel (%p3137) target = $region76
      $region75: #{bottleneck_forward.5} parent=59 // pred_region
        %p3140 = scmp.lt.s32.totalorder %s21, 1
        %s3141 = scalar_select %p3140, %s21, 1
        %s3142 = smul.addr %s3141, 2
        %s3143 = scalar_lea.vmem %s8, %s3142
      $region76: #{bottleneck_forward.5} parent=59 // pred_fallthru
        _
    $region60: #{bottleneck_forward.5} parent=5 // pred_fallthru
      _
  $region6: #{bottleneck_forward.5} parent=0 // loop_footer
    %s19 = sadd.s32 1, %s15
  $region7: #{bottleneck_forward.5} parent=0 // loop_footer_branch
    %14 = sbr.rel target = $region3
  $region8: #{bottleneck_forward.5} parent=0 // loop_exit
    _

</llo_original>
